<compile_context>
chip_gen: v5e
topology: v5e:2x2
jax: 0.10.0
libtpu: 0.0.40
codegen_flags: <defaults>
</compile_context>

<pallas_src>
import functools
import math

import jax
import jax.numpy as jnp
from jax import lax
from jax.experimental import pallas as pl
from jax.experimental.pallas import tpu as pltpu

_LANE = 128
_SUBLANE = 8


def _round_up(n, m):
    return ((n + m - 1) // m) * m


# ----------------------------------------------------------------------------
# Kernel: one (batch-group, T-chunk) grid cell per invocation.
# ----------------------------------------------------------------------------
def _r2d2_kernel(x_ref, h0_ref, c0_ref,
                 wih_ref, whh_ref, b_ref,
                 wfc_ref, bfc_ref, wq_ref, bq_ref,
                 q_ref, hn_ref, cn_ref,
                 xp_s, hh_s, hc_s, cc_s):
    t_idx = pl.program_id(1)
    n_t = pl.num_programs(1)
    Tc, Bb, D = x_ref.shape
    Hp = hn_ref.shape[1]
    Ap = q_ref.shape[2]
    rows = Tc * Bb

    # Initialize the carried (h, c) at the first T-chunk of this batch group.
    @pl.when(t_idx == 0)
    def _():
        hc_s[...] = h0_ref[...]
        cc_s[...] = c0_ref[...]

    # ---- Per-chunk batched input projection --------------------------------
    # Operands kept f32: K == D is tiny here (D=4) so MXU rate is irrelevant
    # (for production D >= 128, cast these to bf16 as well).  Result stored
    # bf16 -> halves the dominant VMEM scratch and the per-step vld bytes.
    x2d = x_ref[...].reshape(rows, D)
    xp_s[...] = (jnp.dot(x2d, wih_ref[...], preferred_element_type=jnp.float32)
                 + b_ref[...]).astype(jnp.bfloat16)

    # ---- Serial recurrence: only h @ W_hh + gate nonlinearities (f32) ------
    # TODO(synk): on v5e, keeping the four 128x128 W_hh gate tiles resident in
    # the MXU (pltpu.matmul_push_rhs / matmul_acc_lhs / matmul_pop) would
    # remove per-step weight staging; skipped here for portability.
    def step(i, carry):
        h, c = carry
        row = pl.multiple_of(i * Bb, Bb)
        gates = (xp_s[pl.ds(row, Bb), :].astype(jnp.float32)
                 + jnp.dot(h, whh_ref[...], preferred_element_type=jnp.float32))
        # Gate order i, f, g, o; each gate spans Hp=128 lanes (lane-aligned).
        i_g = jax.nn.sigmoid(gates[:, 0 * Hp:1 * Hp])
        f_g = jax.nn.sigmoid(gates[:, 1 * Hp:2 * Hp])
        g_g = jnp.tanh(gates[:, 2 * Hp:3 * Hp])
        o_g = jax.nn.sigmoid(gates[:, 3 * Hp:4 * Hp])
        c_new = f_g * c + i_g * g_g
        h_new = o_g * jnp.tanh(c_new)
        hh_s[pl.ds(row, Bb), :] = h_new.astype(jnp.bfloat16)
        return h_new, c_new

    # Partial unroll lets the scheduler overlap step t's hh store / t+1's xp
    # load / sigmoid-tanh EUP pushes under the dependent MXU latency.
    h_n, c_n = lax.fori_loop(0, Tc, step, (hc_s[...], cc_s[...]),
                             unroll=min(Tc, 8))
    hc_s[...] = h_n
    cc_s[...] = c_n

    # Final hidden/cell state written exactly once per batch group.
    @pl.when(t_idx == n_t - 1)
    def _():
        hn_ref[...] = h_n
        cn_ref[...] = c_n

    # ---- Chunk epilogue: fc + ReLU + folded dueling head (bf16 MXU) --------
    hid = jnp.maximum(
        jnp.dot(hh_s[...], wfc_ref[...], preferred_element_type=jnp.float32)
        + bfc_ref[...], 0.0)
    q = (jnp.dot(hid.astype(jnp.bfloat16), wq_ref[...],
                 preferred_element_type=jnp.float32) + bq_ref[...])
    q_ref[...] = q.reshape(Tc, Bb, Ap)          # lane-dense (Ap = 128) store


# ----------------------------------------------------------------------------
# Wrapper: pads to TPU-friendly shapes, builds the grid, unpads.
# ----------------------------------------------------------------------------
def _pad_cols_per_gate(w, H, Hp):
    """(in, 4*H) with gate order i,f,g,o -> (in, 4*Hp), each gate padded to Hp."""
    n_in = w.shape[0]
    w4 = w.reshape(n_in, 4, H)
    out = jnp.zeros((n_in, 4, Hp), w.dtype).at[:, :, :H].set(w4)
    return out.reshape(n_in, 4 * Hp)


def _pad2d(w, r, c):
    return jnp.zeros((r, c), w.dtype).at[:w.shape[0], :w.shape[1]].set(w)


def _vmem_bytes(shape, itemsize):
    s = list(shape)
    s[-1] = _round_up(s[-1], _LANE)
    if len(s) >= 2:
        s[-2] = _round_up(s[-2], _SUBLANE)
    n = 1
    for d in s:
        n *= d
    return n * itemsize


def r2d2_forward(params, x, hidden=None, *, target_chunk_rows=1024):
    """x: (B, T, D) float32 (batch_first, like the PyTorch module)."""
    B, T, D = x.shape
    H = params["w_hh"].shape[0]            # hidden size (16)
    A = params["w_adv"].shape[1]           # num_outputs
    F = params["w_fc"].shape[1]            # fc width (128)

    Hp = _round_up(H, _LANE)
    Fp = _round_up(F, _LANE)
    Ap = _round_up(A, _LANE)               # lane-dense Q columns
    Bp = _round_up(B, _SUBLANE)

    # Leading "parallel" grid axis over batch groups (v7x second TensorCore).
    n_b = 2 if (Bp >= 16 and Bp % 16 == 0) else 1
    B_blk = Bp // n_b

    # T-chunks bound per-chunk VMEM and pipeline the x DMA; Tc must divide T.
    Tc = max(1, min(T, max(1, target_chunk_rows // B_blk)))
    while T % Tc:
        Tc -= 1
    n_t = T // Tc

    if hidden is None:
        h0 = jnp.zeros((B, H), jnp.float32)
        c0 = jnp.zeros((B, H), jnp.float32)
    else:
        h0 = hidden[0].reshape(B, H).astype(jnp.float32)
        c0 = hidden[1].reshape(B, H).astype(jnp.float32)

    # ---- parameter preprocessing (cheap one-time XLA ops) -------------------
    w_ih = _pad_cols_per_gate(params["w_ih"], H, Hp)                      # (D, 4Hp) f32
    w_hh = _pad2d(_pad_cols_per_gate(params["w_hh"], H, Hp), Hp, 4 * Hp)  # (Hp,4Hp) f32
    b_g = _pad_cols_per_gate(params["b"], H, Hp)                          # (1, 4Hp) f32
    w_fc = _pad2d(params["w_fc"], Hp, Fp).astype(jnp.bfloat16)            # (Hp, Fp) bf16
    b_fc = _pad2d(params["b_fc"], 1, Fp)                                  # (1, Fp)  f32
    # Dueling combine folded into the head: q = hid @ w_q + b_q exactly equals
    # val + (adv - mean(adv)) since everything is linear in hid.
    w_q = (params["w_adv"] - jnp.mean(params["w_adv"], axis=1, keepdims=True)
           + params["w_val"])
    b_q = (params["b_adv"] - jnp.mean(params["b_adv"], axis=1, keepdims=True)
           + params["b_val"])
    w_q = _pad2d(w_q, Fp, Ap).astype(jnp.bfloat16)                        # (Fp, Ap) bf16
    b_q = _pad2d(b_q, 1, Ap)                                              # (1, Ap)  f32

    # ---- activations: time-major, batch padded ------------------------------
    x_tm = jnp.pad(jnp.transpose(x, (1, 0, 2)), ((0, 0), (0, Bp - B), (0, 0)))
    h0_p = jnp.pad(h0, ((0, Bp - B), (0, Hp - H)))
    c0_p = jnp.pad(c0, ((0, Bp - B), (0, Hp - H)))

    # ---- VMEM budget: blocks (double-buffered) + scratches, with headroom ---
    est = 0
    est += 2 * _vmem_bytes((Tc * B_blk, D), 4)           # x block
    est += 2 * _vmem_bytes((Tc * B_blk, Ap), 4)          # q block
    for shp, it in (((D, 4 * Hp), 4), ((Hp, 4 * Hp), 4), ((1, 4 * Hp), 4),
                    ((Hp, Fp), 2), ((1, Fp), 4), ((Fp, Ap), 2), ((1, Ap), 4),
                    ((B_blk, Hp), 4), ((B_blk, Hp), 4),   # h0, c0
                    ((B_blk, Hp), 4), ((B_blk, Hp), 4)):  # hn, cn
        est += 2 * _vmem_bytes(shp, it)
    est += _vmem_bytes((Tc * B_blk, 4 * Hp), 2)          # xp_s (bf16)
    est += _vmem_bytes((Tc * B_blk, Hp), 2)              # hh_s (bf16)
    est += 2 * _vmem_bytes((B_blk, Hp), 4)               # carried (h, c)
    vmem_limit = int(min(2 * est + (2 << 20), 128 << 20))

    grid_spec = pltpu.PrefetchScalarGridSpec(
        num_scalar_prefetch=0,
        grid=(n_b, n_t),
        in_specs=[
            pl.BlockSpec((Tc, B_blk, D), lambda b, t: (t, b, 0)),      # x
            pl.BlockSpec((B_blk, Hp), lambda b, t: (b, 0)),            # h0
            pl.BlockSpec((B_blk, Hp), lambda b, t: (b, 0)),            # c0
            pl.BlockSpec((D, 4 * Hp), lambda b, t: (0, 0)),            # w_ih
            pl.BlockSpec((Hp, 4 * Hp), lambda b, t: (0, 0)),           # w_hh
            pl.BlockSpec((1, 4 * Hp), lambda b, t: (0, 0)),            # b
            pl.BlockSpec((Hp, Fp), lambda b, t: (0, 0)),               # w_fc
            pl.BlockSpec((1, Fp), lambda b, t: (0, 0)),                # b_fc
            pl.BlockSpec((Fp, Ap), lambda b, t: (0, 0)),               # w_q
            pl.BlockSpec((1, Ap), lambda b, t: (0, 0)),                # b_q
        ],
        out_specs=(
            pl.BlockSpec((Tc, B_blk, Ap), lambda b, t: (t, b, 0)),     # q
            pl.BlockSpec((B_blk, Hp), lambda b, t: (b, 0)),            # h_n
            pl.BlockSpec((B_blk, Hp), lambda b, t: (b, 0)),            # c_n
        ),
        scratch_shapes=[
            pltpu.VMEM((Tc * B_blk, 4 * Hp), jnp.bfloat16),  # xp_s per chunk
            pltpu.VMEM((Tc * B_blk, Hp), jnp.bfloat16),      # hh_s per chunk
            pltpu.VMEM((B_blk, Hp), jnp.float32),            # carried h
            pltpu.VMEM((B_blk, Hp), jnp.float32),            # carried c
        ],
    )

    q_pad, h_n, c_n = pl.pallas_call(
        _r2d2_kernel,
        out_shape=(
            jax.ShapeDtypeStruct((T, Bp, Ap), jnp.float32),
            jax.ShapeDtypeStruct((Bp, Hp), jnp.float32),
            jax.ShapeDtypeStruct((Bp, Hp), jnp.float32),
        ),
        grid_spec=grid_spec,
        compiler_params=pltpu.CompilerParams(
            dimension_semantics=("parallel", "arbitrary"),
            vmem_limit_bytes=vmem_limit),
    )(x_tm, h0_p, c0_p, w_ih, w_hh, b_g, w_fc, b_fc, w_q, b_q)

    q = q_pad[:, :B, :A].transpose(1, 0, 2)                     # (B, T, A)
    return q, (h_n[:B, :H][None], c_n[:B, :H][None])            # (1, B, H) each


# ----------------------------------------------------------------------------
# Deterministic parameter init (mirrors the PyTorch module's shapes/init).
# ----------------------------------------------------------------------------
def init_params(key, num_inputs, num_outputs, hidden=16, fc_dim=128):
    ks = jax.random.split(key, 10)

    def xavier(k, fan_in, fan_out):
        a = math.sqrt(6.0 / (fan_in + fan_out))
        return jax.random.uniform(k, (fan_in, fan_out), jnp.float32, -a, a)

    def unif(k, shape, bound):
        return jax.random.uniform(k, shape, jnp.float32, -bound, bound)

    s = 1.0 / math.sqrt(hidden)
    # LSTM params stored pre-transposed as (in, 4H) / (H, 4H); gate order i,f,g,o.
    return {
        "w_ih": unif(ks[0], (num_inputs, 4 * hidden), s),
        "w_hh": unif(ks[1], (hidden, 4 * hidden), s),
        "b": unif(ks[2], (1, 4 * hidden), s) + unif(ks[3], (1, 4 * hidden), s),
        "w_fc": xavier(ks[4], hidden, fc_dim),
        "b_fc": unif(ks[5], (1, fc_dim), 1.0 / math.sqrt(hidden)),
        "w_adv": xavier(ks[6], fc_dim, num_outputs),
        "b_adv": unif(ks[7], (1, num_outputs), 1.0 / math.sqrt(fc_dim)),
        "w_val": xavier(ks[8], fc_dim, 1),
        "b_val": unif(ks[9], (1, 1), 1.0 / math.sqrt(fc_dim)),
    }


# ----------------------------------------------------------------------------
# Pure-JAX reference (lax.scan, f32, unfolded head) for a correctness check.
# ----------------------------------------------------------------------------
def r2d2_reference(params, x, hidden=None):
    B, T, D = x.shape
    H = params["w_hh"].shape[0]
    if hidden is None:
        h0 = jnp.zeros((B, H), jnp.float32)
        c0 = jnp.zeros((B, H), jnp.float32)
    else:
        h0, c0 = hidden[0].reshape(B, H), hidden[1].reshape(B, H)

    def step(carry, x_t):
        h, c = carry
        gates = x_t @ params["w_ih"] + h @ params["w_hh"] + params["b"]
        i = jax.nn.sigmoid(gates[:, 0 * H:1 * H])
        f = jax.nn.sigmoid(gates[:, 1 * H:2 * H])
        g = jnp.tanh(gates[:, 2 * H:3 * H])
        o = jax.nn.sigmoid(gates[:, 3 * H:4 * H])
        c_new = f * c + i * g
        h_new = o * jnp.tanh(c_new)
        return (h_new, c_new), h_new

    (h_n, c_n), outs = lax.scan(step, (h0, c0), jnp.transpose(x, (1, 0, 2)))
    out = jnp.transpose(outs, (1, 0, 2))                    # (B, T, H)
    hid = jnp.maximum(out @ params["w_fc"] + params["b_fc"], 0.0)
    adv = hid @ params["w_adv"] + params["b_adv"]
    val = hid @ params["w_val"] + params["b_val"]
    q = val + (adv - jnp.mean(adv, axis=2, keepdims=True))
    return q, (h_n[None], c_n[None])


if __name__ == "__main__":
    key = jax.random.PRNGKey(0)
    k_param, k_x, k_h, k_c = jax.random.split(key, 4)

    B, T, D, A, H = 2, 8, 4, 4, 16   # batch, seq, num_inputs, num_outputs, hidden
    params = init_params(k_param, num_inputs=D, num_outputs=A, hidden=H)

    x = jax.random.normal(k_x, (B, T, D), jnp.float32)
    h0 = jax.random.normal(k_h, (1, B, H), jnp.float32) * 0.1
    c0 = jax.random.normal(k_c, (1, B, H), jnp.float32) * 0.1

    q, (h_n, c_n) = jax.jit(functools.partial(r2d2_forward, params))(x, (h0, c0))
    jax.block_until_ready((q, h_n, c_n))

    q_ref, (h_ref, c_ref) = r2d2_reference(params, x, (h0, c0))
    assert q.shape == (B, T, A) and h_n.shape == (1, B, H) and c_n.shape == (1, B, H)
    # Tolerance relaxed vs. the pure-f32 version: bf16 scratch storage and
    # bf16 operands on the fc/head matmuls (per the performance review).
    assert jnp.allclose(q, q_ref, rtol=2e-2, atol=2e-2)
    assert jnp.allclose(h_n, h_ref, rtol=2e-2, atol=2e-2)
    assert jnp.allclose(c_n, c_ref, rtol=2e-2, atol=2e-2)

    print("KERNEL_OK")
</pallas_src>

<mosaic_0001>
module attributes {stable_mosaic.version = 11 : i64} {
  func.func @_r2d2_kernel(%arg0: i32, %arg1: i32, %arg2: memref<8x8x4xf32, #tpu.memory_space<vmem>>, %arg3: memref<8x128xf32, #tpu.memory_space<vmem>>, %arg4: memref<8x128xf32, #tpu.memory_space<vmem>>, %arg5: memref<4x512xf32, #tpu.memory_space<vmem>>, %arg6: memref<128x512xf32, #tpu.memory_space<vmem>>, %arg7: memref<1x512xf32, #tpu.memory_space<vmem>>, %arg8: memref<128x128xbf16, #tpu.memory_space<vmem>>, %arg9: memref<1x128xf32, #tpu.memory_space<vmem>>, %arg10: memref<128x128xbf16, #tpu.memory_space<vmem>>, %arg11: memref<1x128xf32, #tpu.memory_space<vmem>>, %arg12: memref<8x8x128xf32, #tpu.memory_space<vmem>>, %arg13: memref<8x128xf32, #tpu.memory_space<vmem>>, %arg14: memref<8x128xf32, #tpu.memory_space<vmem>>, %arg15: memref<64x512xbf16, #tpu.memory_space<vmem>>, %arg16: memref<64x128xbf16, #tpu.memory_space<vmem>>, %arg17: memref<8x128xf32, #tpu.memory_space<vmem>>, %arg18: memref<8x128xf32, #tpu.memory_space<vmem>>) attributes {dimension_semantics = [#tpu.dimension_semantics<parallel>, #tpu.dimension_semantics<arbitrary>], iteration_bounds = array<i64: 1, 1>, scalar_prefetch = 0 : i64, scratch_operands = 4 : i64, tpu.core_type = #tpu.core_type<tc>, window_params = [{transform_indices = @transform_0, window_bounds = array<i64: 8, 8, 4>}, {transform_indices = @transform_1, window_bounds = array<i64: 8, 128>}, {transform_indices = @transform_2, window_bounds = array<i64: 8, 128>}, {pipeline_mode = #tpu.pipeline_mode<synchronous>, transform_indices = @transform_3, window_bounds = array<i64: 4, 512>}, {pipeline_mode = #tpu.pipeline_mode<synchronous>, transform_indices = @transform_4, window_bounds = array<i64: 128, 512>}, {pipeline_mode = #tpu.pipeline_mode<synchronous>, transform_indices = @transform_5, window_bounds = array<i64: 1, 512>}, {pipeline_mode = #tpu.pipeline_mode<synchronous>, transform_indices = @transform_6, window_bounds = array<i64: 128, 128>}, {pipeline_mode = #tpu.pipeline_mode<synchronous>, transform_indices = @transform_7, window_bounds = array<i64: 1, 128>}, {pipeline_mode = #tpu.pipeline_mode<synchronous>, transform_indices = @transform_8, window_bounds = array<i64: 128, 128>}, {pipeline_mode = #tpu.pipeline_mode<synchronous>, transform_indices = @transform_9, window_bounds = array<i64: 1, 128>}, {transform_indices = @transform_10, window_bounds = array<i64: 8, 8, 128>}, {transform_indices = @transform_11, window_bounds = array<i64: 8, 128>}, {transform_indices = @transform_12, window_bounds = array<i64: 8, 128>}]} {
    %c0_i32 = arith.constant 0 : i32
    %0 = arith.cmpi eq, %arg1, %c0_i32 : i32
    %1 = arith.extui %0 : i1 to i32
    %c0_i32_0 = arith.constant 0 : i32
    %2 = arith.cmpi ne, %1, %c0_i32_0 : i32
    scf.if %2 {
      %c0_108 = arith.constant 0 : index
      %c0_109 = arith.constant 0 : index
      %323 = vector.load %arg3[%c0_108, %c0_109] : memref<8x128xf32, #tpu.memory_space<vmem>>, vector<8x128xf32>
      %c0_110 = arith.constant 0 : index
      %c0_111 = arith.constant 0 : index
      %324 = vector.load %arg17[%c0_110, %c0_111] : memref<8x128xf32, #tpu.memory_space<vmem>>, vector<8x128xf32>
      tpu.vector_store %arg17[%c0_110, %c0_111], %323 {strides = array<i32>} : memref<8x128xf32, #tpu.memory_space<vmem>>, vector<8x128xf32>,
      %c0_112 = arith.constant 0 : index
      %c0_113 = arith.constant 0 : index
      %325 = vector.load %arg4[%c0_112, %c0_113] : memref<8x128xf32, #tpu.memory_space<vmem>>, vector<8x128xf32>
      %c0_114 = arith.constant 0 : index
      %c0_115 = arith.constant 0 : index
      %326 = vector.load %arg18[%c0_114, %c0_115] : memref<8x128xf32, #tpu.memory_space<vmem>>, vector<8x128xf32>
      tpu.vector_store %arg18[%c0_114, %c0_115], %325 {strides = array<i32>} : memref<8x128xf32, #tpu.memory_space<vmem>>, vector<8x128xf32>,
    } else {
    }
    %c0 = arith.constant 0 : index
    %c0_1 = arith.constant 0 : index
    %c0_2 = arith.constant 0 : index
    %3 = vector.load %arg2[%c0, %c0_1, %c0_2] : memref<8x8x4xf32, #tpu.memory_space<vmem>>, vector<8x8x4xf32>
    %4 = vector.shape_cast %3 : vector<8x8x4xf32> to vector<64x4xf32>
    %c0_3 = arith.constant 0 : index
    %c0_4 = arith.constant 0 : index
    %5 = vector.load %arg5[%c0_3, %c0_4] : memref<4x512xf32, #tpu.memory_space<vmem>>, vector<4x512xf32>
    %cst = arith.constant dense<0.000000e+00> : vector<64x512xf32>
    %6 = tpu.matmul %4, %5, %cst {dimension_numbers = #tpu.dot_dimension_numbers<[1], [0], [0], [1], [0, 0, 1, 1], [], []>} : vector<64x4xf32>, vector<4x512xf32>, vector<64x512xf32> -> vector<64x512xf32>
    %c0_5 = arith.constant 0 : index
    %c0_6 = arith.constant 0 : index
    %7 = vector.load %arg7[%c0_5, %c0_6] : memref<1x512xf32, #tpu.memory_space<vmem>>, vector<1x512xf32>
    %8 = vector.broadcast %7 : vector<1x512xf32> to vector<64x512xf32>
    %9 = arith.addf %6, %8 : vector<64x512xf32>
    %10 = arith.truncf %9 : vector<64x512xf32> to vector<64x512xbf16>
    %c0_7 = arith.constant 0 : index
    %c0_8 = arith.constant 0 : index
    %11 = vector.load %arg15[%c0_7, %c0_8] : memref<64x512xbf16, #tpu.memory_space<vmem>>, vector<64x512xbf16>
    tpu.vector_store %arg15[%c0_7, %c0_8], %10 {strides = array<i32>} : memref<64x512xbf16, #tpu.memory_space<vmem>>, vector<64x512xbf16>,
    %c0_9 = arith.constant 0 : index
    %c0_10 = arith.constant 0 : index
    %12 = vector.load %arg17[%c0_9, %c0_10] : memref<8x128xf32, #tpu.memory_space<vmem>>, vector<8x128xf32>
    %c0_11 = arith.constant 0 : index
    %c0_12 = arith.constant 0 : index
    %13 = vector.load %arg18[%c0_11, %c0_12] : memref<8x128xf32, #tpu.memory_space<vmem>>, vector<8x128xf32>
    %c0_i32_13 = arith.constant 0 : i32
    %c8_i32 = arith.constant 8 : i32
    %14 = arith.muli %c0_i32_13, %c8_i32 : i32
    %15 = tpu.assume_multiple %14, 8 : i32
    %16 = arith.index_cast %15 : i32 to index
    %c0_14 = arith.constant 0 : index
    %17 = vector.load %arg15[%16, %c0_14] : memref<64x512xbf16, #tpu.memory_space<vmem>>, vector<8x512xbf16>
    %18 = arith.extf %17 : vector<8x512xbf16> to vector<8x512xf32>
    %c0_15 = arith.constant 0 : index
    %c0_16 = arith.constant 0 : index
    %19 = vector.load %arg6[%c0_15, %c0_16] : memref<128x512xf32, #tpu.memory_space<vmem>>, vector<128x512xf32>
    %cst_17 = arith.constant dense<0.000000e+00> : vector<8x512xf32>
    %20 = tpu.matmul %12, %19, %cst_17 {dimension_numbers = #tpu.dot_dimension_numbers<[1], [0], [0], [1], [0, 0, 1, 1], [], []>} : vector<8x128xf32>, vector<128x512xf32>, vector<8x512xf32> -> vector<8x512xf32>
    %21 = arith.addf %18, %20 : vector<8x512xf32>
    %22 = vector.extract_strided_slice %21 {offsets = [0, 0], sizes = [8, 128], strides = [1, 1]} : vector<8x512xf32> to vector<8x128xf32>
    %23 = arith.negf %22 : vector<8x128xf32>
    %24 = math.exp %23 : vector<8x128xf32>
    %cst_18 = arith.constant 1.000000e+00 : f32
    %25 = vector.broadcast %cst_18 : f32 to vector<8x128xf32>
    %26 = arith.addf %25, %24 : vector<8x128xf32>
    %27 = arith.divf %25, %26 : vector<8x128xf32>
    %28 = vector.extract_strided_slice %21 {offsets = [0, 128], sizes = [8, 128], strides = [1, 1]} : vector<8x512xf32> to vector<8x128xf32>
    %29 = arith.negf %28 : vector<8x128xf32>
    %30 = math.exp %29 : vector<8x128xf32>
    %cst_19 = arith.constant 1.000000e+00 : f32
    %31 = vector.broadcast %cst_19 : f32 to vector<8x128xf32>
    %32 = arith.addf %31, %30 : vector<8x128xf32>
    %33 = arith.divf %31, %32 : vector<8x128xf32>
    %34 = vector.extract_strided_slice %21 {offsets = [0, 256], sizes = [8, 128], strides = [1, 1]} : vector<8x512xf32> to vector<8x128xf32>
    %35 = math.tanh %34 : vector<8x128xf32>
    %36 = vector.extract_strided_slice %21 {offsets = [0, 384], sizes = [8, 128], strides = [1, 1]} : vector<8x512xf32> to vector<8x128xf32>
    %37 = arith.negf %36 : vector<8x128xf32>
    %38 = math.exp %37 : vector<8x128xf32>
    %cst_20 = arith.constant 1.000000e+00 : f32
    %39 = vector.broadcast %cst_20 : f32 to vector<8x128xf32>
    %40 = arith.addf %39, %38 : vector<8x128xf32>
    %41 = arith.divf %39, %40 : vector<8x128xf32>
    %42 = arith.mulf %33, %13 : vector<8x128xf32>
    %43 = arith.mulf %27, %35 : vector<8x128xf32>
    %44 = arith.addf %42, %43 : vector<8x128xf32>
    %45 = math.tanh %44 : vector<8x128xf32>
    %46 = arith.mulf %41, %45 : vector<8x128xf32>
    %47 = arith.truncf %46 : vector<8x128xf32> to vector<8x128xbf16>
    %48 = arith.index_cast %15 : i32 to index
    %c0_21 = arith.constant 0 : index
    %49 = vector.load %arg16[%48, %c0_21] : memref<64x128xbf16, #tpu.memory_space<vmem>>, vector<8x128xbf16>
    tpu.vector_store %arg16[%48, %c0_21], %47 {strides = array<i32>} : memref<64x128xbf16, #tpu.memory_space<vmem>>, vector<8x128xbf16>,
    %c1_i32 = arith.constant 1 : i32
    %c8_i32_22 = arith.constant 8 : i32
    %50 = arith.muli %c1_i32, %c8_i32_22 : i32
    %51 = tpu.assume_multiple %50, 8 : i32
    %52 = arith.index_cast %51 : i32 to index
    %c0_23 = arith.constant 0 : index
    %53 = vector.load %arg15[%52, %c0_23] : memref<64x512xbf16, #tpu.memory_space<vmem>>, vector<8x512xbf16>
    %54 = arith.extf %53 : vector<8x512xbf16> to vector<8x512xf32>
    %c0_24 = arith.constant 0 : index
    %c0_25 = arith.constant 0 : index
    %55 = vector.load %arg6[%c0_24, %c0_25] : memref<128x512xf32, #tpu.memory_space<vmem>>, vector<128x512xf32>
    %cst_26 = arith.constant dense<0.000000e+00> : vector<8x512xf32>
    %56 = tpu.matmul %46, %55, %cst_26 {dimension_numbers = #tpu.dot_dimension_numbers<[1], [0], [0], [1], [0, 0, 1, 1], [], []>} : vector<8x128xf32>, vector<128x512xf32>, vector<8x512xf32> -> vector<8x512xf32>
    %57 = arith.addf %54, %56 : vector<8x512xf32>
    %58 = vector.extract_strided_slice %57 {offsets = [0, 0], sizes = [8, 128], strides = [1, 1]} : vector<8x512xf32> to vector<8x128xf32>
    %59 = arith.negf %58 : vector<8x128xf32>
    %60 = math.exp %59 : vector<8x128xf32>
    %cst_27 = arith.constant 1.000000e+00 : f32
    %61 = vector.broadcast %cst_27 : f32 to vector<8x128xf32>
    %62 = arith.addf %61, %60 : vector<8x128xf32>
    %63 = arith.divf %61, %62 : vector<8x128xf32>
    %64 = vector.extract_strided_slice %57 {offsets = [0, 128], sizes = [8, 128], strides = [1, 1]} : vector<8x512xf32> to vector<8x128xf32>
    %65 = arith.negf %64 : vector<8x128xf32>
    %66 = math.exp %65 : vector<8x128xf32>
    %cst_28 = arith.constant 1.000000e+00 : f32
    %67 = vector.broadcast %cst_28 : f32 to vector<8x128xf32>
    %68 = arith.addf %67, %66 : vector<8x128xf32>
    %69 = arith.divf %67, %68 : vector<8x128xf32>
    %70 = vector.extract_strided_slice %57 {offsets = [0, 256], sizes = [8, 128], strides = [1, 1]} : vector<8x512xf32> to vector<8x128xf32>
    %71 = math.tanh %70 : vector<8x128xf32>
    %72 = vector.extract_strided_slice %57 {offsets = [0, 384], sizes = [8, 128], strides = [1, 1]} : vector<8x512xf32> to vector<8x128xf32>
    %73 = arith.negf %72 : vector<8x128xf32>
    %74 = math.exp %73 : vector<8x128xf32>
    %cst_29 = arith.constant 1.000000e+00 : f32
    %75 = vector.broadcast %cst_29 : f32 to vector<8x128xf32>
    %76 = arith.addf %75, %74 : vector<8x128xf32>
    %77 = arith.divf %75, %76 : vector<8x128xf32>
    %78 = arith.mulf %69, %44 : vector<8x128xf32>
    %79 = arith.mulf %63, %71 : vector<8x128xf32>
    %80 = arith.addf %78, %79 : vector<8x128xf32>
    %81 = math.tanh %80 : vector<8x128xf32>
    %82 = arith.mulf %77, %81 : vector<8x128xf32>
    %83 = arith.truncf %82 : vector<8x128xf32> to vector<8x128xbf16>
    %84 = arith.index_cast %51 : i32 to index
    %c0_30 = arith.constant 0 : index
    %85 = vector.load %arg16[%84, %c0_30] : memref<64x128xbf16, #tpu.memory_space<vmem>>, vector<8x128xbf16>
    tpu.vector_store %arg16[%84, %c0_30], %83 {strides = array<i32>} : memref<64x128xbf16, #tpu.memory_space<vmem>>, vector<8x128xbf16>,
    %c2_i32 = arith.constant 2 : i32
    %c8_i32_31 = arith.constant 8 : i32
    %86 = arith.muli %c2_i32, %c8_i32_31 : i32
    %87 = tpu.assume_multiple %86, 8 : i32
    %88 = arith.index_cast %87 : i32 to index
    %c0_32 = arith.constant 0 : index
    %89 = vector.load %arg15[%88, %c0_32] : memref<64x512xbf16, #tpu.memory_space<vmem>>, vector<8x512xbf16>
    %90 = arith.extf %89 : vector<8x512xbf16> to vector<8x512xf32>
    %c0_33 = arith.constant 0 : index
    %c0_34 = arith.constant 0 : index
    %91 = vector.load %arg6[%c0_33, %c0_34] : memref<128x512xf32, #tpu.memory_space<vmem>>, vector<128x512xf32>
    %cst_35 = arith.constant dense<0.000000e+00> : vector<8x512xf32>
    %92 = tpu.matmul %82, %91, %cst_35 {dimension_numbers = #tpu.dot_dimension_numbers<[1], [0], [0], [1], [0, 0, 1, 1], [], []>} : vector<8x128xf32>, vector<128x512xf32>, vector<8x512xf32> -> vector<8x512xf32>
    %93 = arith.addf %90, %92 : vector<8x512xf32>
    %94 = vector.extract_strided_slice %93 {offsets = [0, 0], sizes = [8, 128], strides = [1, 1]} : vector<8x512xf32> to vector<8x128xf32>
    %95 = arith.negf %94 : vector<8x128xf32>
    %96 = math.exp %95 : vector<8x128xf32>
    %cst_36 = arith.constant 1.000000e+00 : f32
    %97 = vector.broadcast %cst_36 : f32 to vector<8x128xf32>
    %98 = arith.addf %97, %96 : vector<8x128xf32>
    %99 = arith.divf %97, %98 : vector<8x128xf32>
    %100 = vector.extract_strided_slice %93 {offsets = [0, 128], sizes = [8, 128], strides = [1, 1]} : vector<8x512xf32> to vector<8x128xf32>
    %101 = arith.negf %100 : vector<8x128xf32>
    %102 = math.exp %101 : vector<8x128xf32>
    %cst_37 = arith.constant 1.000000e+00 : f32
    %103 = vector.broadcast %cst_37 : f32 to vector<8x128xf32>
    %104 = arith.addf %103, %102 : vector<8x128xf32>
    %105 = arith.divf %103, %104 : vector<8x128xf32>
    %106 = vector.extract_strided_slice %93 {offsets = [0, 256], sizes = [8, 128], strides = [1, 1]} : vector<8x512xf32> to vector<8x128xf32>
    %107 = math.tanh %106 : vector<8x128xf32>
    %108 = vector.extract_strided_slice %93 {offsets = [0, 384], sizes = [8, 128], strides = [1, 1]} : vector<8x512xf32> to vector<8x128xf32>
    %109 = arith.negf %108 : vector<8x128xf32>
    %110 = math.exp %109 : vector<8x128xf32>
    %cst_38 = arith.constant 1.000000e+00 : f32
    %111 = vector.broadcast %cst_38 : f32 to vector<8x128xf32>
    %112 = arith.addf %111, %110 : vector<8x128xf32>
    %113 = arith.divf %111, %112 : vector<8x128xf32>
    %114 = arith.mulf %105, %80 : vector<8x128xf32>
    %115 = arith.mulf %99, %107 : vector<8x128xf32>
    %116 = arith.addf %114, %115 : vector<8x128xf32>
    %117 = math.tanh %116 : vector<8x128xf32>
    %118 = arith.mulf %113, %117 : vector<8x128xf32>
    %119 = arith.truncf %118 : vector<8x128xf32> to vector<8x128xbf16>
    %120 = arith.index_cast %87 : i32 to index
    %c0_39 = arith.constant 0 : index
    %121 = vector.load %arg16[%120, %c0_39] : memref<64x128xbf16, #tpu.memory_space<vmem>>, vector<8x128xbf16>
    tpu.vector_store %arg16[%120, %c0_39], %119 {strides = array<i32>} : memref<64x128xbf16, #tpu.memory_space<vmem>>, vector<8x128xbf16>,
    %c3_i32 = arith.constant 3 : i32
    %c8_i32_40 = arith.constant 8 : i32
    %122 = arith.muli %c3_i32, %c8_i32_40 : i32
    %123 = tpu.assume_multiple %122, 8 : i32
    %124 = arith.index_cast %123 : i32 to index
    %c0_41 = arith.constant 0 : index
    %125 = vector.load %arg15[%124, %c0_41] : memref<64x512xbf16, #tpu.memory_space<vmem>>, vector<8x512xbf16>
    %126 = arith.extf %125 : vector<8x512xbf16> to vector<8x512xf32>
    %c0_42 = arith.constant 0 : index
    %c0_43 = arith.constant 0 : index
    %127 = vector.load %arg6[%c0_42, %c0_43] : memref<128x512xf32, #tpu.memory_space<vmem>>, vector<128x512xf32>
    %cst_44 = arith.constant dense<0.000000e+00> : vector<8x512xf32>
    %128 = tpu.matmul %118, %127, %cst_44 {dimension_numbers = #tpu.dot_dimension_numbers<[1], [0], [0], [1], [0, 0, 1, 1], [], []>} : vector<8x128xf32>, vector<128x512xf32>, vector<8x512xf32> -> vector<8x512xf32>
    %129 = arith.addf %126, %128 : vector<8x512xf32>
    %130 = vector.extract_strided_slice %129 {offsets = [0, 0], sizes = [8, 128], strides = [1, 1]} : vector<8x512xf32> to vector<8x128xf32>
    %131 = arith.negf %130 : vector<8x128xf32>
    %132 = math.exp %131 : vector<8x128xf32>
    %cst_45 = arith.constant 1.000000e+00 : f32
    %133 = vector.broadcast %cst_45 : f32 to vector<8x128xf32>
    %134 = arith.addf %133, %132 : vector<8x128xf32>
    %135 = arith.divf %133, %134 : vector<8x128xf32>
    %136 = vector.extract_strided_slice %129 {offsets = [0, 128], sizes = [8, 128], strides = [1, 1]} : vector<8x512xf32> to vector<8x128xf32>
    %137 = arith.negf %136 : vector<8x128xf32>
    %138 = math.exp %137 : vector<8x128xf32>
    %cst_46 = arith.constant 1.000000e+00 : f32
    %139 = vector.broadcast %cst_46 : f32 to vector<8x128xf32>
    %140 = arith.addf %139, %138 : vector<8x128xf32>
    %141 = arith.divf %139, %140 : vector<8x128xf32>
    %142 = vector.extract_strided_slice %129 {offsets = [0, 256], sizes = [8, 128], strides = [1, 1]} : vector<8x512xf32> to vector<8x128xf32>
    %143 = math.tanh %142 : vector<8x128xf32>
    %144 = vector.extract_strided_slice %129 {offsets = [0, 384], sizes = [8, 128], strides = [1, 1]} : vector<8x512xf32> to vector<8x128xf32>
    %145 = arith.negf %144 : vector<8x128xf32>
    %146 = math.exp %145 : vector<8x128xf32>
    %cst_47 = arith.constant 1.000000e+00 : f32
    %147 = vector.broadcast %cst_47 : f32 to vector<8x128xf32>
    %148 = arith.addf %147, %146 : vector<8x128xf32>
    %149 = arith.divf %147, %148 : vector<8x128xf32>
    %150 = arith.mulf %141, %116 : vector<8x128xf32>
    %151 = arith.mulf %135, %143 : vector<8x128xf32>
    %152 = arith.addf %150, %151 : vector<8x128xf32>
    %153 = math.tanh %152 : vector<8x128xf32>
    %154 = arith.mulf %149, %153 : vector<8x128xf32>
    %155 = arith.truncf %154 : vector<8x128xf32> to vector<8x128xbf16>
    %156 = arith.index_cast %123 : i32 to index
    %c0_48 = arith.constant 0 : index
    %157 = vector.load %arg16[%156, %c0_48] : memref<64x128xbf16, #tpu.memory_space<vmem>>, vector<8x128xbf16>
    tpu.vector_store %arg16[%156, %c0_48], %155 {strides = array<i32>} : memref<64x128xbf16, #tpu.memory_space<vmem>>, vector<8x128xbf16>,
    %c4_i32 = arith.constant 4 : i32
    %c8_i32_49 = arith.constant 8 : i32
    %158 = arith.muli %c4_i32, %c8_i32_49 : i32
    %159 = tpu.assume_multiple %158, 8 : i32
    %160 = arith.index_cast %159 : i32 to index
    %c0_50 = arith.constant 0 : index
    %161 = vector.load %arg15[%160, %c0_50] : memref<64x512xbf16, #tpu.memory_space<vmem>>, vector<8x512xbf16>
    %162 = arith.extf %161 : vector<8x512xbf16> to vector<8x512xf32>
    %c0_51 = arith.constant 0 : index
    %c0_52 = arith.constant 0 : index
    %163 = vector.load %arg6[%c0_51, %c0_52] : memref<128x512xf32, #tpu.memory_space<vmem>>, vector<128x512xf32>
    %cst_53 = arith.constant dense<0.000000e+00> : vector<8x512xf32>
    %164 = tpu.matmul %154, %163, %cst_53 {dimension_numbers = #tpu.dot_dimension_numbers<[1], [0], [0], [1], [0, 0, 1, 1], [], []>} : vector<8x128xf32>, vector<128x512xf32>, vector<8x512xf32> -> vector<8x512xf32>
    %165 = arith.addf %162, %164 : vector<8x512xf32>
    %166 = vector.extract_strided_slice %165 {offsets = [0, 0], sizes = [8, 128], strides = [1, 1]} : vector<8x512xf32> to vector<8x128xf32>
    %167 = arith.negf %166 : vector<8x128xf32>
    %168 = math.exp %167 : vector<8x128xf32>
    %cst_54 = arith.constant 1.000000e+00 : f32
    %169 = vector.broadcast %cst_54 : f32 to vector<8x128xf32>
    %170 = arith.addf %169, %168 : vector<8x128xf32>
    %171 = arith.divf %169, %170 : vector<8x128xf32>
    %172 = vector.extract_strided_slice %165 {offsets = [0, 128], sizes = [8, 128], strides = [1, 1]} : vector<8x512xf32> to vector<8x128xf32>
    %173 = arith.negf %172 : vector<8x128xf32>
    %174 = math.exp %173 : vector<8x128xf32>
    %cst_55 = arith.constant 1.000000e+00 : f32
    %175 = vector.broadcast %cst_55 : f32 to vector<8x128xf32>
    %176 = arith.addf %175, %174 : vector<8x128xf32>
    %177 = arith.divf %175, %176 : vector<8x128xf32>
    %178 = vector.extract_strided_slice %165 {offsets = [0, 256], sizes = [8, 128], strides = [1, 1]} : vector<8x512xf32> to vector<8x128xf32>
    %179 = math.tanh %178 : vector<8x128xf32>
    %180 = vector.extract_strided_slice %165 {offsets = [0, 384], sizes = [8, 128], strides = [1, 1]} : vector<8x512xf32> to vector<8x128xf32>
    %181 = arith.negf %180 : vector<8x128xf32>
    %182 = math.exp %181 : vector<8x128xf32>
    %cst_56 = arith.constant 1.000000e+00 : f32
    %183 = vector.broadcast %cst_56 : f32 to vector<8x128xf32>
    %184 = arith.addf %183, %182 : vector<8x128xf32>
    %185 = arith.divf %183, %184 : vector<8x128xf32>
    %186 = arith.mulf %177, %152 : vector<8x128xf32>
    %187 = arith.mulf %171, %179 : vector<8x128xf32>
    %188 = arith.addf %186, %187 : vector<8x128xf32>
    %189 = math.tanh %188 : vector<8x128xf32>
    %190 = arith.mulf %185, %189 : vector<8x128xf32>
    %191 = arith.truncf %190 : vector<8x128xf32> to vector<8x128xbf16>
    %192 = arith.index_cast %159 : i32 to index
    %c0_57 = arith.constant 0 : index
    %193 = vector.load %arg16[%192, %c0_57] : memref<64x128xbf16, #tpu.memory_space<vmem>>, vector<8x128xbf16>
    tpu.vector_store %arg16[%192, %c0_57], %191 {strides = array<i32>} : memref<64x128xbf16, #tpu.memory_space<vmem>>, vector<8x128xbf16>,
    %c5_i32 = arith.constant 5 : i32
    %c8_i32_58 = arith.constant 8 : i32
    %194 = arith.muli %c5_i32, %c8_i32_58 : i32
    %195 = tpu.assume_multiple %194, 8 : i32
    %196 = arith.index_cast %195 : i32 to index
    %c0_59 = arith.constant 0 : index
    %197 = vector.load %arg15[%196, %c0_59] : memref<64x512xbf16, #tpu.memory_space<vmem>>, vector<8x512xbf16>
    %198 = arith.extf %197 : vector<8x512xbf16> to vector<8x512xf32>
    %c0_60 = arith.constant 0 : index
    %c0_61 = arith.constant 0 : index
    %199 = vector.load %arg6[%c0_60, %c0_61] : memref<128x512xf32, #tpu.memory_space<vmem>>, vector<128x512xf32>
    %cst_62 = arith.constant dense<0.000000e+00> : vector<8x512xf32>
    %200 = tpu.matmul %190, %199, %cst_62 {dimension_numbers = #tpu.dot_dimension_numbers<[1], [0], [0], [1], [0, 0, 1, 1], [], []>} : vector<8x128xf32>, vector<128x512xf32>, vector<8x512xf32> -> vector<8x512xf32>
    %201 = arith.addf %198, %200 : vector<8x512xf32>
    %202 = vector.extract_strided_slice %201 {offsets = [0, 0], sizes = [8, 128], strides = [1, 1]} : vector<8x512xf32> to vector<8x128xf32>
    %203 = arith.negf %202 : vector<8x128xf32>
    %204 = math.exp %203 : vector<8x128xf32>
    %cst_63 = arith.constant 1.000000e+00 : f32
    %205 = vector.broadcast %cst_63 : f32 to vector<8x128xf32>
    %206 = arith.addf %205, %204 : vector<8x128xf32>
    %207 = arith.divf %205, %206 : vector<8x128xf32>
    %208 = vector.extract_strided_slice %201 {offsets = [0, 128], sizes = [8, 128], strides = [1, 1]} : vector<8x512xf32> to vector<8x128xf32>
    %209 = arith.negf %208 : vector<8x128xf32>
    %210 = math.exp %209 : vector<8x128xf32>
    %cst_64 = arith.constant 1.000000e+00 : f32
    %211 = vector.broadcast %cst_64 : f32 to vector<8x128xf32>
    %212 = arith.addf %211, %210 : vector<8x128xf32>
    %213 = arith.divf %211, %212 : vector<8x128xf32>
    %214 = vector.extract_strided_slice %201 {offsets = [0, 256], sizes = [8, 128], strides = [1, 1]} : vector<8x512xf32> to vector<8x128xf32>
    %215 = math.tanh %214 : vector<8x128xf32>
    %216 = vector.extract_strided_slice %201 {offsets = [0, 384], sizes = [8, 128], strides = [1, 1]} : vector<8x512xf32> to vector<8x128xf32>
    %217 = arith.negf %216 : vector<8x128xf32>
    %218 = math.exp %217 : vector<8x128xf32>
    %cst_65 = arith.constant 1.000000e+00 : f32
    %219 = vector.broadcast %cst_65 : f32 to vector<8x128xf32>
    %220 = arith.addf %219, %218 : vector<8x128xf32>
    %221 = arith.divf %219, %220 : vector<8x128xf32>
    %222 = arith.mulf %213, %188 : vector<8x128xf32>
    %223 = arith.mulf %207, %215 : vector<8x128xf32>
    %224 = arith.addf %222, %223 : vector<8x128xf32>
    %225 = math.tanh %224 : vector<8x128xf32>
    %226 = arith.mulf %221, %225 : vector<8x128xf32>
    %227 = arith.truncf %226 : vector<8x128xf32> to vector<8x128xbf16>
    %228 = arith.index_cast %195 : i32 to index
    %c0_66 = arith.constant 0 : index
    %229 = vector.load %arg16[%228, %c0_66] : memref<64x128xbf16, #tpu.memory_space<vmem>>, vector<8x128xbf16>
    tpu.vector_store %arg16[%228, %c0_66], %227 {strides = array<i32>} : memref<64x128xbf16, #tpu.memory_space<vmem>>, vector<8x128xbf16>,
    %c6_i32 = arith.constant 6 : i32
    %c8_i32_67 = arith.constant 8 : i32
    %230 = arith.muli %c6_i32, %c8_i32_67 : i32
    %231 = tpu.assume_multiple %230, 8 : i32
    %232 = arith.index_cast %231 : i32 to index
    %c0_68 = arith.constant 0 : index
    %233 = vector.load %arg15[%232, %c0_68] : memref<64x512xbf16, #tpu.memory_space<vmem>>, vector<8x512xbf16>
    %234 = arith.extf %233 : vector<8x512xbf16> to vector<8x512xf32>
    %c0_69 = arith.constant 0 : index
    %c0_70 = arith.constant 0 : index
    %235 = vector.load %arg6[%c0_69, %c0_70] : memref<128x512xf32, #tpu.memory_space<vmem>>, vector<128x512xf32>
    %cst_71 = arith.constant dense<0.000000e+00> : vector<8x512xf32>
    %236 = tpu.matmul %226, %235, %cst_71 {dimension_numbers = #tpu.dot_dimension_numbers<[1], [0], [0], [1], [0, 0, 1, 1], [], []>} : vector<8x128xf32>, vector<128x512xf32>, vector<8x512xf32> -> vector<8x512xf32>
    %237 = arith.addf %234, %236 : vector<8x512xf32>
    %238 = vector.extract_strided_slice %237 {offsets = [0, 0], sizes = [8, 128], strides = [1, 1]} : vector<8x512xf32> to vector<8x128xf32>
    %239 = arith.negf %238 : vector<8x128xf32>
    %240 = math.exp %239 : vector<8x128xf32>
    %cst_72 = arith.constant 1.000000e+00 : f32
    %241 = vector.broadcast %cst_72 : f32 to vector<8x128xf32>
    %242 = arith.addf %241, %240 : vector<8x128xf32>
    %243 = arith.divf %241, %242 : vector<8x128xf32>
    %244 = vector.extract_strided_slice %237 {offsets = [0, 128], sizes = [8, 128], strides = [1, 1]} : vector<8x512xf32> to vector<8x128xf32>
    %245 = arith.negf %244 : vector<8x128xf32>
    %246 = math.exp %245 : vector<8x128xf32>
    %cst_73 = arith.constant 1.000000e+00 : f32
    %247 = vector.broadcast %cst_73 : f32 to vector<8x128xf32>
    %248 = arith.addf %247, %246 : vector<8x128xf32>
    %249 = arith.divf %247, %248 : vector<8x128xf32>
    %250 = vector.extract_strided_slice %237 {offsets = [0, 256], sizes = [8, 128], strides = [1, 1]} : vector<8x512xf32> to vector<8x128xf32>
    %251 = math.tanh %250 : vector<8x128xf32>
    %252 = vector.extract_strided_slice %237 {offsets = [0, 384], sizes = [8, 128], strides = [1, 1]} : vector<8x512xf32> to vector<8x128xf32>
    %253 = arith.negf %252 : vector<8x128xf32>
    %254 = math.exp %253 : vector<8x128xf32>
    %cst_74 = arith.constant 1.000000e+00 : f32
    %255 = vector.broadcast %cst_74 : f32 to vector<8x128xf32>
    %256 = arith.addf %255, %254 : vector<8x128xf32>
    %257 = arith.divf %255, %256 : vector<8x128xf32>
    %258 = arith.mulf %249, %224 : vector<8x128xf32>
    %259 = arith.mulf %243, %251 : vector<8x128xf32>
    %260 = arith.addf %258, %259 : vector<8x128xf32>
    %261 = math.tanh %260 : vector<8x128xf32>
    %262 = arith.mulf %257, %261 : vector<8x128xf32>
    %263 = arith.truncf %262 : vector<8x128xf32> to vector<8x128xbf16>
    %264 = arith.index_cast %231 : i32 to index
    %c0_75 = arith.constant 0 : index
    %265 = vector.load %arg16[%264, %c0_75] : memref<64x128xbf16, #tpu.memory_space<vmem>>, vector<8x128xbf16>
    tpu.vector_store %arg16[%264, %c0_75], %263 {strides = array<i32>} : memref<64x128xbf16, #tpu.memory_space<vmem>>, vector<8x128xbf16>,
    %c7_i32 = arith.constant 7 : i32
    %c8_i32_76 = arith.constant 8 : i32
    %266 = arith.muli %c7_i32, %c8_i32_76 : i32
    %267 = tpu.assume_multiple %266, 8 : i32
    %268 = arith.index_cast %267 : i32 to index
    %c0_77 = arith.constant 0 : index
    %269 = vector.load %arg15[%268, %c0_77] : memref<64x512xbf16, #tpu.memory_space<vmem>>, vector<8x512xbf16>
    %270 = arith.extf %269 : vector<8x512xbf16> to vector<8x512xf32>
    %c0_78 = arith.constant 0 : index
    %c0_79 = arith.constant 0 : index
    %271 = vector.load %arg6[%c0_78, %c0_79] : memref<128x512xf32, #tpu.memory_space<vmem>>, vector<128x512xf32>
    %cst_80 = arith.constant dense<0.000000e+00> : vector<8x512xf32>
    %272 = tpu.matmul %262, %271, %cst_80 {dimension_numbers = #tpu.dot_dimension_numbers<[1], [0], [0], [1], [0, 0, 1, 1], [], []>} : vector<8x128xf32>, vector<128x512xf32>, vector<8x512xf32> -> vector<8x512xf32>
    %273 = arith.addf %270, %272 : vector<8x512xf32>
    %274 = vector.extract_strided_slice %273 {offsets = [0, 0], sizes = [8, 128], strides = [1, 1]} : vector<8x512xf32> to vector<8x128xf32>
    %275 = arith.negf %274 : vector<8x128xf32>
    %276 = math.exp %275 : vector<8x128xf32>
    %cst_81 = arith.constant 1.000000e+00 : f32
    %277 = vector.broadcast %cst_81 : f32 to vector<8x128xf32>
    %278 = arith.addf %277, %276 : vector<8x128xf32>
    %279 = arith.divf %277, %278 : vector<8x128xf32>
    %280 = vector.extract_strided_slice %273 {offsets = [0, 128], sizes = [8, 128], strides = [1, 1]} : vector<8x512xf32> to vector<8x128xf32>
    %281 = arith.negf %280 : vector<8x128xf32>
    %282 = math.exp %281 : vector<8x128xf32>
    %cst_82 = arith.constant 1.000000e+00 : f32
    %283 = vector.broadcast %cst_82 : f32 to vector<8x128xf32>
    %284 = arith.addf %283, %282 : vector<8x128xf32>
    %285 = arith.divf %283, %284 : vector<8x128xf32>
    %286 = vector.extract_strided_slice %273 {offsets = [0, 256], sizes = [8, 128], strides = [1, 1]} : vector<8x512xf32> to vector<8x128xf32>
    %287 = math.tanh %286 : vector<8x128xf32>
    %288 = vector.extract_strided_slice %273 {offsets = [0, 384], sizes = [8, 128], strides = [1, 1]} : vector<8x512xf32> to vector<8x128xf32>
    %289 = arith.negf %288 : vector<8x128xf32>
    %290 = math.exp %289 : vector<8x128xf32>
    %cst_83 = arith.constant 1.000000e+00 : f32
    %291 = vector.broadcast %cst_83 : f32 to vector<8x128xf32>
    %292 = arith.addf %291, %290 : vector<8x128xf32>
    %293 = arith.divf %291, %292 : vector<8x128xf32>
    %294 = arith.mulf %285, %260 : vector<8x128xf32>
    %295 = arith.mulf %279, %287 : vector<8x128xf32>
    %296 = arith.addf %294, %295 : vector<8x128xf32>
    %297 = math.tanh %296 : vector<8x128xf32>
    %298 = arith.mulf %293, %297 : vector<8x128xf32>
    %299 = arith.truncf %298 : vector<8x128xf32> to vector<8x128xbf16>
    %300 = arith.index_cast %267 : i32 to index
    %c0_84 = arith.constant 0 : index
    %301 = vector.load %arg16[%300, %c0_84] : memref<64x128xbf16, #tpu.memory_space<vmem>>, vector<8x128xbf16>
    tpu.vector_store %arg16[%300, %c0_84], %299 {strides = array<i32>} : memref<64x128xbf16, #tpu.memory_space<vmem>>, vector<8x128xbf16>,
    %c8_i32_85 = arith.constant 8 : i32
    %c0_86 = arith.constant 0 : index
    %c0_87 = arith.constant 0 : index
    %302 = vector.load %arg17[%c0_86, %c0_87] : memref<8x128xf32, #tpu.memory_space<vmem>>, vector<8x128xf32>
    tpu.vector_store %arg17[%c0_86, %c0_87], %298 {strides = array<i32>} : memref<8x128xf32, #tpu.memory_space<vmem>>, vector<8x128xf32>,
    %c0_88 = arith.constant 0 : index
    %c0_89 = arith.constant 0 : index
    %303 = vector.load %arg18[%c0_88, %c0_89] : memref<8x128xf32, #tpu.memory_space<vmem>>, vector<8x128xf32>
    tpu.vector_store %arg18[%c0_88, %c0_89], %296 {strides = array<i32>} : memref<8x128xf32, #tpu.memory_space<vmem>>, vector<8x128xf32>,
    %c0_i32_90 = arith.constant 0 : i32
    %304 = arith.cmpi eq, %arg1, %c0_i32_90 : i32
    %305 = arith.extui %304 : i1 to i32
    %c0_i32_91 = arith.constant 0 : i32
    %306 = arith.cmpi ne, %305, %c0_i32_91 : i32
    scf.if %306 {
      %c0_108 = arith.constant 0 : index
      %c0_109 = arith.constant 0 : index
      %323 = vector.load %arg13[%c0_108, %c0_109] : memref<8x128xf32, #tpu.memory_space<vmem>>, vector<8x128xf32>
      tpu.vector_store %arg13[%c0_108, %c0_109], %298 {strides = array<i32>} : memref<8x128xf32, #tpu.memory_space<vmem>>, vector<8x128xf32>,
      %c0_110 = arith.constant 0 : index
      %c0_111 = arith.constant 0 : index
      %324 = vector.load %arg14[%c0_110, %c0_111] : memref<8x128xf32, #tpu.memory_space<vmem>>, vector<8x128xf32>
      tpu.vector_store %arg14[%c0_110, %c0_111], %296 {strides = array<i32>} : memref<8x128xf32, #tpu.memory_space<vmem>>, vector<8x128xf32>,
    } else {
    }
    %c0_92 = arith.constant 0 : index
    %c0_93 = arith.constant 0 : index
    %307 = vector.load %arg16[%c0_92, %c0_93] : memref<64x128xbf16, #tpu.memory_space<vmem>>, vector<64x128xbf16>
    %c0_94 = arith.constant 0 : index
    %c0_95 = arith.constant 0 : index
    %308 = vector.load %arg8[%c0_94, %c0_95] : memref<128x128xbf16, #tpu.memory_space<vmem>>, vector<128x128xbf16>
    %cst_96 = arith.constant dense<0.000000e+00> : vector<64x128xf32>
    %309 = tpu.matmul %307, %308, %cst_96 {dimension_numbers = #tpu.dot_dimension_numbers<[1], [0], [0], [1], [0, 0, 1, 1], [], []>} : vector<64x128xbf16>, vector<128x128xbf16>, vector<64x128xf32> -> vector<64x128xf32>
    %c0_97 = arith.constant 0 : index
    %c0_98 = arith.constant 0 : index
    %310 = vector.load %arg9[%c0_97, %c0_98] : memref<1x128xf32, #tpu.memory_space<vmem>>, vector<1x128xf32>
    %311 = vector.broadcast %310 : vector<1x128xf32> to vector<64x128xf32>
    %312 = arith.addf %309, %311 : vector<64x128xf32>
    %cst_99 = arith.constant 0.000000e+00 : f32
    %313 = vector.broadcast %cst_99 : f32 to vector<64x128xf32>
    %314 = arith.maximumf %312, %313 : vector<64x128xf32>
    %315 = arith.truncf %314 : vector<64x128xf32> to vector<64x128xbf16>
    %c0_100 = arith.constant 0 : index
    %c0_101 = arith.constant 0 : index
    %316 = vector.load %arg10[%c0_100, %c0_101] : memref<128x128xbf16, #tpu.memory_space<vmem>>, vector<128x128xbf16>
    %cst_102 = arith.constant dense<0.000000e+00> : vector<64x128xf32>
    %317 = tpu.matmul %315, %316, %cst_102 {dimension_numbers = #tpu.dot_dimension_numbers<[1], [0], [0], [1], [0, 0, 1, 1], [], []>} : vector<64x128xbf16>, vector<128x128xbf16>, vector<64x128xf32> -> vector<64x128xf32>
    %c0_103 = arith.constant 0 : index
    %c0_104 = arith.constant 0 : index
    %318 = vector.load %arg11[%c0_103, %c0_104] : memref<1x128xf32, #tpu.memory_space<vmem>>, vector<1x128xf32>
    %319 = vector.broadcast %318 : vector<1x128xf32> to vector<64x128xf32>
    %320 = arith.addf %317, %319 : vector<64x128xf32>
    %321 = vector.shape_cast %320 : vector<64x128xf32> to vector<8x8x128xf32>
    %c0_105 = arith.constant 0 : index
    %c0_106 = arith.constant 0 : index
    %c0_107 = arith.constant 0 : index
    %322 = vector.load %arg12[%c0_105, %c0_106, %c0_107] : memref<8x8x128xf32, #tpu.memory_space<vmem>>, vector<8x8x128xf32>
    tpu.vector_store %arg12[%c0_105, %c0_106, %c0_107], %321 {strides = array<i32>} : memref<8x8x128xf32, #tpu.memory_space<vmem>>, vector<8x8x128xf32>,
    return
  }
  func.func @transform_0(%arg0: i32, %arg1: i32) -> (i32, i32, i32) {
    %c0_i32 = arith.constant 0 : i32
    %c0_i32_0 = arith.constant 0 : i32
    return %arg1, %arg0, %c0_i32 : i32, i32, i32
  }
  func.func @transform_1(%arg0: i32, %arg1: i32) -> (i32, i32) {
    %c0_i32 = arith.constant 0 : i32
    %c0_i32_0 = arith.constant 0 : i32
    return %arg0, %c0_i32 : i32, i32
  }
  func.func @transform_2(%arg0: i32, %arg1: i32) -> (i32, i32) {
    %c0_i32 = arith.constant 0 : i32
    %c0_i32_0 = arith.constant 0 : i32
    return %arg0, %c0_i32 : i32, i32
  }
  func.func @transform_3(%arg0: i32, %arg1: i32) -> (i32, i32) {
    %c0_i32 = arith.constant 0 : i32
    %c0_i32_0 = arith.constant 0 : i32
    %c0_i32_1 = arith.constant 0 : i32
    return %c0_i32, %c0_i32_0 : i32, i32
  }
  func.func @transform_4(%arg0: i32, %arg1: i32) -> (i32, i32) {
    %c0_i32 = arith.constant 0 : i32
    %c0_i32_0 = arith.constant 0 : i32
    %c0_i32_1 = arith.constant 0 : i32
    return %c0_i32, %c0_i32_0 : i32, i32
  }
  func.func @transform_5(%arg0: i32, %arg1: i32) -> (i32, i32) {
    %c0_i32 = arith.constant 0 : i32
    %c0_i32_0 = arith.constant 0 : i32
    %c0_i32_1 = arith.constant 0 : i32
    return %c0_i32, %c0_i32_0 : i32, i32
  }
  func.func @transform_6(%arg0: i32, %arg1: i32) -> (i32, i32) {
    %c0_i32 = arith.constant 0 : i32
    %c0_i32_0 = arith.constant 0 : i32
    %c0_i32_1 = arith.constant 0 : i32
    return %c0_i32, %c0_i32_0 : i32, i32
  }
  func.func @transform_7(%arg0: i32, %arg1: i32) -> (i32, i32) {
    %c0_i32 = arith.constant 0 : i32
    %c0_i32_0 = arith.constant 0 : i32
    %c0_i32_1 = arith.constant 0 : i32
    return %c0_i32, %c0_i32_0 : i32, i32
  }
  func.func @transform_8(%arg0: i32, %arg1: i32) -> (i32, i32) {
    %c0_i32 = arith.constant 0 : i32
    %c0_i32_0 = arith.constant 0 : i32
    %c0_i32_1 = arith.constant 0 : i32
    return %c0_i32, %c0_i32_0 : i32, i32
  }
  func.func @transform_9(%arg0: i32, %arg1: i32) -> (i32, i32) {
    %c0_i32 = arith.constant 0 : i32
    %c0_i32_0 = arith.constant 0 : i32
    %c0_i32_1 = arith.constant 0 : i32
    return %c0_i32, %c0_i32_0 : i32, i32
  }
  func.func @transform_10(%arg0: i32, %arg1: i32) -> (i32, i32, i32) {
    %c0_i32 = arith.constant 0 : i32
    %c0_i32_0 = arith.constant 0 : i32
    return %arg1, %arg0, %c0_i32 : i32, i32, i32
  }
  func.func @transform_11(%arg0: i32, %arg1: i32) -> (i32, i32) {
    %c0_i32 = arith.constant 0 : i32
    %c0_i32_0 = arith.constant 0 : i32
    return %arg0, %c0_i32 : i32, i32
  }
  func.func @transform_12(%arg0: i32, %arg1: i32) -> (i32, i32) {
    %c0_i32 = arith.constant 0 : i32
    %c0_i32_0 = arith.constant 0 : i32
    return %arg0, %c0_i32 : i32, i32
  }
}

</mosaic_0001>

<llo_original>
// kernel: r2d2_forward.1
$region0: #{r2d2_forward.1}
  #allocation0 [shape = 'u32[]', space=smem, size = 0x4, offset = 0x4, fixed_abs, tag = 'smem constant byte address 0x4 - core index']
  #allocation1 [shape = 'u32[72,128]{1,0:T(1,128)}', space=vmem, size = 0x9000, scoped, tag = 'internal scratch']
  #allocation2 [shape = 'bf16[64,512]{1,0:T(8,128)(2,1)}', space=vmem, size = 0x10000, scoped, tag = 'scratch operand']
  #allocation3 [shape = 'bf16[64,128]{1,0:T(8,128)(2,1)}', space=vmem, size = 0x4000, scoped, tag = 'scratch operand']
  #allocation4 [shape = 'f32[8,128]{1,0:T(8,128)}', space=vmem, size = 0x1000, scoped, tag = 'scratch operand']
  #allocation5 [shape = 'f32[8,128]{1,0:T(8,128)}', space=vmem, size = 0x1000, scoped, tag = 'scratch operand']
  %s0 = inlined_call_operand.vmem [shape: f32[8,8,4], index: 0, kind: input, shape index: {}]
  %s1 = inlined_call_operand.vmem [shape: f32[8,128], index: 1, kind: input, shape index: {}]
  %s2 = inlined_call_operand.vmem [shape: f32[8,128], index: 2, kind: input, shape index: {}]
  %s3 = inlined_call_operand.vmem [shape: f32[4,512], index: 3, kind: input, shape index: {}]
  %s4 = inlined_call_operand.hbm [shape: f32[128,512], index: 4, kind: input, shape index: {}]
  %s5 = inlined_call_operand.vmem [shape: f32[1,512], index: 5, kind: input, shape index: {}]
  %s6 = inlined_call_operand.vmem [shape: bf16[128,128], index: 6, kind: input, shape index: {}]
  %s7 = inlined_call_operand.vmem [shape: f32[1,128], index: 7, kind: input, shape index: {}]
  %s8 = inlined_call_operand.vmem [shape: bf16[128,128], index: 8, kind: input, shape index: {}]
  %s9 = inlined_call_operand.vmem [shape: f32[1,128], index: 9, kind: input, shape index: {}]
  %s10 = inlined_call_operand.vmem [shape: f32[8,8,128], index: 10, kind: output, shape index: {0}]
  %s11 = inlined_call_operand.vmem [shape: f32[8,128], index: 11, kind: output, shape index: {1}]
  %s12 = inlined_call_operand.vmem [shape: f32[8,128], index: 12, kind: output, shape index: {2}]
  %13 = xla_tuple %s10, %s11, %s12
  %s14 = sld [smem:[#allocation0]]
  $region78: #{r2d2_forward.1} parent=0
    _
  %s16 = ssub.s32 1, %s14
  %s17 = scalar_select 0, %s16, %s14
  $region1: #{r2d2_forward.1} parent=0
    #allocation6 [shape = 'u8[262144]{0}', space=vmem, size = 0x40000, scoped, tag = 'input window, operand 4, single buffered']
    #allocation7 [shape = 's32[1]{0}', space=sflag, size = 0x4, scoped, tag = 'scoped memory for r2d2_forward.1']
    %18 = vsyncpa [#allocation7], 0
    // Predicated region
    $region2: #{r2d2_forward.1} parent=1 // pred_check
      _
    $region3: #{r2d2_forward.1} parent=1 // pred_check_branch
      %20 = sbr.rel (0) target = $region5
    $region4: #{r2d2_forward.1} parent=1 // pred_region
      _
    $region5: #{r2d2_forward.1} parent=1 // pred_fallthru
      _
    // Predicated region
    $region6: #{r2d2_forward.1} parent=1 // pred_check
      _
    $region7: #{r2d2_forward.1} parent=1 // pred_check_branch
      %22 = sbr.rel (0) target = $region9
    $region8: #{r2d2_forward.1} parent=1 // pred_region
      _
    $region9: #{r2d2_forward.1} parent=1 // pred_fallthru
      _
    // Predicated region
    $region10: #{r2d2_forward.1} parent=1 // pred_check
      _
    $region11: #{r2d2_forward.1} parent=1 // pred_check_branch
      %24 = sbr.rel (0) target = $region13
    $region12: #{r2d2_forward.1} parent=1 // pred_region
      _
    $region13: #{r2d2_forward.1} parent=1 // pred_fallthru
      _
    // Predicated region
    $region14: #{r2d2_forward.1} parent=1 // pred_check
      _
    $region15: #{r2d2_forward.1} parent=1 // pred_check_branch
      %26 = sbr.rel (0) target = $region17
    $region16: #{r2d2_forward.1} parent=1 // pred_region
      _
    $region17: #{r2d2_forward.1} parent=1 // pred_fallthru
      _
    // Predicated region
    $region18: #{r2d2_forward.1} parent=1 // pred_check
      _
    $region19: #{r2d2_forward.1} parent=1 // pred_check_branch
      %28 = sbr.rel (0) target = $region21
    $region20: #{r2d2_forward.1} parent=1 // pred_region
      %30 = vsyncadd [#allocation7], 0
      %s31 = sshll.u32 %s4, 4
      %s32 = int_to_ptr.hbm [resolvable:$true] %s31
      %s33 = sshll.u32 [#allocation6], 4
      %s34 = int_to_ptr.vmem [resolvable:$true] %s33
      %39 = dma.hbm_to_vmem [thread:$0]  %s32, 8192, %s34, [#allocation7], 512, 512, 32
    $region21: #{r2d2_forward.1} parent=1 // pred_fallthru
      _
    // Predicated region
    $region22: #{r2d2_forward.1} parent=1 // pred_check
      _
    $region23: #{r2d2_forward.1} parent=1 // pred_check_branch
      %41 = sbr.rel (0) target = $region25
    $region24: #{r2d2_forward.1} parent=1 // pred_region
      _
    $region25: #{r2d2_forward.1} parent=1 // pred_fallthru
      _
    // Predicated region
    $region26: #{r2d2_forward.1} parent=1 // pred_check
      _
    $region27: #{r2d2_forward.1} parent=1 // pred_check_branch
      %43 = sbr.rel (0) target = $region29
    $region28: #{r2d2_forward.1} parent=1 // pred_region
      _
    $region29: #{r2d2_forward.1} parent=1 // pred_fallthru
      _
    // Predicated region
    $region30: #{r2d2_forward.1} parent=1 // pred_check
      _
    $region31: #{r2d2_forward.1} parent=1 // pred_check_branch
      %45 = sbr.rel (0) target = $region33
    $region32: #{r2d2_forward.1} parent=1 // pred_region
      _
    $region33: #{r2d2_forward.1} parent=1 // pred_fallthru
      _
    // Predicated region
    $region34: #{r2d2_forward.1} parent=1 // pred_check
      _
    $region35: #{r2d2_forward.1} parent=1 // pred_check_branch
      %47 = sbr.rel (0) target = $region37
    $region36: #{r2d2_forward.1} parent=1 // pred_region
      _
    $region37: #{r2d2_forward.1} parent=1 // pred_fallthru
      _
    // Predicated region
    $region38: #{r2d2_forward.1} parent=1 // pred_check
      _
    $region39: #{r2d2_forward.1} parent=1 // pred_check_branch
      %49 = sbr.rel (0) target = $region41
    $region40: #{r2d2_forward.1} parent=1 // pred_region
      _
    $region41: #{r2d2_forward.1} parent=1 // pred_fallthru
      _
    // Predicated region
    $region42: #{r2d2_forward.1} parent=1 // pred_check
      _
    $region43: #{r2d2_forward.1} parent=1 // pred_check_branch
      %51 = sbr.rel (0) target = $region45
    $region44: #{r2d2_forward.1} parent=1 // pred_region
      %53 = dma.done [#allocation7], 8192
    $region45: #{r2d2_forward.1} parent=1 // pred_fallthru
      _
    %p54 = scmp.eq.s32.totalorder 0, 0
    // Predicated region
    $region46: #{r2d2_forward.1} parent=1 // pred_check
      %p55 = pneg %p54
    $region47: #{r2d2_forward.1} parent=1 // pred_check_branch
      %57 = sbr.rel (%p55) target = $region49
    $region48: #{r2d2_forward.1} parent=1 // pred_region
      %v58 = vld [vmem:[%s1] sm:$0xff]
      %59 = vst [vmem:[#allocation4] sm:$0xff] %v58
      %v60 = vld [vmem:[%s2] sm:$0xff]
      %61 = vst [vmem:[#allocation5] sm:$0xff] %v60
    $region49: #{r2d2_forward.1} parent=1 // pred_fallthru
      _
    %v62 = vld [vmem:[%s0] sm:$0xff]
    %v63 = vld [vmem:[%s0 + $0x8] sm:$0xff]
    %v64 = vld [vmem:[%s0 + $0x10] sm:$0xff]
    %v65 = vld [vmem:[%s0 + $0x18] sm:$0xff]
    %v66 = vld [vmem:[%s0 + $0x20] sm:$0xff]
    %v67 = vld [vmem:[%s0 + $0x28] sm:$0xff]
    %v68 = vld [vmem:[%s0 + $0x30] sm:$0xff]
    %v69 = vld [vmem:[%s0 + $0x38] sm:$0xff]
    %v70 = vld [vmem:[%s3] sm:$0xff]
    %v71 = vld [vmem:[%s3 + $0x8] sm:$0xff]
    %v72 = vld [vmem:[%s5] sm:$0xf]
    %v74 = vperm.slane %v72, 0
    %v75 = vperm.slane %v72, 1
    %v76 = vperm.slane %v72, 2
    %v77 = vperm.slane %v72, 3
    %84 = vst [vmem:[#allocation1] ss:$2 sm:$0xff] %v70
    %s85 = scalar_lea.vmem [#allocation1], 16
    %86 = vst [vmem:[%s85] ss:$2 sm:$0xff] %v71
    %v87 = vld.sshfl [vmem:[#allocation1] sm:$0xff pattern:$0x75316420]
    %v88 = vld.sshfl [vmem:[#allocation1 + $0x8] sm:$0xff pattern:$0x75316420]
    %v89 = vld.sshfl [vmem:[#allocation1 + $0x10] sm:$0xff pattern:$0x75316420]
    %v90 = vld.sshfl [vmem:[#allocation1 + $0x18] sm:$0xff pattern:$0x75316420]
    %vm91 = vcmask 31744
    %v93 = vsel %vm91, %v62, 0
    %v96 = vsel %vm91, %v63, 0
    %v99 = vsel %vm91, %v64, 0
    %v102 = vsel %vm91, %v65, 0
    %v105 = vsel %vm91, %v66, 0
    %v108 = vsel %vm91, %v67, 0
    %v111 = vsel %vm91, %v68, 0
    %v114 = vsel %vm91, %v69, 0
    %vm116 = vcmask 1043456
    %v117 = vsel %vm116, %v87, 0
    %v119 = vsel %vm116, %v88, 0
    %v121 = vsel %vm116, %v89, 0
    %v123 = vsel %vm116, %v90, 0
    %125 = vmatpush.msra.mxu0 0.0
    %126 = vmatpush.msra.mxu0 0.0
    %127 = vmatpush.msra.mxu0 0.0
    %128 = vmatpush.msra.mxu0 0.0
    %129 = vmatpush.msra.mxu0 0.0
    %130 = vmatpush.msra.mxu0 0.0
    %131 = vmatpush.msra.mxu0 0.0
    %132 = vmatpush.msra.mxu0 0.0
    %133 = vmatpush.msra.mxu0 0.0
    %134 = vmatpush.msra.mxu0 0.0
    %135 = vmatpush.msra.mxu0 0.0
    %136 = vmatpush.msra.mxu0 0.0
    %137 = vmatpush.msra.mxu0 0.0
    %138 = vmatpush.msra.mxu0 0.0
    %139 = vmatpush.msra.mxu0 0.0
    %140 = vmatpush.msra.mxu0 %v117
    %141 = vmatmul.f32.gmra.mxu0 %v93
    %v142 = vpop.f32.mrf.mxu0
    %v143 = vadd.f32 %v74, %v142
    %144 = vmatmul.f32.gmra.mxu0 %v96
    %v145 = vpop.f32.mrf.mxu0
    %v146 = vadd.f32 %v74, %v145
    %147 = vmatmul.f32.gmra.mxu0 %v99
    %v148 = vpop.f32.mrf.mxu0
    %v149 = vadd.f32 %v74, %v148
    %150 = vmatmul.f32.gmra.mxu0 %v102
    %v151 = vpop.f32.mrf.mxu0
    %v152 = vadd.f32 %v74, %v151
    %153 = vmatmul.f32.gmra.mxu0 %v105
    %v154 = vpop.f32.mrf.mxu0
    %v155 = vadd.f32 %v74, %v154
    %156 = vmatmul.f32.gmra.mxu0 %v108
    %v157 = vpop.f32.mrf.mxu0
    %v158 = vadd.f32 %v74, %v157
    %159 = vmatmul.f32.gmra.mxu0 %v111
    %v160 = vpop.f32.mrf.mxu0
    %v161 = vadd.f32 %v74, %v160
    %162 = vmatmul.f32.gmra.mxu0 %v114
    %v163 = vpop.f32.mrf.mxu0
    %v164 = vadd.f32 %v74, %v163
    %165 = vdwg.mxu0
    %166 = vmatpush.msra.mxu0 0.0
    %167 = vmatpush.msra.mxu0 0.0
    %168 = vmatpush.msra.mxu0 0.0
    %169 = vmatpush.msra.mxu0 0.0
    %170 = vmatpush.msra.mxu0 0.0
    %171 = vmatpush.msra.mxu0 0.0
    %172 = vmatpush.msra.mxu0 0.0
    %173 = vmatpush.msra.mxu0 0.0
    %174 = vmatpush.msra.mxu0 0.0
    %175 = vmatpush.msra.mxu0 0.0
    %176 = vmatpush.msra.mxu0 0.0
    %177 = vmatpush.msra.mxu0 0.0
    %178 = vmatpush.msra.mxu0 0.0
    %179 = vmatpush.msra.mxu0 0.0
    %180 = vmatpush.msra.mxu0 0.0
    %181 = vmatpush.msra.mxu0 %v119
    %182 = vmatmul.f32.gmra.mxu0 %v93
    %v183 = vpop.f32.mrf.mxu0
    %v184 = vadd.f32 %v75, %v183
    %185 = vmatmul.f32.gmra.mxu0 %v96
    %v186 = vpop.f32.mrf.mxu0
    %v187 = vadd.f32 %v75, %v186
    %188 = vmatmul.f32.gmra.mxu0 %v99
    %v189 = vpop.f32.mrf.mxu0
    %v190 = vadd.f32 %v75, %v189
    %191 = vmatmul.f32.gmra.mxu0 %v102
    %v192 = vpop.f32.mrf.mxu0
    %v193 = vadd.f32 %v75, %v192
    %194 = vmatmul.f32.gmra.mxu0 %v105
    %v195 = vpop.f32.mrf.mxu0
    %v196 = vadd.f32 %v75, %v195
    %197 = vmatmul.f32.gmra.mxu0 %v108
    %v198 = vpop.f32.mrf.mxu0
    %v199 = vadd.f32 %v75, %v198
    %200 = vmatmul.f32.gmra.mxu0 %v111
    %v201 = vpop.f32.mrf.mxu0
    %v202 = vadd.f32 %v75, %v201
    %203 = vmatmul.f32.gmra.mxu0 %v114
    %v204 = vpop.f32.mrf.mxu0
    %v205 = vadd.f32 %v75, %v204
    %206 = vdwg.mxu0
    %207 = vmatpush.msra.mxu0 0.0
    %208 = vmatpush.msra.mxu0 0.0
    %209 = vmatpush.msra.mxu0 0.0
    %210 = vmatpush.msra.mxu0 0.0
    %211 = vmatpush.msra.mxu0 0.0
    %212 = vmatpush.msra.mxu0 0.0
    %213 = vmatpush.msra.mxu0 0.0
    %214 = vmatpush.msra.mxu0 0.0
    %215 = vmatpush.msra.mxu0 0.0
    %216 = vmatpush.msra.mxu0 0.0
    %217 = vmatpush.msra.mxu0 0.0
    %218 = vmatpush.msra.mxu0 0.0
    %219 = vmatpush.msra.mxu0 0.0
    %220 = vmatpush.msra.mxu0 0.0
    %221 = vmatpush.msra.mxu0 0.0
    %222 = vmatpush.msra.mxu0 %v121
    %223 = vmatmul.f32.gmra.mxu0 %v93
    %v224 = vpop.f32.mrf.mxu0
    %v225 = vadd.f32 %v76, %v224
    %226 = vmatmul.f32.gmra.mxu0 %v96
    %v227 = vpop.f32.mrf.mxu0
    %v228 = vadd.f32 %v76, %v227
    %229 = vmatmul.f32.gmra.mxu0 %v99
    %v230 = vpop.f32.mrf.mxu0
    %v231 = vadd.f32 %v76, %v230
    %232 = vmatmul.f32.gmra.mxu0 %v102
    %v233 = vpop.f32.mrf.mxu0
    %v234 = vadd.f32 %v76, %v233
    %235 = vmatmul.f32.gmra.mxu0 %v105
    %v236 = vpop.f32.mrf.mxu0
    %v237 = vadd.f32 %v76, %v236
    %238 = vmatmul.f32.gmra.mxu0 %v108
    %v239 = vpop.f32.mrf.mxu0
    %v240 = vadd.f32 %v76, %v239
    %241 = vmatmul.f32.gmra.mxu0 %v111
    %v242 = vpop.f32.mrf.mxu0
    %v243 = vadd.f32 %v76, %v242
    %244 = vmatmul.f32.gmra.mxu0 %v114
    %v245 = vpop.f32.mrf.mxu0
    %v246 = vadd.f32 %v76, %v245
    %247 = vdwg.mxu0
    %248 = vmatpush.msra.mxu0 0.0
    %249 = vmatpush.msra.mxu0 0.0
    %250 = vmatpush.msra.mxu0 0.0
    %251 = vmatpush.msra.mxu0 0.0
    %252 = vmatpush.msra.mxu0 0.0
    %253 = vmatpush.msra.mxu0 0.0
    %254 = vmatpush.msra.mxu0 0.0
    %255 = vmatpush.msra.mxu0 0.0
    %256 = vmatpush.msra.mxu0 0.0
    %257 = vmatpush.msra.mxu0 0.0
    %258 = vmatpush.msra.mxu0 0.0
    %259 = vmatpush.msra.mxu0 0.0
    %260 = vmatpush.msra.mxu0 0.0
    %261 = vmatpush.msra.mxu0 0.0
    %262 = vmatpush.msra.mxu0 0.0
    %263 = vmatpush.msra.mxu0 %v123
    %264 = vmatmul.f32.gmra.mxu0 %v93
    %v265 = vpop.f32.mrf.mxu0
    %v266 = vadd.f32 %v77, %v265
    %267 = vmatmul.f32.gmra.mxu0 %v96
    %v268 = vpop.f32.mrf.mxu0
    %v269 = vadd.f32 %v77, %v268
    %270 = vmatmul.f32.gmra.mxu0 %v99
    %v271 = vpop.f32.mrf.mxu0
    %v272 = vadd.f32 %v77, %v271
    %273 = vmatmul.f32.gmra.mxu0 %v102
    %v274 = vpop.f32.mrf.mxu0
    %v275 = vadd.f32 %v77, %v274
    %276 = vmatmul.f32.gmra.mxu0 %v105
    %v277 = vpop.f32.mrf.mxu0
    %v278 = vadd.f32 %v77, %v277
    %279 = vmatmul.f32.gmra.mxu0 %v108
    %v280 = vpop.f32.mrf.mxu0
    %v281 = vadd.f32 %v77, %v280
    %282 = vmatmul.f32.gmra.mxu0 %v111
    %v283 = vpop.f32.mrf.mxu0
    %v284 = vadd.f32 %v77, %v283
    %285 = vmatmul.f32.gmra.mxu0 %v114
    %v286 = vpop.f32.mrf.mxu0
    %v287 = vadd.f32 %v77, %v286
    %288 = vdwg.mxu0
    %v289 = vpack.c.bf16 %v184, %v143
    %v290 = vpack.c.bf16 %v266, %v225
    %v291 = vpack.c.bf16 %v187, %v146
    %v292 = vpack.c.bf16 %v269, %v228
    %v293 = vpack.c.bf16 %v190, %v149
    %v294 = vpack.c.bf16 %v272, %v231
    %v295 = vpack.c.bf16 %v193, %v152
    %v296 = vpack.c.bf16 %v275, %v234
    %v297 = vpack.c.bf16 %v196, %v155
    %v298 = vpack.c.bf16 %v278, %v237
    %v299 = vpack.c.bf16 %v199, %v158
    %v300 = vpack.c.bf16 %v281, %v240
    %v301 = vpack.c.bf16 %v202, %v161
    %v302 = vpack.c.bf16 %v284, %v243
    %v303 = vpack.c.bf16 %v205, %v164
    %v304 = vpack.c.bf16 %v287, %v246
    %305 = vst [vmem:[#allocation2] sm:$0xff] %v289
    %306 = vst [vmem:[#allocation2 + $0x8] sm:$0xff] %v290
    %307 = vst [vmem:[#allocation2 + $0x10] sm:$0xff] %v291
    %308 = vst [vmem:[#allocation2 + $0x18] sm:$0xff] %v292
    %309 = vst [vmem:[#allocation2 + $0x20] sm:$0xff] %v293
    %310 = vst [vmem:[#allocation2 + $0x28] sm:$0xff] %v294
    %311 = vst [vmem:[#allocation2 + $0x30] sm:$0xff] %v295
    %312 = vst [vmem:[#allocation2 + $0x38] sm:$0xff] %v296
    %313 = vst [vmem:[#allocation2 + $0x40] sm:$0xff] %v297
    %314 = vst [vmem:[#allocation2 + $0x48] sm:$0xff] %v298
    %315 = vst [vmem:[#allocation2 + $0x50] sm:$0xff] %v299
    %316 = vst [vmem:[#allocation2 + $0x58] sm:$0xff] %v300
    %317 = vst [vmem:[#allocation2 + $0x60] sm:$0xff] %v301
    %318 = vst [vmem:[#allocation2 + $0x68] sm:$0xff] %v302
    %319 = vst [vmem:[#allocation2 + $0x70] sm:$0xff] %v303
    %320 = vst [vmem:[#allocation2 + $0x78] sm:$0xff] %v304
    %v321 = vld [vmem:[#allocation4] sm:$0xff]
    %v322 = vld [vmem:[#allocation5] sm:$0xff]
    %s323 = smul.u32 0, 4
    %s324 = smul.addr %s323, 4
    %s325 = scalar_lea.vmem [#allocation2], %s324
    %v326 = vld [vmem:[%s325] sm:$0xff]
    %v327 = vld [vmem:[%s325 + $0x8] sm:$0xff]
    %v328 = vunpack.c.l.bf16 %v326
    %v329 = vunpack.c.h.bf16 %v326
    %v330 = vunpack.c.l.bf16 %v327
    %v331 = vunpack.c.h.bf16 %v327
    %v332 = vld [vmem:[#allocation6] sm:$0xff]
    %v333 = vld [vmem:[#allocation6 + $0x8] sm:$0xff]
    %v334 = vld [vmem:[#allocation6 + $0x10] sm:$0xff]
    %v335 = vld [vmem:[#allocation6 + $0x18] sm:$0xff]
    %v336 = vld [vmem:[#allocation6 + $0x20] sm:$0xff]
    %v337 = vld [vmem:[#allocation6 + $0x28] sm:$0xff]
    %v338 = vld [vmem:[#allocation6 + $0x30] sm:$0xff]
    %v339 = vld [vmem:[#allocation6 + $0x38] sm:$0xff]
    %v340 = vld [vmem:[#allocation6 + $0x40] sm:$0xff]
    %v341 = vld [vmem:[#allocation6 + $0x48] sm:$0xff]
    %v342 = vld [vmem:[#allocation6 + $0x50] sm:$0xff]
    %v343 = vld [vmem:[#allocation6 + $0x58] sm:$0xff]
    %v344 = vld [vmem:[#allocation6 + $0x60] sm:$0xff]
    %v345 = vld [vmem:[#allocation6 + $0x68] sm:$0xff]
    %v346 = vld [vmem:[#allocation6 + $0x70] sm:$0xff]
    %v347 = vld [vmem:[#allocation6 + $0x78] sm:$0xff]
    %v348 = vld [vmem:[#allocation6 + $0x80] sm:$0xff]
    %v349 = vld [vmem:[#allocation6 + $0x88] sm:$0xff]
    %v350 = vld [vmem:[#allocation6 + $0x90] sm:$0xff]
    %v351 = vld [vmem:[#allocation6 + $0x98] sm:$0xff]
    %v352 = vld [vmem:[#allocation6 + $0xa0] sm:$0xff]
    %v353 = vld [vmem:[#allocation6 + $0xa8] sm:$0xff]
    %v354 = vld [vmem:[#allocation6 + $0xb0] sm:$0xff]
    %v355 = vld [vmem:[#allocation6 + $0xb8] sm:$0xff]
    %v356 = vld [vmem:[#allocation6 + $0xc0] sm:$0xff]
    %v357 = vld [vmem:[#allocation6 + $0xc8] sm:$0xff]
    %v358 = vld [vmem:[#allocation6 + $0xd0] sm:$0xff]
    %v359 = vld [vmem:[#allocation6 + $0xd8] sm:$0xff]
    %v360 = vld [vmem:[#allocation6 + $0xe0] sm:$0xff]
    %v361 = vld [vmem:[#allocation6 + $0xe8] sm:$0xff]
    %v362 = vld [vmem:[#allocation6 + $0xf0] sm:$0xff]
    %v363 = vld [vmem:[#allocation6 + $0xf8] sm:$0xff]
    %v364 = vld [vmem:[#allocation6 + $0x100] sm:$0xff]
    %v365 = vld [vmem:[#allocation6 + $0x108] sm:$0xff]
    %v366 = vld [vmem:[#allocation6 + $0x110] sm:$0xff]
    %v367 = vld [vmem:[#allocation6 + $0x118] sm:$0xff]
    %v368 = vld [vmem:[#allocation6 + $0x120] sm:$0xff]
    %v369 = vld [vmem:[#allocation6 + $0x128] sm:$0xff]
    %v370 = vld [vmem:[#allocation6 + $0x130] sm:$0xff]
    %v371 = vld [vmem:[#allocation6 + $0x138] sm:$0xff]
    %v372 = vld [vmem:[#allocation6 + $0x140] sm:$0xff]
    %v373 = vld [vmem:[#allocation6 + $0x148] sm:$0xff]
    %v374 = vld [vmem:[#allocation6 + $0x150] sm:$0xff]
    %v375 = vld [vmem:[#allocation6 + $0x158] sm:$0xff]
    %v376 = vld [vmem:[#allocation6 + $0x160] sm:$0xff]
    %v377 = vld [vmem:[#allocation6 + $0x168] sm:$0xff]
    %v378 = vld [vmem:[#allocation6 + $0x170] sm:$0xff]
    %v379 = vld [vmem:[#allocation6 + $0x178] sm:$0xff]
    %v380 = vld [vmem:[#allocation6 + $0x180] sm:$0xff]
    %v381 = vld [vmem:[#allocation6 + $0x188] sm:$0xff]
    %v382 = vld [vmem:[#allocation6 + $0x190] sm:$0xff]
    %v383 = vld [vmem:[#allocation6 + $0x198] sm:$0xff]
    %v384 = vld [vmem:[#allocation6 + $0x1a0] sm:$0xff]
    %v385 = vld [vmem:[#allocation6 + $0x1a8] sm:$0xff]
    %v386 = vld [vmem:[#allocation6 + $0x1b0] sm:$0xff]
    %v387 = vld [vmem:[#allocation6 + $0x1b8] sm:$0xff]
    %v388 = vld [vmem:[#allocation6 + $0x1c0] sm:$0xff]
    %v389 = vld [vmem:[#allocation6 + $0x1c8] sm:$0xff]
    %v390 = vld [vmem:[#allocation6 + $0x1d0] sm:$0xff]
    %v391 = vld [vmem:[#allocation6 + $0x1d8] sm:$0xff]
    %v392 = vld [vmem:[#allocation6 + $0x1e0] sm:$0xff]
    %v393 = vld [vmem:[#allocation6 + $0x1e8] sm:$0xff]
    %v394 = vld [vmem:[#allocation6 + $0x1f0] sm:$0xff]
    %v395 = vld [vmem:[#allocation6 + $0x1f8] sm:$0xff]
    %396 = vmatpush.msra.mxu0 %v392
    %397 = vmatpush.msra.mxu0 %v388
    %398 = vmatpush.msra.mxu0 %v384
    %399 = vmatpush.msra.mxu0 %v380
    %400 = vmatpush.msra.mxu0 %v376
    %401 = vmatpush.msra.mxu0 %v372
    %402 = vmatpush.msra.mxu0 %v368
    %403 = vmatpush.msra.mxu0 %v364
    %404 = vmatpush.msra.mxu0 %v360
    %405 = vmatpush.msra.mxu0 %v356
    %406 = vmatpush.msra.mxu0 %v352
    %407 = vmatpush.msra.mxu0 %v348
    %408 = vmatpush.msra.mxu0 %v344
    %409 = vmatpush.msra.mxu0 %v340
    %410 = vmatpush.msra.mxu0 %v336
    %411 = vmatpush.msra.mxu0 %v332
    %412 = vmatmul.f32.gmra.mxu0 %v321
    %v413 = vpop.f32.mrf.mxu0
    %v414 = vadd.f32 0.0, %v413
    %415 = vdwg.mxu0
    %416 = vmatpush.msra.mxu0 %v393
    %417 = vmatpush.msra.mxu0 %v389
    %418 = vmatpush.msra.mxu0 %v385
    %419 = vmatpush.msra.mxu0 %v381
    %420 = vmatpush.msra.mxu0 %v377
    %421 = vmatpush.msra.mxu0 %v373
    %422 = vmatpush.msra.mxu0 %v369
    %423 = vmatpush.msra.mxu0 %v365
    %424 = vmatpush.msra.mxu0 %v361
    %425 = vmatpush.msra.mxu0 %v357
    %426 = vmatpush.msra.mxu0 %v353
    %427 = vmatpush.msra.mxu0 %v349
    %428 = vmatpush.msra.mxu0 %v345
    %429 = vmatpush.msra.mxu0 %v341
    %430 = vmatpush.msra.mxu0 %v337
    %431 = vmatpush.msra.mxu0 %v333
    %432 = vmatmul.f32.gmra.mxu0 %v321
    %v433 = vpop.f32.mrf.mxu0
    %v434 = vadd.f32 0.0, %v433
    %435 = vdwg.mxu0
    %436 = vmatpush.msra.mxu0 %v394
    %437 = vmatpush.msra.mxu0 %v390
    %438 = vmatpush.msra.mxu0 %v386
    %439 = vmatpush.msra.mxu0 %v382
    %440 = vmatpush.msra.mxu0 %v378
    %441 = vmatpush.msra.mxu0 %v374
    %442 = vmatpush.msra.mxu0 %v370
    %443 = vmatpush.msra.mxu0 %v366
    %444 = vmatpush.msra.mxu0 %v362
    %445 = vmatpush.msra.mxu0 %v358
    %446 = vmatpush.msra.mxu0 %v354
    %447 = vmatpush.msra.mxu0 %v350
    %448 = vmatpush.msra.mxu0 %v346
    %449 = vmatpush.msra.mxu0 %v342
    %450 = vmatpush.msra.mxu0 %v338
    %451 = vmatpush.msra.mxu0 %v334
    %452 = vmatmul.f32.gmra.mxu0 %v321
    %v453 = vpop.f32.mrf.mxu0
    %v454 = vadd.f32 0.0, %v453
    %455 = vdwg.mxu0
    %456 = vmatpush.msra.mxu0 %v395
    %457 = vmatpush.msra.mxu0 %v391
    %458 = vmatpush.msra.mxu0 %v387
    %459 = vmatpush.msra.mxu0 %v383
    %460 = vmatpush.msra.mxu0 %v379
    %461 = vmatpush.msra.mxu0 %v375
    %462 = vmatpush.msra.mxu0 %v371
    %463 = vmatpush.msra.mxu0 %v367
    %464 = vmatpush.msra.mxu0 %v363
    %465 = vmatpush.msra.mxu0 %v359
    %466 = vmatpush.msra.mxu0 %v355
    %467 = vmatpush.msra.mxu0 %v351
    %468 = vmatpush.msra.mxu0 %v347
    %469 = vmatpush.msra.mxu0 %v343
    %470 = vmatpush.msra.mxu0 %v339
    %471 = vmatpush.msra.mxu0 %v335
    %472 = vmatmul.f32.gmra.mxu0 %v321
    %v473 = vpop.f32.mrf.mxu0
    %v474 = vadd.f32 0.0, %v473
    %475 = vdwg.mxu0
    %v476 = vadd.f32 %v328, %v414
    %v477 = vadd.f32 %v329, %v434
    %v478 = vadd.f32 %v330, %v454
    %v479 = vadd.f32 %v331, %v474
    %v480 = vxor.u32 %v476, 2147483648
    %v481 = vmul.f32 %v480, 1.442695
    %v482 = vpow.pop %v481
    %v483 = vadd.f32 %v482, 1.0
    %v484 = vrcp.pop %v483
    %v485 = vmul.f32 %v483, %v484
    %v486 = vsub.f32 1.0, %v485
    %v487 = vmul.f32 %v484, %v486
    %v488 = vadd.f32 %v484, %v487
    %vm489 = vweird.f32 %v483
    %vm490 = vweird.f32 %v484
    %vm491 = vmor %vm489, %vm490
    %v492 = vsel %vm491, %v484, %v488
    %v493 = vand.u32 2147483647, %v483
    %vm494 = vcmp.eq.f32.partialorder %v493, 8.507059e+37
    %v495 = vand.u32 %v483, 2147483648
    %v496 = vor.u32 1.1754944e-38, %v495
    %v497 = vsel %vm494, %v496, %v492
    %v498 = vmul.f32 1.0, %v497
    %v499 = vxor.u32 %v477, 2147483648
    %v500 = vmul.f32 %v499, 1.442695
    %v501 = vpow.pop %v500
    %v502 = vadd.f32 %v501, 1.0
    %v503 = vrcp.pop %v502
    %v504 = vmul.f32 %v502, %v503
    %v505 = vsub.f32 1.0, %v504
    %v506 = vmul.f32 %v503, %v505
    %v507 = vadd.f32 %v503, %v506
    %vm508 = vweird.f32 %v502
    %vm509 = vweird.f32 %v503
    %vm510 = vmor %vm508, %vm509
    %v511 = vsel %vm510, %v503, %v507
    %v512 = vand.u32 2147483647, %v502
    %vm513 = vcmp.eq.f32.partialorder %v512, 8.507059e+37
    %v514 = vand.u32 %v502, 2147483648
    %v515 = vor.u32 1.1754944e-38, %v514
    %v516 = vsel %vm513, %v515, %v511
    %v517 = vmul.f32 1.0, %v516
    %v518 = vtanh.pop %v478
    %v519 = vxor.u32 %v479, 2147483648
    %v520 = vmul.f32 %v519, 1.442695
    %v521 = vpow.pop %v520
    %v522 = vadd.f32 %v521, 1.0
    %v523 = vrcp.pop %v522
    %v524 = vmul.f32 %v522, %v523
    %v525 = vsub.f32 1.0, %v524
    %v526 = vmul.f32 %v523, %v525
    %v527 = vadd.f32 %v523, %v526
    %vm528 = vweird.f32 %v522
    %vm529 = vweird.f32 %v523
    %vm530 = vmor %vm528, %vm529
    %v531 = vsel %vm530, %v523, %v527
    %v532 = vand.u32 2147483647, %v522
    %vm533 = vcmp.eq.f32.partialorder %v532, 8.507059e+37
    %v534 = vand.u32 %v522, 2147483648
    %v535 = vor.u32 1.1754944e-38, %v534
    %v536 = vsel %vm533, %v535, %v531
    %v537 = vmul.f32 1.0, %v536
    %v538 = vmul.f32 %v517, %v322
    %v539 = vmul.f32 %v498, %v518
    %v540 = vadd.f32 %v538, %v539
    %v541 = vtanh.pop %v540
    %v542 = vmul.f32 %v537, %v541
    %v543 = vpack.c.bf16 %v542, %v542
    %544 = vst [vmem:[#allocation3] sm:$0xf] %v543
    %s545 = smul.u32 1, 4
    %s546 = smul.addr %s545, 4
    %s547 = scalar_lea.vmem [#allocation2], %s546
    %v548 = vld [vmem:[%s547] sm:$0xff]
    %v549 = vld [vmem:[%s547 + $0x8] sm:$0xff]
    %v550 = vunpack.c.l.bf16 %v548
    %v551 = vunpack.c.h.bf16 %v548
    %v552 = vunpack.c.l.bf16 %v549
    %v553 = vunpack.c.h.bf16 %v549
    %v554 = vld [vmem:[#allocation6] sm:$0xff]
    %v555 = vld [vmem:[#allocation6 + $0x8] sm:$0xff]
    %v556 = vld [vmem:[#allocation6 + $0x10] sm:$0xff]
    %v557 = vld [vmem:[#allocation6 + $0x18] sm:$0xff]
    %v558 = vld [vmem:[#allocation6 + $0x20] sm:$0xff]
    %v559 = vld [vmem:[#allocation6 + $0x28] sm:$0xff]
    %v560 = vld [vmem:[#allocation6 + $0x30] sm:$0xff]
    %v561 = vld [vmem:[#allocation6 + $0x38] sm:$0xff]
    %v562 = vld [vmem:[#allocation6 + $0x40] sm:$0xff]
    %v563 = vld [vmem:[#allocation6 + $0x48] sm:$0xff]
    %v564 = vld [vmem:[#allocation6 + $0x50] sm:$0xff]
    %v565 = vld [vmem:[#allocation6 + $0x58] sm:$0xff]
    %v566 = vld [vmem:[#allocation6 + $0x60] sm:$0xff]
    %v567 = vld [vmem:[#allocation6 + $0x68] sm:$0xff]
    %v568 = vld [vmem:[#allocation6 + $0x70] sm:$0xff]
    %v569 = vld [vmem:[#allocation6 + $0x78] sm:$0xff]
    %v570 = vld [vmem:[#allocation6 + $0x80] sm:$0xff]
    %v571 = vld [vmem:[#allocation6 + $0x88] sm:$0xff]
    %v572 = vld [vmem:[#allocation6 + $0x90] sm:$0xff]
    %v573 = vld [vmem:[#allocation6 + $0x98] sm:$0xff]
    %v574 = vld [vmem:[#allocation6 + $0xa0] sm:$0xff]
    %v575 = vld [vmem:[#allocation6 + $0xa8] sm:$0xff]
    %v576 = vld [vmem:[#allocation6 + $0xb0] sm:$0xff]
    %v577 = vld [vmem:[#allocation6 + $0xb8] sm:$0xff]
    %v578 = vld [vmem:[#allocation6 + $0xc0] sm:$0xff]
    %v579 = vld [vmem:[#allocation6 + $0xc8] sm:$0xff]
    %v580 = vld [vmem:[#allocation6 + $0xd0] sm:$0xff]
    %v581 = vld [vmem:[#allocation6 + $0xd8] sm:$0xff]
    %v582 = vld [vmem:[#allocation6 + $0xe0] sm:$0xff]
    %v583 = vld [vmem:[#allocation6 + $0xe8] sm:$0xff]
    %v584 = vld [vmem:[#allocation6 + $0xf0] sm:$0xff]
    %v585 = vld [vmem:[#allocation6 + $0xf8] sm:$0xff]
    %v586 = vld [vmem:[#allocation6 + $0x100] sm:$0xff]
    %v587 = vld [vmem:[#allocation6 + $0x108] sm:$0xff]
    %v588 = vld [vmem:[#allocation6 + $0x110] sm:$0xff]
    %v589 = vld [vmem:[#allocation6 + $0x118] sm:$0xff]
    %v590 = vld [vmem:[#allocation6 + $0x120] sm:$0xff]
    %v591 = vld [vmem:[#allocation6 + $0x128] sm:$0xff]
    %v592 = vld [vmem:[#allocation6 + $0x130] sm:$0xff]
    %v593 = vld [vmem:[#allocation6 + $0x138] sm:$0xff]
    %v594 = vld [vmem:[#allocation6 + $0x140] sm:$0xff]
    %v595 = vld [vmem:[#allocation6 + $0x148] sm:$0xff]
    %v596 = vld [vmem:[#allocation6 + $0x150] sm:$0xff]
    %v597 = vld [vmem:[#allocation6 + $0x158] sm:$0xff]
    %v598 = vld [vmem:[#allocation6 + $0x160] sm:$0xff]
    %v599 = vld [vmem:[#allocation6 + $0x168] sm:$0xff]
    %v600 = vld [vmem:[#allocation6 + $0x170] sm:$0xff]
    %v601 = vld [vmem:[#allocation6 + $0x178] sm:$0xff]
    %v602 = vld [vmem:[#allocation6 + $0x180] sm:$0xff]
    %v603 = vld [vmem:[#allocation6 + $0x188] sm:$0xff]
    %v604 = vld [vmem:[#allocation6 + $0x190] sm:$0xff]
    %v605 = vld [vmem:[#allocation6 + $0x198] sm:$0xff]
    %v606 = vld [vmem:[#allocation6 + $0x1a0] sm:$0xff]
    %v607 = vld [vmem:[#allocation6 + $0x1a8] sm:$0xff]
    %v608 = vld [vmem:[#allocation6 + $0x1b0] sm:$0xff]
    %v609 = vld [vmem:[#allocation6 + $0x1b8] sm:$0xff]
    %v610 = vld [vmem:[#allocation6 + $0x1c0] sm:$0xff]
    %v611 = vld [vmem:[#allocation6 + $0x1c8] sm:$0xff]
    %v612 = vld [vmem:[#allocation6 + $0x1d0] sm:$0xff]
    %v613 = vld [vmem:[#allocation6 + $0x1d8] sm:$0xff]
    %v614 = vld [vmem:[#allocation6 + $0x1e0] sm:$0xff]
    %v615 = vld [vmem:[#allocation6 + $0x1e8] sm:$0xff]
    %v616 = vld [vmem:[#allocation6 + $0x1f0] sm:$0xff]
    %v617 = vld [vmem:[#allocation6 + $0x1f8] sm:$0xff]
    %618 = vmatpush.msra.mxu0 %v614
    %619 = vmatpush.msra.mxu0 %v610
    %620 = vmatpush.msra.mxu0 %v606
    %621 = vmatpush.msra.mxu0 %v602
    %622 = vmatpush.msra.mxu0 %v598
    %623 = vmatpush.msra.mxu0 %v594
    %624 = vmatpush.msra.mxu0 %v590
    %625 = vmatpush.msra.mxu0 %v586
    %626 = vmatpush.msra.mxu0 %v582
    %627 = vmatpush.msra.mxu0 %v578
    %628 = vmatpush.msra.mxu0 %v574
    %629 = vmatpush.msra.mxu0 %v570
    %630 = vmatpush.msra.mxu0 %v566
    %631 = vmatpush.msra.mxu0 %v562
    %632 = vmatpush.msra.mxu0 %v558
    %633 = vmatpush.msra.mxu0 %v554
    %634 = vmatmul.f32.gmra.mxu0 %v542
    %v635 = vpop.f32.mrf.mxu0
    %v636 = vadd.f32 0.0, %v635
    %637 = vdwg.mxu0
    %638 = vmatpush.msra.mxu0 %v615
    %639 = vmatpush.msra.mxu0 %v611
    %640 = vmatpush.msra.mxu0 %v607
    %641 = vmatpush.msra.mxu0 %v603
    %642 = vmatpush.msra.mxu0 %v599
    %643 = vmatpush.msra.mxu0 %v595
    %644 = vmatpush.msra.mxu0 %v591
    %645 = vmatpush.msra.mxu0 %v587
    %646 = vmatpush.msra.mxu0 %v583
    %647 = vmatpush.msra.mxu0 %v579
    %648 = vmatpush.msra.mxu0 %v575
    %649 = vmatpush.msra.mxu0 %v571
    %650 = vmatpush.msra.mxu0 %v567
    %651 = vmatpush.msra.mxu0 %v563
    %652 = vmatpush.msra.mxu0 %v559
    %653 = vmatpush.msra.mxu0 %v555
    %654 = vmatmul.f32.gmra.mxu0 %v542
    %v655 = vpop.f32.mrf.mxu0
    %v656 = vadd.f32 0.0, %v655
    %657 = vdwg.mxu0
    %658 = vmatpush.msra.mxu0 %v616
    %659 = vmatpush.msra.mxu0 %v612
    %660 = vmatpush.msra.mxu0 %v608
    %661 = vmatpush.msra.mxu0 %v604
    %662 = vmatpush.msra.mxu0 %v600
    %663 = vmatpush.msra.mxu0 %v596
    %664 = vmatpush.msra.mxu0 %v592
    %665 = vmatpush.msra.mxu0 %v588
    %666 = vmatpush.msra.mxu0 %v584
    %667 = vmatpush.msra.mxu0 %v580
    %668 = vmatpush.msra.mxu0 %v576
    %669 = vmatpush.msra.mxu0 %v572
    %670 = vmatpush.msra.mxu0 %v568
    %671 = vmatpush.msra.mxu0 %v564
    %672 = vmatpush.msra.mxu0 %v560
    %673 = vmatpush.msra.mxu0 %v556
    %674 = vmatmul.f32.gmra.mxu0 %v542
    %v675 = vpop.f32.mrf.mxu0
    %v676 = vadd.f32 0.0, %v675
    %677 = vdwg.mxu0
    %678 = vmatpush.msra.mxu0 %v617
    %679 = vmatpush.msra.mxu0 %v613
    %680 = vmatpush.msra.mxu0 %v609
    %681 = vmatpush.msra.mxu0 %v605
    %682 = vmatpush.msra.mxu0 %v601
    %683 = vmatpush.msra.mxu0 %v597
    %684 = vmatpush.msra.mxu0 %v593
    %685 = vmatpush.msra.mxu0 %v589
    %686 = vmatpush.msra.mxu0 %v585
    %687 = vmatpush.msra.mxu0 %v581
    %688 = vmatpush.msra.mxu0 %v577
    %689 = vmatpush.msra.mxu0 %v573
    %690 = vmatpush.msra.mxu0 %v569
    %691 = vmatpush.msra.mxu0 %v565
    %692 = vmatpush.msra.mxu0 %v561
    %693 = vmatpush.msra.mxu0 %v557
    %694 = vmatmul.f32.gmra.mxu0 %v542
    %v695 = vpop.f32.mrf.mxu0
    %v696 = vadd.f32 0.0, %v695
    %697 = vdwg.mxu0
    %v698 = vadd.f32 %v550, %v636
    %v699 = vadd.f32 %v551, %v656
    %v700 = vadd.f32 %v552, %v676
    %v701 = vadd.f32 %v553, %v696
    %v702 = vxor.u32 %v698, 2147483648
    %v703 = vmul.f32 %v702, 1.442695
    %v704 = vpow.pop %v703
    %v705 = vadd.f32 %v704, 1.0
    %v706 = vrcp.pop %v705
    %v707 = vmul.f32 %v705, %v706
    %v708 = vsub.f32 1.0, %v707
    %v709 = vmul.f32 %v706, %v708
    %v710 = vadd.f32 %v706, %v709
    %vm711 = vweird.f32 %v705
    %vm712 = vweird.f32 %v706
    %vm713 = vmor %vm711, %vm712
    %v714 = vsel %vm713, %v706, %v710
    %v715 = vand.u32 2147483647, %v705
    %vm716 = vcmp.eq.f32.partialorder %v715, 8.507059e+37
    %v717 = vand.u32 %v705, 2147483648
    %v718 = vor.u32 1.1754944e-38, %v717
    %v719 = vsel %vm716, %v718, %v714
    %v720 = vmul.f32 1.0, %v719
    %v721 = vxor.u32 %v699, 2147483648
    %v722 = vmul.f32 %v721, 1.442695
    %v723 = vpow.pop %v722
    %v724 = vadd.f32 %v723, 1.0
    %v725 = vrcp.pop %v724
    %v726 = vmul.f32 %v724, %v725
    %v727 = vsub.f32 1.0, %v726
    %v728 = vmul.f32 %v725, %v727
    %v729 = vadd.f32 %v725, %v728
    %vm730 = vweird.f32 %v724
    %vm731 = vweird.f32 %v725
    %vm732 = vmor %vm730, %vm731
    %v733 = vsel %vm732, %v725, %v729
    %v734 = vand.u32 2147483647, %v724
    %vm735 = vcmp.eq.f32.partialorder %v734, 8.507059e+37
    %v736 = vand.u32 %v724, 2147483648
    %v737 = vor.u32 1.1754944e-38, %v736
    %v738 = vsel %vm735, %v737, %v733
    %v739 = vmul.f32 1.0, %v738
    %v740 = vtanh.pop %v700
    %v741 = vxor.u32 %v701, 2147483648
    %v742 = vmul.f32 %v741, 1.442695
    %v743 = vpow.pop %v742
    %v744 = vadd.f32 %v743, 1.0
    %v745 = vrcp.pop %v744
    %v746 = vmul.f32 %v744, %v745
    %v747 = vsub.f32 1.0, %v746
    %v748 = vmul.f32 %v745, %v747
    %v749 = vadd.f32 %v745, %v748
    %vm750 = vweird.f32 %v744
    %vm751 = vweird.f32 %v745
    %vm752 = vmor %vm750, %vm751
    %v753 = vsel %vm752, %v745, %v749
    %v754 = vand.u32 2147483647, %v744
    %vm755 = vcmp.eq.f32.partialorder %v754, 8.507059e+37
    %v756 = vand.u32 %v744, 2147483648
    %v757 = vor.u32 1.1754944e-38, %v756
    %v758 = vsel %vm755, %v757, %v753
    %v759 = vmul.f32 1.0, %v758
    %v760 = vmul.f32 %v739, %v540
    %v761 = vmul.f32 %v720, %v740
    %v762 = vadd.f32 %v760, %v761
    %v763 = vtanh.pop %v762
    %v764 = vmul.f32 %v759, %v763
    %v765 = vpack.c.bf16 %v764, %v764
    %s766 = scalar_lea.vmem [#allocation3], 4
    %767 = vst [vmem:[%s766] sm:$0xf] %v765
    %s768 = smul.u32 2, 4
    %s769 = smul.addr %s768, 4
    %s770 = scalar_lea.vmem [#allocation2], %s769
    %v771 = vld [vmem:[%s770] sm:$0xff]
    %v772 = vld [vmem:[%s770 + $0x8] sm:$0xff]
    %v773 = vunpack.c.l.bf16 %v771
    %v774 = vunpack.c.h.bf16 %v771
    %v775 = vunpack.c.l.bf16 %v772
    %v776 = vunpack.c.h.bf16 %v772
    %v777 = vld [vmem:[#allocation6] sm:$0xff]
    %v778 = vld [vmem:[#allocation6 + $0x8] sm:$0xff]
    %v779 = vld [vmem:[#allocation6 + $0x10] sm:$0xff]
    %v780 = vld [vmem:[#allocation6 + $0x18] sm:$0xff]
    %v781 = vld [vmem:[#allocation6 + $0x20] sm:$0xff]
    %v782 = vld [vmem:[#allocation6 + $0x28] sm:$0xff]
    %v783 = vld [vmem:[#allocation6 + $0x30] sm:$0xff]
    %v784 = vld [vmem:[#allocation6 + $0x38] sm:$0xff]
    %v785 = vld [vmem:[#allocation6 + $0x40] sm:$0xff]
    %v786 = vld [vmem:[#allocation6 + $0x48] sm:$0xff]
    %v787 = vld [vmem:[#allocation6 + $0x50] sm:$0xff]
    %v788 = vld [vmem:[#allocation6 + $0x58] sm:$0xff]
    %v789 = vld [vmem:[#allocation6 + $0x60] sm:$0xff]
    %v790 = vld [vmem:[#allocation6 + $0x68] sm:$0xff]
    %v791 = vld [vmem:[#allocation6 + $0x70] sm:$0xff]
    %v792 = vld [vmem:[#allocation6 + $0x78] sm:$0xff]
    %v793 = vld [vmem:[#allocation6 + $0x80] sm:$0xff]
    %v794 = vld [vmem:[#allocation6 + $0x88] sm:$0xff]
    %v795 = vld [vmem:[#allocation6 + $0x90] sm:$0xff]
    %v796 = vld [vmem:[#allocation6 + $0x98] sm:$0xff]
    %v797 = vld [vmem:[#allocation6 + $0xa0] sm:$0xff]
    %v798 = vld [vmem:[#allocation6 + $0xa8] sm:$0xff]
    %v799 = vld [vmem:[#allocation6 + $0xb0] sm:$0xff]
    %v800 = vld [vmem:[#allocation6 + $0xb8] sm:$0xff]
    %v801 = vld [vmem:[#allocation6 + $0xc0] sm:$0xff]
    %v802 = vld [vmem:[#allocation6 + $0xc8] sm:$0xff]
    %v803 = vld [vmem:[#allocation6 + $0xd0] sm:$0xff]
    %v804 = vld [vmem:[#allocation6 + $0xd8] sm:$0xff]
    %v805 = vld [vmem:[#allocation6 + $0xe0] sm:$0xff]
    %v806 = vld [vmem:[#allocation6 + $0xe8] sm:$0xff]
    %v807 = vld [vmem:[#allocation6 + $0xf0] sm:$0xff]
    %v808 = vld [vmem:[#allocation6 + $0xf8] sm:$0xff]
    %v809 = vld [vmem:[#allocation6 + $0x100] sm:$0xff]
    %v810 = vld [vmem:[#allocation6 + $0x108] sm:$0xff]
    %v811 = vld [vmem:[#allocation6 + $0x110] sm:$0xff]
    %v812 = vld [vmem:[#allocation6 + $0x118] sm:$0xff]
    %v813 = vld [vmem:[#allocation6 + $0x120] sm:$0xff]
    %v814 = vld [vmem:[#allocation6 + $0x128] sm:$0xff]
    %v815 = vld [vmem:[#allocation6 + $0x130] sm:$0xff]
    %v816 = vld [vmem:[#allocation6 + $0x138] sm:$0xff]
    %v817 = vld [vmem:[#allocation6 + $0x140] sm:$0xff]
    %v818 = vld [vmem:[#allocation6 + $0x148] sm:$0xff]
    %v819 = vld [vmem:[#allocation6 + $0x150] sm:$0xff]
    %v820 = vld [vmem:[#allocation6 + $0x158] sm:$0xff]
    %v821 = vld [vmem:[#allocation6 + $0x160] sm:$0xff]
    %v822 = vld [vmem:[#allocation6 + $0x168] sm:$0xff]
    %v823 = vld [vmem:[#allocation6 + $0x170] sm:$0xff]
    %v824 = vld [vmem:[#allocation6 + $0x178] sm:$0xff]
    %v825 = vld [vmem:[#allocation6 + $0x180] sm:$0xff]
    %v826 = vld [vmem:[#allocation6 + $0x188] sm:$0xff]
    %v827 = vld [vmem:[#allocation6 + $0x190] sm:$0xff]
    %v828 = vld [vmem:[#allocation6 + $0x198] sm:$0xff]
    %v829 = vld [vmem:[#allocation6 + $0x1a0] sm:$0xff]
    %v830 = vld [vmem:[#allocation6 + $0x1a8] sm:$0xff]
    %v831 = vld [vmem:[#allocation6 + $0x1b0] sm:$0xff]
    %v832 = vld [vmem:[#allocation6 + $0x1b8] sm:$0xff]
    %v833 = vld [vmem:[#allocation6 + $0x1c0] sm:$0xff]
    %v834 = vld [vmem:[#allocation6 + $0x1c8] sm:$0xff]
    %v835 = vld [vmem:[#allocation6 + $0x1d0] sm:$0xff]
    %v836 = vld [vmem:[#allocation6 + $0x1d8] sm:$0xff]
    %v837 = vld [vmem:[#allocation6 + $0x1e0] sm:$0xff]
    %v838 = vld [vmem:[#allocation6 + $0x1e8] sm:$0xff]
    %v839 = vld [vmem:[#allocation6 + $0x1f0] sm:$0xff]
    %v840 = vld [vmem:[#allocation6 + $0x1f8] sm:$0xff]
    %841 = vmatpush.msra.mxu0 %v837
    %842 = vmatpush.msra.mxu0 %v833
    %843 = vmatpush.msra.mxu0 %v829
    %844 = vmatpush.msra.mxu0 %v825
    %845 = vmatpush.msra.mxu0 %v821
    %846 = vmatpush.msra.mxu0 %v817
    %847 = vmatpush.msra.mxu0 %v813
    %848 = vmatpush.msra.mxu0 %v809
    %849 = vmatpush.msra.mxu0 %v805
    %850 = vmatpush.msra.mxu0 %v801
    %851 = vmatpush.msra.mxu0 %v797
    %852 = vmatpush.msra.mxu0 %v793
    %853 = vmatpush.msra.mxu0 %v789
    %854 = vmatpush.msra.mxu0 %v785
    %855 = vmatpush.msra.mxu0 %v781
    %856 = vmatpush.msra.mxu0 %v777
    %857 = vmatmul.f32.gmra.mxu0 %v764
    %v858 = vpop.f32.mrf.mxu0
    %v859 = vadd.f32 0.0, %v858
    %860 = vdwg.mxu0
    %861 = vmatpush.msra.mxu0 %v838
    %862 = vmatpush.msra.mxu0 %v834
    %863 = vmatpush.msra.mxu0 %v830
    %864 = vmatpush.msra.mxu0 %v826
    %865 = vmatpush.msra.mxu0 %v822
    %866 = vmatpush.msra.mxu0 %v818
    %867 = vmatpush.msra.mxu0 %v814
    %868 = vmatpush.msra.mxu0 %v810
    %869 = vmatpush.msra.mxu0 %v806
    %870 = vmatpush.msra.mxu0 %v802
    %871 = vmatpush.msra.mxu0 %v798
    %872 = vmatpush.msra.mxu0 %v794
    %873 = vmatpush.msra.mxu0 %v790
    %874 = vmatpush.msra.mxu0 %v786
    %875 = vmatpush.msra.mxu0 %v782
    %876 = vmatpush.msra.mxu0 %v778
    %877 = vmatmul.f32.gmra.mxu0 %v764
    %v878 = vpop.f32.mrf.mxu0
    %v879 = vadd.f32 0.0, %v878
    %880 = vdwg.mxu0
    %881 = vmatpush.msra.mxu0 %v839
    %882 = vmatpush.msra.mxu0 %v835
    %883 = vmatpush.msra.mxu0 %v831
    %884 = vmatpush.msra.mxu0 %v827
    %885 = vmatpush.msra.mxu0 %v823
    %886 = vmatpush.msra.mxu0 %v819
    %887 = vmatpush.msra.mxu0 %v815
    %888 = vmatpush.msra.mxu0 %v811
    %889 = vmatpush.msra.mxu0 %v807
    %890 = vmatpush.msra.mxu0 %v803
    %891 = vmatpush.msra.mxu0 %v799
    %892 = vmatpush.msra.mxu0 %v795
    %893 = vmatpush.msra.mxu0 %v791
    %894 = vmatpush.msra.mxu0 %v787
    %895 = vmatpush.msra.mxu0 %v783
    %896 = vmatpush.msra.mxu0 %v779
    %897 = vmatmul.f32.gmra.mxu0 %v764
    %v898 = vpop.f32.mrf.mxu0
    %v899 = vadd.f32 0.0, %v898
    %900 = vdwg.mxu0
    %901 = vmatpush.msra.mxu0 %v840
    %902 = vmatpush.msra.mxu0 %v836
    %903 = vmatpush.msra.mxu0 %v832
    %904 = vmatpush.msra.mxu0 %v828
    %905 = vmatpush.msra.mxu0 %v824
    %906 = vmatpush.msra.mxu0 %v820
    %907 = vmatpush.msra.mxu0 %v816
    %908 = vmatpush.msra.mxu0 %v812
    %909 = vmatpush.msra.mxu0 %v808
    %910 = vmatpush.msra.mxu0 %v804
    %911 = vmatpush.msra.mxu0 %v800
    %912 = vmatpush.msra.mxu0 %v796
    %913 = vmatpush.msra.mxu0 %v792
    %914 = vmatpush.msra.mxu0 %v788
    %915 = vmatpush.msra.mxu0 %v784
    %916 = vmatpush.msra.mxu0 %v780
    %917 = vmatmul.f32.gmra.mxu0 %v764
    %v918 = vpop.f32.mrf.mxu0
    %v919 = vadd.f32 0.0, %v918
    %920 = vdwg.mxu0
    %v921 = vadd.f32 %v773, %v859
    %v922 = vadd.f32 %v774, %v879
    %v923 = vadd.f32 %v775, %v899
    %v924 = vadd.f32 %v776, %v919
    %v925 = vxor.u32 %v921, 2147483648
    %v926 = vmul.f32 %v925, 1.442695
    %v927 = vpow.pop %v926
    %v928 = vadd.f32 %v927, 1.0
    %v929 = vrcp.pop %v928
    %v930 = vmul.f32 %v928, %v929
    %v931 = vsub.f32 1.0, %v930
    %v932 = vmul.f32 %v929, %v931
    %v933 = vadd.f32 %v929, %v932
    %vm934 = vweird.f32 %v928
    %vm935 = vweird.f32 %v929
    %vm936 = vmor %vm934, %vm935
    %v937 = vsel %vm936, %v929, %v933
    %v938 = vand.u32 2147483647, %v928
    %vm939 = vcmp.eq.f32.partialorder %v938, 8.507059e+37
    %v940 = vand.u32 %v928, 2147483648
    %v941 = vor.u32 1.1754944e-38, %v940
    %v942 = vsel %vm939, %v941, %v937
    %v943 = vmul.f32 1.0, %v942
    %v944 = vxor.u32 %v922, 2147483648
    %v945 = vmul.f32 %v944, 1.442695
    %v946 = vpow.pop %v945
    %v947 = vadd.f32 %v946, 1.0
    %v948 = vrcp.pop %v947
    %v949 = vmul.f32 %v947, %v948
    %v950 = vsub.f32 1.0, %v949
    %v951 = vmul.f32 %v948, %v950
    %v952 = vadd.f32 %v948, %v951
    %vm953 = vweird.f32 %v947
    %vm954 = vweird.f32 %v948
    %vm955 = vmor %vm953, %vm954
    %v956 = vsel %vm955, %v948, %v952
    %v957 = vand.u32 2147483647, %v947
    %vm958 = vcmp.eq.f32.partialorder %v957, 8.507059e+37
    %v959 = vand.u32 %v947, 2147483648
    %v960 = vor.u32 1.1754944e-38, %v959
    %v961 = vsel %vm958, %v960, %v956
    %v962 = vmul.f32 1.0, %v961
    %v963 = vtanh.pop %v923
    %v964 = vxor.u32 %v924, 2147483648
    %v965 = vmul.f32 %v964, 1.442695
    %v966 = vpow.pop %v965
    %v967 = vadd.f32 %v966, 1.0
    %v968 = vrcp.pop %v967
    %v969 = vmul.f32 %v967, %v968
    %v970 = vsub.f32 1.0, %v969
    %v971 = vmul.f32 %v968, %v970
    %v972 = vadd.f32 %v968, %v971
    %vm973 = vweird.f32 %v967
    %vm974 = vweird.f32 %v968
    %vm975 = vmor %vm973, %vm974
    %v976 = vsel %vm975, %v968, %v972
    %v977 = vand.u32 2147483647, %v967
    %vm978 = vcmp.eq.f32.partialorder %v977, 8.507059e+37
    %v979 = vand.u32 %v967, 2147483648
    %v980 = vor.u32 1.1754944e-38, %v979
    %v981 = vsel %vm978, %v980, %v976
    %v982 = vmul.f32 1.0, %v981
    %v983 = vmul.f32 %v962, %v762
    %v984 = vmul.f32 %v943, %v963
    %v985 = vadd.f32 %v983, %v984
    %v986 = vtanh.pop %v985
    %v987 = vmul.f32 %v982, %v986
    %v988 = vpack.c.bf16 %v987, %v987
    %s989 = scalar_lea.vmem [#allocation3], 8
    %990 = vst [vmem:[%s989] sm:$0xf] %v988
    %s991 = smul.u32 3, 4
    %s992 = smul.addr %s991, 4
    %s993 = scalar_lea.vmem [#allocation2], %s992
    %v994 = vld [vmem:[%s993] sm:$0xff]
    %v995 = vld [vmem:[%s993 + $0x8] sm:$0xff]
    %v996 = vunpack.c.l.bf16 %v994
    %v997 = vunpack.c.h.bf16 %v994
    %v998 = vunpack.c.l.bf16 %v995
    %v999 = vunpack.c.h.bf16 %v995
    %v1000 = vld [vmem:[#allocation6] sm:$0xff]
    %v1001 = vld [vmem:[#allocation6 + $0x8] sm:$0xff]
    %v1002 = vld [vmem:[#allocation6 + $0x10] sm:$0xff]
    %v1003 = vld [vmem:[#allocation6 + $0x18] sm:$0xff]
    %v1004 = vld [vmem:[#allocation6 + $0x20] sm:$0xff]
    %v1005 = vld [vmem:[#allocation6 + $0x28] sm:$0xff]
    %v1006 = vld [vmem:[#allocation6 + $0x30] sm:$0xff]
    %v1007 = vld [vmem:[#allocation6 + $0x38] sm:$0xff]
    %v1008 = vld [vmem:[#allocation6 + $0x40] sm:$0xff]
    %v1009 = vld [vmem:[#allocation6 + $0x48] sm:$0xff]
    %v1010 = vld [vmem:[#allocation6 + $0x50] sm:$0xff]
    %v1011 = vld [vmem:[#allocation6 + $0x58] sm:$0xff]
    %v1012 = vld [vmem:[#allocation6 + $0x60] sm:$0xff]
    %v1013 = vld [vmem:[#allocation6 + $0x68] sm:$0xff]
    %v1014 = vld [vmem:[#allocation6 + $0x70] sm:$0xff]
    %v1015 = vld [vmem:[#allocation6 + $0x78] sm:$0xff]
    %v1016 = vld [vmem:[#allocation6 + $0x80] sm:$0xff]
    %v1017 = vld [vmem:[#allocation6 + $0x88] sm:$0xff]
    %v1018 = vld [vmem:[#allocation6 + $0x90] sm:$0xff]
    %v1019 = vld [vmem:[#allocation6 + $0x98] sm:$0xff]
    %v1020 = vld [vmem:[#allocation6 + $0xa0] sm:$0xff]
    %v1021 = vld [vmem:[#allocation6 + $0xa8] sm:$0xff]
    %v1022 = vld [vmem:[#allocation6 + $0xb0] sm:$0xff]
    %v1023 = vld [vmem:[#allocation6 + $0xb8] sm:$0xff]
    %v1024 = vld [vmem:[#allocation6 + $0xc0] sm:$0xff]
    %v1025 = vld [vmem:[#allocation6 + $0xc8] sm:$0xff]
    %v1026 = vld [vmem:[#allocation6 + $0xd0] sm:$0xff]
    %v1027 = vld [vmem:[#allocation6 + $0xd8] sm:$0xff]
    %v1028 = vld [vmem:[#allocation6 + $0xe0] sm:$0xff]
    %v1029 = vld [vmem:[#allocation6 + $0xe8] sm:$0xff]
    %v1030 = vld [vmem:[#allocation6 + $0xf0] sm:$0xff]
    %v1031 = vld [vmem:[#allocation6 + $0xf8] sm:$0xff]
    %v1032 = vld [vmem:[#allocation6 + $0x100] sm:$0xff]
    %v1033 = vld [vmem:[#allocation6 + $0x108] sm:$0xff]
    %v1034 = vld [vmem:[#allocation6 + $0x110] sm:$0xff]
    %v1035 = vld [vmem:[#allocation6 + $0x118] sm:$0xff]
    %v1036 = vld [vmem:[#allocation6 + $0x120] sm:$0xff]
    %v1037 = vld [vmem:[#allocation6 + $0x128] sm:$0xff]
    %v1038 = vld [vmem:[#allocation6 + $0x130] sm:$0xff]
    %v1039 = vld [vmem:[#allocation6 + $0x138] sm:$0xff]
    %v1040 = vld [vmem:[#allocation6 + $0x140] sm:$0xff]
    %v1041 = vld [vmem:[#allocation6 + $0x148] sm:$0xff]
    %v1042 = vld [vmem:[#allocation6 + $0x150] sm:$0xff]
    %v1043 = vld [vmem:[#allocation6 + $0x158] sm:$0xff]
    %v1044 = vld [vmem:[#allocation6 + $0x160] sm:$0xff]
    %v1045 = vld [vmem:[#allocation6 + $0x168] sm:$0xff]
    %v1046 = vld [vmem:[#allocation6 + $0x170] sm:$0xff]
    %v1047 = vld [vmem:[#allocation6 + $0x178] sm:$0xff]
    %v1048 = vld [vmem:[#allocation6 + $0x180] sm:$0xff]
    %v1049 = vld [vmem:[#allocation6 + $0x188] sm:$0xff]
    %v1050 = vld [vmem:[#allocation6 + $0x190] sm:$0xff]
    %v1051 = vld [vmem:[#allocation6 + $0x198] sm:$0xff]
    %v1052 = vld [vmem:[#allocation6 + $0x1a0] sm:$0xff]
    %v1053 = vld [vmem:[#allocation6 + $0x1a8] sm:$0xff]
    %v1054 = vld [vmem:[#allocation6 + $0x1b0] sm:$0xff]
    %v1055 = vld [vmem:[#allocation6 + $0x1b8] sm:$0xff]
    %v1056 = vld [vmem:[#allocation6 + $0x1c0] sm:$0xff]
    %v1057 = vld [vmem:[#allocation6 + $0x1c8] sm:$0xff]
    %v1058 = vld [vmem:[#allocation6 + $0x1d0] sm:$0xff]
    %v1059 = vld [vmem:[#allocation6 + $0x1d8] sm:$0xff]
    %v1060 = vld [vmem:[#allocation6 + $0x1e0] sm:$0xff]
    %v1061 = vld [vmem:[#allocation6 + $0x1e8] sm:$0xff]
    %v1062 = vld [vmem:[#allocation6 + $0x1f0] sm:$0xff]
    %v1063 = vld [vmem:[#allocation6 + $0x1f8] sm:$0xff]
    %1064 = vmatpush.msra.mxu0 %v1060
    %1065 = vmatpush.msra.mxu0 %v1056
    %1066 = vmatpush.msra.mxu0 %v1052
    %1067 = vmatpush.msra.mxu0 %v1048
    %1068 = vmatpush.msra.mxu0 %v1044
    %1069 = vmatpush.msra.mxu0 %v1040
    %1070 = vmatpush.msra.mxu0 %v1036
    %1071 = vmatpush.msra.mxu0 %v1032
    %1072 = vmatpush.msra.mxu0 %v1028
    %1073 = vmatpush.msra.mxu0 %v1024
    %1074 = vmatpush.msra.mxu0 %v1020
    %1075 = vmatpush.msra.mxu0 %v1016
    %1076 = vmatpush.msra.mxu0 %v1012
    %1077 = vmatpush.msra.mxu0 %v1008
    %1078 = vmatpush.msra.mxu0 %v1004
    %1079 = vmatpush.msra.mxu0 %v1000
    %1080 = vmatmul.f32.gmra.mxu0 %v987
    %v1081 = vpop.f32.mrf.mxu0
    %v1082 = vadd.f32 0.0, %v1081
    %1083 = vdwg.mxu0
    %1084 = vmatpush.msra.mxu0 %v1061
    %1085 = vmatpush.msra.mxu0 %v1057
    %1086 = vmatpush.msra.mxu0 %v1053
    %1087 = vmatpush.msra.mxu0 %v1049
    %1088 = vmatpush.msra.mxu0 %v1045
    %1089 = vmatpush.msra.mxu0 %v1041
    %1090 = vmatpush.msra.mxu0 %v1037
    %1091 = vmatpush.msra.mxu0 %v1033
    %1092 = vmatpush.msra.mxu0 %v1029
    %1093 = vmatpush.msra.mxu0 %v1025
    %1094 = vmatpush.msra.mxu0 %v1021
    %1095 = vmatpush.msra.mxu0 %v1017
    %1096 = vmatpush.msra.mxu0 %v1013
    %1097 = vmatpush.msra.mxu0 %v1009
    %1098 = vmatpush.msra.mxu0 %v1005
    %1099 = vmatpush.msra.mxu0 %v1001
    %1100 = vmatmul.f32.gmra.mxu0 %v987
    %v1101 = vpop.f32.mrf.mxu0
    %v1102 = vadd.f32 0.0, %v1101
    %1103 = vdwg.mxu0
    %1104 = vmatpush.msra.mxu0 %v1062
    %1105 = vmatpush.msra.mxu0 %v1058
    %1106 = vmatpush.msra.mxu0 %v1054
    %1107 = vmatpush.msra.mxu0 %v1050
    %1108 = vmatpush.msra.mxu0 %v1046
    %1109 = vmatpush.msra.mxu0 %v1042
    %1110 = vmatpush.msra.mxu0 %v1038
    %1111 = vmatpush.msra.mxu0 %v1034
    %1112 = vmatpush.msra.mxu0 %v1030
    %1113 = vmatpush.msra.mxu0 %v1026
    %1114 = vmatpush.msra.mxu0 %v1022
    %1115 = vmatpush.msra.mxu0 %v1018
    %1116 = vmatpush.msra.mxu0 %v1014
    %1117 = vmatpush.msra.mxu0 %v1010
    %1118 = vmatpush.msra.mxu0 %v1006
    %1119 = vmatpush.msra.mxu0 %v1002
    %1120 = vmatmul.f32.gmra.mxu0 %v987
    %v1121 = vpop.f32.mrf.mxu0
    %v1122 = vadd.f32 0.0, %v1121
    %1123 = vdwg.mxu0
    %1124 = vmatpush.msra.mxu0 %v1063
    %1125 = vmatpush.msra.mxu0 %v1059
    %1126 = vmatpush.msra.mxu0 %v1055
    %1127 = vmatpush.msra.mxu0 %v1051
    %1128 = vmatpush.msra.mxu0 %v1047
    %1129 = vmatpush.msra.mxu0 %v1043
    %1130 = vmatpush.msra.mxu0 %v1039
    %1131 = vmatpush.msra.mxu0 %v1035
    %1132 = vmatpush.msra.mxu0 %v1031
    %1133 = vmatpush.msra.mxu0 %v1027
    %1134 = vmatpush.msra.mxu0 %v1023
    %1135 = vmatpush.msra.mxu0 %v1019
    %1136 = vmatpush.msra.mxu0 %v1015
    %1137 = vmatpush.msra.mxu0 %v1011
    %1138 = vmatpush.msra.mxu0 %v1007
    %1139 = vmatpush.msra.mxu0 %v1003
    %1140 = vmatmul.f32.gmra.mxu0 %v987
    %v1141 = vpop.f32.mrf.mxu0
    %v1142 = vadd.f32 0.0, %v1141
    %1143 = vdwg.mxu0
    %v1144 = vadd.f32 %v996, %v1082
    %v1145 = vadd.f32 %v997, %v1102
    %v1146 = vadd.f32 %v998, %v1122
    %v1147 = vadd.f32 %v999, %v1142
    %v1148 = vxor.u32 %v1144, 2147483648
    %v1149 = vmul.f32 %v1148, 1.442695
    %v1150 = vpow.pop %v1149
    %v1151 = vadd.f32 %v1150, 1.0
    %v1152 = vrcp.pop %v1151
    %v1153 = vmul.f32 %v1151, %v1152
    %v1154 = vsub.f32 1.0, %v1153
    %v1155 = vmul.f32 %v1152, %v1154
    %v1156 = vadd.f32 %v1152, %v1155
    %vm1157 = vweird.f32 %v1151
    %vm1158 = vweird.f32 %v1152
    %vm1159 = vmor %vm1157, %vm1158
    %v1160 = vsel %vm1159, %v1152, %v1156
    %v1161 = vand.u32 2147483647, %v1151
    %vm1162 = vcmp.eq.f32.partialorder %v1161, 8.507059e+37
    %v1163 = vand.u32 %v1151, 2147483648
    %v1164 = vor.u32 1.1754944e-38, %v1163
    %v1165 = vsel %vm1162, %v1164, %v1160
    %v1166 = vmul.f32 1.0, %v1165
    %v1167 = vxor.u32 %v1145, 2147483648
    %v1168 = vmul.f32 %v1167, 1.442695
    %v1169 = vpow.pop %v1168
    %v1170 = vadd.f32 %v1169, 1.0
    %v1171 = vrcp.pop %v1170
    %v1172 = vmul.f32 %v1170, %v1171
    %v1173 = vsub.f32 1.0, %v1172
    %v1174 = vmul.f32 %v1171, %v1173
    %v1175 = vadd.f32 %v1171, %v1174
    %vm1176 = vweird.f32 %v1170
    %vm1177 = vweird.f32 %v1171
    %vm1178 = vmor %vm1176, %vm1177
    %v1179 = vsel %vm1178, %v1171, %v1175
    %v1180 = vand.u32 2147483647, %v1170
    %vm1181 = vcmp.eq.f32.partialorder %v1180, 8.507059e+37
    %v1182 = vand.u32 %v1170, 2147483648
    %v1183 = vor.u32 1.1754944e-38, %v1182
    %v1184 = vsel %vm1181, %v1183, %v1179
    %v1185 = vmul.f32 1.0, %v1184
    %v1186 = vtanh.pop %v1146
    %v1187 = vxor.u32 %v1147, 2147483648
    %v1188 = vmul.f32 %v1187, 1.442695
    %v1189 = vpow.pop %v1188
    %v1190 = vadd.f32 %v1189, 1.0
    %v1191 = vrcp.pop %v1190
    %v1192 = vmul.f32 %v1190, %v1191
    %v1193 = vsub.f32 1.0, %v1192
    %v1194 = vmul.f32 %v1191, %v1193
    %v1195 = vadd.f32 %v1191, %v1194
    %vm1196 = vweird.f32 %v1190
    %vm1197 = vweird.f32 %v1191
    %vm1198 = vmor %vm1196, %vm1197
    %v1199 = vsel %vm1198, %v1191, %v1195
    %v1200 = vand.u32 2147483647, %v1190
    %vm1201 = vcmp.eq.f32.partialorder %v1200, 8.507059e+37
    %v1202 = vand.u32 %v1190, 2147483648
    %v1203 = vor.u32 1.1754944e-38, %v1202
    %v1204 = vsel %vm1201, %v1203, %v1199
    %v1205 = vmul.f32 1.0, %v1204
    %v1206 = vmul.f32 %v1185, %v985
    %v1207 = vmul.f32 %v1166, %v1186
    %v1208 = vadd.f32 %v1206, %v1207
    %v1209 = vtanh.pop %v1208
    %v1210 = vmul.f32 %v1205, %v1209
    %v1211 = vpack.c.bf16 %v1210, %v1210
    %s1212 = scalar_lea.vmem [#allocation3], 12
    %1213 = vst [vmem:[%s1212] sm:$0xf] %v1211
    %s1214 = smul.u32 4, 4
    %s1215 = smul.addr %s1214, 4
    %s1216 = scalar_lea.vmem [#allocation2], %s1215
    %v1217 = vld [vmem:[%s1216] sm:$0xff]
    %v1218 = vld [vmem:[%s1216 + $0x8] sm:$0xff]
    %v1219 = vunpack.c.l.bf16 %v1217
    %v1220 = vunpack.c.h.bf16 %v1217
    %v1221 = vunpack.c.l.bf16 %v1218
    %v1222 = vunpack.c.h.bf16 %v1218
    %v1223 = vld [vmem:[#allocation6] sm:$0xff]
    %v1224 = vld [vmem:[#allocation6 + $0x8] sm:$0xff]
    %v1225 = vld [vmem:[#allocation6 + $0x10] sm:$0xff]
    %v1226 = vld [vmem:[#allocation6 + $0x18] sm:$0xff]
    %v1227 = vld [vmem:[#allocation6 + $0x20] sm:$0xff]
    %v1228 = vld [vmem:[#allocation6 + $0x28] sm:$0xff]
    %v1229 = vld [vmem:[#allocation6 + $0x30] sm:$0xff]
    %v1230 = vld [vmem:[#allocation6 + $0x38] sm:$0xff]
    %v1231 = vld [vmem:[#allocation6 + $0x40] sm:$0xff]
    %v1232 = vld [vmem:[#allocation6 + $0x48] sm:$0xff]
    %v1233 = vld [vmem:[#allocation6 + $0x50] sm:$0xff]
    %v1234 = vld [vmem:[#allocation6 + $0x58] sm:$0xff]
    %v1235 = vld [vmem:[#allocation6 + $0x60] sm:$0xff]
    %v1236 = vld [vmem:[#allocation6 + $0x68] sm:$0xff]
    %v1237 = vld [vmem:[#allocation6 + $0x70] sm:$0xff]
    %v1238 = vld [vmem:[#allocation6 + $0x78] sm:$0xff]
    %v1239 = vld [vmem:[#allocation6 + $0x80] sm:$0xff]
    %v1240 = vld [vmem:[#allocation6 + $0x88] sm:$0xff]
    %v1241 = vld [vmem:[#allocation6 + $0x90] sm:$0xff]
    %v1242 = vld [vmem:[#allocation6 + $0x98] sm:$0xff]
    %v1243 = vld [vmem:[#allocation6 + $0xa0] sm:$0xff]
    %v1244 = vld [vmem:[#allocation6 + $0xa8] sm:$0xff]
    %v1245 = vld [vmem:[#allocation6 + $0xb0] sm:$0xff]
    %v1246 = vld [vmem:[#allocation6 + $0xb8] sm:$0xff]
    %v1247 = vld [vmem:[#allocation6 + $0xc0] sm:$0xff]
    %v1248 = vld [vmem:[#allocation6 + $0xc8] sm:$0xff]
    %v1249 = vld [vmem:[#allocation6 + $0xd0] sm:$0xff]
    %v1250 = vld [vmem:[#allocation6 + $0xd8] sm:$0xff]
    %v1251 = vld [vmem:[#allocation6 + $0xe0] sm:$0xff]
    %v1252 = vld [vmem:[#allocation6 + $0xe8] sm:$0xff]
    %v1253 = vld [vmem:[#allocation6 + $0xf0] sm:$0xff]
    %v1254 = vld [vmem:[#allocation6 + $0xf8] sm:$0xff]
    %v1255 = vld [vmem:[#allocation6 + $0x100] sm:$0xff]
    %v1256 = vld [vmem:[#allocation6 + $0x108] sm:$0xff]
    %v1257 = vld [vmem:[#allocation6 + $0x110] sm:$0xff]
    %v1258 = vld [vmem:[#allocation6 + $0x118] sm:$0xff]
    %v1259 = vld [vmem:[#allocation6 + $0x120] sm:$0xff]
    %v1260 = vld [vmem:[#allocation6 + $0x128] sm:$0xff]
    %v1261 = vld [vmem:[#allocation6 + $0x130] sm:$0xff]
    %v1262 = vld [vmem:[#allocation6 + $0x138] sm:$0xff]
    %v1263 = vld [vmem:[#allocation6 + $0x140] sm:$0xff]
    %v1264 = vld [vmem:[#allocation6 + $0x148] sm:$0xff]
    %v1265 = vld [vmem:[#allocation6 + $0x150] sm:$0xff]
    %v1266 = vld [vmem:[#allocation6 + $0x158] sm:$0xff]
    %v1267 = vld [vmem:[#allocation6 + $0x160] sm:$0xff]
    %v1268 = vld [vmem:[#allocation6 + $0x168] sm:$0xff]
    %v1269 = vld [vmem:[#allocation6 + $0x170] sm:$0xff]
    %v1270 = vld [vmem:[#allocation6 + $0x178] sm:$0xff]
    %v1271 = vld [vmem:[#allocation6 + $0x180] sm:$0xff]
    %v1272 = vld [vmem:[#allocation6 + $0x188] sm:$0xff]
    %v1273 = vld [vmem:[#allocation6 + $0x190] sm:$0xff]
    %v1274 = vld [vmem:[#allocation6 + $0x198] sm:$0xff]
    %v1275 = vld [vmem:[#allocation6 + $0x1a0] sm:$0xff]
    %v1276 = vld [vmem:[#allocation6 + $0x1a8] sm:$0xff]
    %v1277 = vld [vmem:[#allocation6 + $0x1b0] sm:$0xff]
    %v1278 = vld [vmem:[#allocation6 + $0x1b8] sm:$0xff]
    %v1279 = vld [vmem:[#allocation6 + $0x1c0] sm:$0xff]
    %v1280 = vld [vmem:[#allocation6 + $0x1c8] sm:$0xff]
    %v1281 = vld [vmem:[#allocation6 + $0x1d0] sm:$0xff]
    %v1282 = vld [vmem:[#allocation6 + $0x1d8] sm:$0xff]
    %v1283 = vld [vmem:[#allocation6 + $0x1e0] sm:$0xff]
    %v1284 = vld [vmem:[#allocation6 + $0x1e8] sm:$0xff]
    %v1285 = vld [vmem:[#allocation6 + $0x1f0] sm:$0xff]
    %v1286 = vld [vmem:[#allocation6 + $0x1f8] sm:$0xff]
    %1287 = vmatpush.msra.mxu0 %v1283
    %1288 = vmatpush.msra.mxu0 %v1279
    %1289 = vmatpush.msra.mxu0 %v1275
    %1290 = vmatpush.msra.mxu0 %v1271
    %1291 = vmatpush.msra.mxu0 %v1267
    %1292 = vmatpush.msra.mxu0 %v1263
    %1293 = vmatpush.msra.mxu0 %v1259
    %1294 = vmatpush.msra.mxu0 %v1255
    %1295 = vmatpush.msra.mxu0 %v1251
    %1296 = vmatpush.msra.mxu0 %v1247
    %1297 = vmatpush.msra.mxu0 %v1243
    %1298 = vmatpush.msra.mxu0 %v1239
    %1299 = vmatpush.msra.mxu0 %v1235
    %1300 = vmatpush.msra.mxu0 %v1231
    %1301 = vmatpush.msra.mxu0 %v1227
    %1302 = vmatpush.msra.mxu0 %v1223
    %1303 = vmatmul.f32.gmra.mxu0 %v1210
    %v1304 = vpop.f32.mrf.mxu0
    %v1305 = vadd.f32 0.0, %v1304
    %1306 = vdwg.mxu0
    %1307 = vmatpush.msra.mxu0 %v1284
    %1308 = vmatpush.msra.mxu0 %v1280
    %1309 = vmatpush.msra.mxu0 %v1276
    %1310 = vmatpush.msra.mxu0 %v1272
    %1311 = vmatpush.msra.mxu0 %v1268
    %1312 = vmatpush.msra.mxu0 %v1264
    %1313 = vmatpush.msra.mxu0 %v1260
    %1314 = vmatpush.msra.mxu0 %v1256
    %1315 = vmatpush.msra.mxu0 %v1252
    %1316 = vmatpush.msra.mxu0 %v1248
    %1317 = vmatpush.msra.mxu0 %v1244
    %1318 = vmatpush.msra.mxu0 %v1240
    %1319 = vmatpush.msra.mxu0 %v1236
    %1320 = vmatpush.msra.mxu0 %v1232
    %1321 = vmatpush.msra.mxu0 %v1228
    %1322 = vmatpush.msra.mxu0 %v1224
    %1323 = vmatmul.f32.gmra.mxu0 %v1210
    %v1324 = vpop.f32.mrf.mxu0
    %v1325 = vadd.f32 0.0, %v1324
    %1326 = vdwg.mxu0
    %1327 = vmatpush.msra.mxu0 %v1285
    %1328 = vmatpush.msra.mxu0 %v1281
    %1329 = vmatpush.msra.mxu0 %v1277
    %1330 = vmatpush.msra.mxu0 %v1273
    %1331 = vmatpush.msra.mxu0 %v1269
    %1332 = vmatpush.msra.mxu0 %v1265
    %1333 = vmatpush.msra.mxu0 %v1261
    %1334 = vmatpush.msra.mxu0 %v1257
    %1335 = vmatpush.msra.mxu0 %v1253
    %1336 = vmatpush.msra.mxu0 %v1249
    %1337 = vmatpush.msra.mxu0 %v1245
    %1338 = vmatpush.msra.mxu0 %v1241
    %1339 = vmatpush.msra.mxu0 %v1237
    %1340 = vmatpush.msra.mxu0 %v1233
    %1341 = vmatpush.msra.mxu0 %v1229
    %1342 = vmatpush.msra.mxu0 %v1225
    %1343 = vmatmul.f32.gmra.mxu0 %v1210
    %v1344 = vpop.f32.mrf.mxu0
    %v1345 = vadd.f32 0.0, %v1344
    %1346 = vdwg.mxu0
    %1347 = vmatpush.msra.mxu0 %v1286
    %1348 = vmatpush.msra.mxu0 %v1282
    %1349 = vmatpush.msra.mxu0 %v1278
    %1350 = vmatpush.msra.mxu0 %v1274
    %1351 = vmatpush.msra.mxu0 %v1270
    %1352 = vmatpush.msra.mxu0 %v1266
    %1353 = vmatpush.msra.mxu0 %v1262
    %1354 = vmatpush.msra.mxu0 %v1258
    %1355 = vmatpush.msra.mxu0 %v1254
    %1356 = vmatpush.msra.mxu0 %v1250
    %1357 = vmatpush.msra.mxu0 %v1246
    %1358 = vmatpush.msra.mxu0 %v1242
    %1359 = vmatpush.msra.mxu0 %v1238
    %1360 = vmatpush.msra.mxu0 %v1234
    %1361 = vmatpush.msra.mxu0 %v1230
    %1362 = vmatpush.msra.mxu0 %v1226
    %1363 = vmatmul.f32.gmra.mxu0 %v1210
    %v1364 = vpop.f32.mrf.mxu0
    %v1365 = vadd.f32 0.0, %v1364
    %1366 = vdwg.mxu0
    %v1367 = vadd.f32 %v1219, %v1305
    %v1368 = vadd.f32 %v1220, %v1325
    %v1369 = vadd.f32 %v1221, %v1345
    %v1370 = vadd.f32 %v1222, %v1365
    %v1371 = vxor.u32 %v1367, 2147483648
    %v1372 = vmul.f32 %v1371, 1.442695
    %v1373 = vpow.pop %v1372
    %v1374 = vadd.f32 %v1373, 1.0
    %v1375 = vrcp.pop %v1374
    %v1376 = vmul.f32 %v1374, %v1375
    %v1377 = vsub.f32 1.0, %v1376
    %v1378 = vmul.f32 %v1375, %v1377
    %v1379 = vadd.f32 %v1375, %v1378
    %vm1380 = vweird.f32 %v1374
    %vm1381 = vweird.f32 %v1375
    %vm1382 = vmor %vm1380, %vm1381
    %v1383 = vsel %vm1382, %v1375, %v1379
    %v1384 = vand.u32 2147483647, %v1374
    %vm1385 = vcmp.eq.f32.partialorder %v1384, 8.507059e+37
    %v1386 = vand.u32 %v1374, 2147483648
    %v1387 = vor.u32 1.1754944e-38, %v1386
    %v1388 = vsel %vm1385, %v1387, %v1383
    %v1389 = vmul.f32 1.0, %v1388
    %v1390 = vxor.u32 %v1368, 2147483648
    %v1391 = vmul.f32 %v1390, 1.442695
    %v1392 = vpow.pop %v1391
    %v1393 = vadd.f32 %v1392, 1.0
    %v1394 = vrcp.pop %v1393
    %v1395 = vmul.f32 %v1393, %v1394
    %v1396 = vsub.f32 1.0, %v1395
    %v1397 = vmul.f32 %v1394, %v1396
    %v1398 = vadd.f32 %v1394, %v1397
    %vm1399 = vweird.f32 %v1393
    %vm1400 = vweird.f32 %v1394
    %vm1401 = vmor %vm1399, %vm1400
    %v1402 = vsel %vm1401, %v1394, %v1398
    %v1403 = vand.u32 2147483647, %v1393
    %vm1404 = vcmp.eq.f32.partialorder %v1403, 8.507059e+37
    %v1405 = vand.u32 %v1393, 2147483648
    %v1406 = vor.u32 1.1754944e-38, %v1405
    %v1407 = vsel %vm1404, %v1406, %v1402
    %v1408 = vmul.f32 1.0, %v1407
    %v1409 = vtanh.pop %v1369
    %v1410 = vxor.u32 %v1370, 2147483648
    %v1411 = vmul.f32 %v1410, 1.442695
    %v1412 = vpow.pop %v1411
    %v1413 = vadd.f32 %v1412, 1.0
    %v1414 = vrcp.pop %v1413
    %v1415 = vmul.f32 %v1413, %v1414
    %v1416 = vsub.f32 1.0, %v1415
    %v1417 = vmul.f32 %v1414, %v1416
    %v1418 = vadd.f32 %v1414, %v1417
    %vm1419 = vweird.f32 %v1413
    %vm1420 = vweird.f32 %v1414
    %vm1421 = vmor %vm1419, %vm1420
    %v1422 = vsel %vm1421, %v1414, %v1418
    %v1423 = vand.u32 2147483647, %v1413
    %vm1424 = vcmp.eq.f32.partialorder %v1423, 8.507059e+37
    %v1425 = vand.u32 %v1413, 2147483648
    %v1426 = vor.u32 1.1754944e-38, %v1425
    %v1427 = vsel %vm1424, %v1426, %v1422
    %v1428 = vmul.f32 1.0, %v1427
    %v1429 = vmul.f32 %v1408, %v1208
    %v1430 = vmul.f32 %v1389, %v1409
    %v1431 = vadd.f32 %v1429, %v1430
    %v1432 = vtanh.pop %v1431
    %v1433 = vmul.f32 %v1428, %v1432
    %v1434 = vpack.c.bf16 %v1433, %v1433
    %s1435 = scalar_lea.vmem [#allocation3], 16
    %1436 = vst [vmem:[%s1435] sm:$0xf] %v1434
    %s1437 = smul.u32 5, 4
    %s1438 = smul.addr %s1437, 4
    %s1439 = scalar_lea.vmem [#allocation2], %s1438
    %v1440 = vld [vmem:[%s1439] sm:$0xff]
    %v1441 = vld [vmem:[%s1439 + $0x8] sm:$0xff]
    %v1442 = vunpack.c.l.bf16 %v1440
    %v1443 = vunpack.c.h.bf16 %v1440
    %v1444 = vunpack.c.l.bf16 %v1441
    %v1445 = vunpack.c.h.bf16 %v1441
    %v1446 = vld [vmem:[#allocation6] sm:$0xff]
    %v1447 = vld [vmem:[#allocation6 + $0x8] sm:$0xff]
    %v1448 = vld [vmem:[#allocation6 + $0x10] sm:$0xff]
    %v1449 = vld [vmem:[#allocation6 + $0x18] sm:$0xff]
    %v1450 = vld [vmem:[#allocation6 + $0x20] sm:$0xff]
    %v1451 = vld [vmem:[#allocation6 + $0x28] sm:$0xff]
    %v1452 = vld [vmem:[#allocation6 + $0x30] sm:$0xff]
    %v1453 = vld [vmem:[#allocation6 + $0x38] sm:$0xff]
    %v1454 = vld [vmem:[#allocation6 + $0x40] sm:$0xff]
    %v1455 = vld [vmem:[#allocation6 + $0x48] sm:$0xff]
    %v1456 = vld [vmem:[#allocation6 + $0x50] sm:$0xff]
    %v1457 = vld [vmem:[#allocation6 + $0x58] sm:$0xff]
    %v1458 = vld [vmem:[#allocation6 + $0x60] sm:$0xff]
    %v1459 = vld [vmem:[#allocation6 + $0x68] sm:$0xff]
    %v1460 = vld [vmem:[#allocation6 + $0x70] sm:$0xff]
    %v1461 = vld [vmem:[#allocation6 + $0x78] sm:$0xff]
    %v1462 = vld [vmem:[#allocation6 + $0x80] sm:$0xff]
    %v1463 = vld [vmem:[#allocation6 + $0x88] sm:$0xff]
    %v1464 = vld [vmem:[#allocation6 + $0x90] sm:$0xff]
    %v1465 = vld [vmem:[#allocation6 + $0x98] sm:$0xff]
    %v1466 = vld [vmem:[#allocation6 + $0xa0] sm:$0xff]
    %v1467 = vld [vmem:[#allocation6 + $0xa8] sm:$0xff]
    %v1468 = vld [vmem:[#allocation6 + $0xb0] sm:$0xff]
    %v1469 = vld [vmem:[#allocation6 + $0xb8] sm:$0xff]
    %v1470 = vld [vmem:[#allocation6 + $0xc0] sm:$0xff]
    %v1471 = vld [vmem:[#allocation6 + $0xc8] sm:$0xff]
    %v1472 = vld [vmem:[#allocation6 + $0xd0] sm:$0xff]
    %v1473 = vld [vmem:[#allocation6 + $0xd8] sm:$0xff]
    %v1474 = vld [vmem:[#allocation6 + $0xe0] sm:$0xff]
    %v1475 = vld [vmem:[#allocation6 + $0xe8] sm:$0xff]
    %v1476 = vld [vmem:[#allocation6 + $0xf0] sm:$0xff]
    %v1477 = vld [vmem:[#allocation6 + $0xf8] sm:$0xff]
    %v1478 = vld [vmem:[#allocation6 + $0x100] sm:$0xff]
    %v1479 = vld [vmem:[#allocation6 + $0x108] sm:$0xff]
    %v1480 = vld [vmem:[#allocation6 + $0x110] sm:$0xff]
    %v1481 = vld [vmem:[#allocation6 + $0x118] sm:$0xff]
    %v1482 = vld [vmem:[#allocation6 + $0x120] sm:$0xff]
    %v1483 = vld [vmem:[#allocation6 + $0x128] sm:$0xff]
    %v1484 = vld [vmem:[#allocation6 + $0x130] sm:$0xff]
    %v1485 = vld [vmem:[#allocation6 + $0x138] sm:$0xff]
    %v1486 = vld [vmem:[#allocation6 + $0x140] sm:$0xff]
    %v1487 = vld [vmem:[#allocation6 + $0x148] sm:$0xff]
    %v1488 = vld [vmem:[#allocation6 + $0x150] sm:$0xff]
    %v1489 = vld [vmem:[#allocation6 + $0x158] sm:$0xff]
    %v1490 = vld [vmem:[#allocation6 + $0x160] sm:$0xff]
    %v1491 = vld [vmem:[#allocation6 + $0x168] sm:$0xff]
    %v1492 = vld [vmem:[#allocation6 + $0x170] sm:$0xff]
    %v1493 = vld [vmem:[#allocation6 + $0x178] sm:$0xff]
    %v1494 = vld [vmem:[#allocation6 + $0x180] sm:$0xff]
    %v1495 = vld [vmem:[#allocation6 + $0x188] sm:$0xff]
    %v1496 = vld [vmem:[#allocation6 + $0x190] sm:$0xff]
    %v1497 = vld [vmem:[#allocation6 + $0x198] sm:$0xff]
    %v1498 = vld [vmem:[#allocation6 + $0x1a0] sm:$0xff]
    %v1499 = vld [vmem:[#allocation6 + $0x1a8] sm:$0xff]
    %v1500 = vld [vmem:[#allocation6 + $0x1b0] sm:$0xff]
    %v1501 = vld [vmem:[#allocation6 + $0x1b8] sm:$0xff]
    %v1502 = vld [vmem:[#allocation6 + $0x1c0] sm:$0xff]
    %v1503 = vld [vmem:[#allocation6 + $0x1c8] sm:$0xff]
    %v1504 = vld [vmem:[#allocation6 + $0x1d0] sm:$0xff]
    %v1505 = vld [vmem:[#allocation6 + $0x1d8] sm:$0xff]
    %v1506 = vld [vmem:[#allocation6 + $0x1e0] sm:$0xff]
    %v1507 = vld [vmem:[#allocation6 + $0x1e8] sm:$0xff]
    %v1508 = vld [vmem:[#allocation6 + $0x1f0] sm:$0xff]
    %v1509 = vld [vmem:[#allocation6 + $0x1f8] sm:$0xff]
    %1510 = vmatpush.msra.mxu0 %v1506
    %1511 = vmatpush.msra.mxu0 %v1502
    %1512 = vmatpush.msra.mxu0 %v1498
    %1513 = vmatpush.msra.mxu0 %v1494
    %1514 = vmatpush.msra.mxu0 %v1490
    %1515 = vmatpush.msra.mxu0 %v1486
    %1516 = vmatpush.msra.mxu0 %v1482
    %1517 = vmatpush.msra.mxu0 %v1478
    %1518 = vmatpush.msra.mxu0 %v1474
    %1519 = vmatpush.msra.mxu0 %v1470
    %1520 = vmatpush.msra.mxu0 %v1466
    %1521 = vmatpush.msra.mxu0 %v1462
    %1522 = vmatpush.msra.mxu0 %v1458
    %1523 = vmatpush.msra.mxu0 %v1454
    %1524 = vmatpush.msra.mxu0 %v1450
    %1525 = vmatpush.msra.mxu0 %v1446
    %1526 = vmatmul.f32.gmra.mxu0 %v1433
    %v1527 = vpop.f32.mrf.mxu0
    %v1528 = vadd.f32 0.0, %v1527
    %1529 = vdwg.mxu0
    %1530 = vmatpush.msra.mxu0 %v1507
    %1531 = vmatpush.msra.mxu0 %v1503
    %1532 = vmatpush.msra.mxu0 %v1499
    %1533 = vmatpush.msra.mxu0 %v1495
    %1534 = vmatpush.msra.mxu0 %v1491
    %1535 = vmatpush.msra.mxu0 %v1487
    %1536 = vmatpush.msra.mxu0 %v1483
    %1537 = vmatpush.msra.mxu0 %v1479
    %1538 = vmatpush.msra.mxu0 %v1475
    %1539 = vmatpush.msra.mxu0 %v1471
    %1540 = vmatpush.msra.mxu0 %v1467
    %1541 = vmatpush.msra.mxu0 %v1463
    %1542 = vmatpush.msra.mxu0 %v1459
    %1543 = vmatpush.msra.mxu0 %v1455
    %1544 = vmatpush.msra.mxu0 %v1451
    %1545 = vmatpush.msra.mxu0 %v1447
    %1546 = vmatmul.f32.gmra.mxu0 %v1433
    %v1547 = vpop.f32.mrf.mxu0
    %v1548 = vadd.f32 0.0, %v1547
    %1549 = vdwg.mxu0
    %1550 = vmatpush.msra.mxu0 %v1508
    %1551 = vmatpush.msra.mxu0 %v1504
    %1552 = vmatpush.msra.mxu0 %v1500
    %1553 = vmatpush.msra.mxu0 %v1496
    %1554 = vmatpush.msra.mxu0 %v1492
    %1555 = vmatpush.msra.mxu0 %v1488
    %1556 = vmatpush.msra.mxu0 %v1484
    %1557 = vmatpush.msra.mxu0 %v1480
    %1558 = vmatpush.msra.mxu0 %v1476
    %1559 = vmatpush.msra.mxu0 %v1472
    %1560 = vmatpush.msra.mxu0 %v1468
    %1561 = vmatpush.msra.mxu0 %v1464
    %1562 = vmatpush.msra.mxu0 %v1460
    %1563 = vmatpush.msra.mxu0 %v1456
    %1564 = vmatpush.msra.mxu0 %v1452
    %1565 = vmatpush.msra.mxu0 %v1448
    %1566 = vmatmul.f32.gmra.mxu0 %v1433
    %v1567 = vpop.f32.mrf.mxu0
    %v1568 = vadd.f32 0.0, %v1567
    %1569 = vdwg.mxu0
    %1570 = vmatpush.msra.mxu0 %v1509
    %1571 = vmatpush.msra.mxu0 %v1505
    %1572 = vmatpush.msra.mxu0 %v1501
    %1573 = vmatpush.msra.mxu0 %v1497
    %1574 = vmatpush.msra.mxu0 %v1493
    %1575 = vmatpush.msra.mxu0 %v1489
    %1576 = vmatpush.msra.mxu0 %v1485
    %1577 = vmatpush.msra.mxu0 %v1481
    %1578 = vmatpush.msra.mxu0 %v1477
    %1579 = vmatpush.msra.mxu0 %v1473
    %1580 = vmatpush.msra.mxu0 %v1469
    %1581 = vmatpush.msra.mxu0 %v1465
    %1582 = vmatpush.msra.mxu0 %v1461
    %1583 = vmatpush.msra.mxu0 %v1457
    %1584 = vmatpush.msra.mxu0 %v1453
    %1585 = vmatpush.msra.mxu0 %v1449
    %1586 = vmatmul.f32.gmra.mxu0 %v1433
    %v1587 = vpop.f32.mrf.mxu0
    %v1588 = vadd.f32 0.0, %v1587
    %1589 = vdwg.mxu0
    %v1590 = vadd.f32 %v1442, %v1528
    %v1591 = vadd.f32 %v1443, %v1548
    %v1592 = vadd.f32 %v1444, %v1568
    %v1593 = vadd.f32 %v1445, %v1588
    %v1594 = vxor.u32 %v1590, 2147483648
    %v1595 = vmul.f32 %v1594, 1.442695
    %v1596 = vpow.pop %v1595
    %v1597 = vadd.f32 %v1596, 1.0
    %v1598 = vrcp.pop %v1597
    %v1599 = vmul.f32 %v1597, %v1598
    %v1600 = vsub.f32 1.0, %v1599
    %v1601 = vmul.f32 %v1598, %v1600
    %v1602 = vadd.f32 %v1598, %v1601
    %vm1603 = vweird.f32 %v1597
    %vm1604 = vweird.f32 %v1598
    %vm1605 = vmor %vm1603, %vm1604
    %v1606 = vsel %vm1605, %v1598, %v1602
    %v1607 = vand.u32 2147483647, %v1597
    %vm1608 = vcmp.eq.f32.partialorder %v1607, 8.507059e+37
    %v1609 = vand.u32 %v1597, 2147483648
    %v1610 = vor.u32 1.1754944e-38, %v1609
    %v1611 = vsel %vm1608, %v1610, %v1606
    %v1612 = vmul.f32 1.0, %v1611
    %v1613 = vxor.u32 %v1591, 2147483648
    %v1614 = vmul.f32 %v1613, 1.442695
    %v1615 = vpow.pop %v1614
    %v1616 = vadd.f32 %v1615, 1.0
    %v1617 = vrcp.pop %v1616
    %v1618 = vmul.f32 %v1616, %v1617
    %v1619 = vsub.f32 1.0, %v1618
    %v1620 = vmul.f32 %v1617, %v1619
    %v1621 = vadd.f32 %v1617, %v1620
    %vm1622 = vweird.f32 %v1616
    %vm1623 = vweird.f32 %v1617
    %vm1624 = vmor %vm1622, %vm1623
    %v1625 = vsel %vm1624, %v1617, %v1621
    %v1626 = vand.u32 2147483647, %v1616
    %vm1627 = vcmp.eq.f32.partialorder %v1626, 8.507059e+37
    %v1628 = vand.u32 %v1616, 2147483648
    %v1629 = vor.u32 1.1754944e-38, %v1628
    %v1630 = vsel %vm1627, %v1629, %v1625
    %v1631 = vmul.f32 1.0, %v1630
    %v1632 = vtanh.pop %v1592
    %v1633 = vxor.u32 %v1593, 2147483648
    %v1634 = vmul.f32 %v1633, 1.442695
    %v1635 = vpow.pop %v1634
    %v1636 = vadd.f32 %v1635, 1.0
    %v1637 = vrcp.pop %v1636
    %v1638 = vmul.f32 %v1636, %v1637
    %v1639 = vsub.f32 1.0, %v1638
    %v1640 = vmul.f32 %v1637, %v1639
    %v1641 = vadd.f32 %v1637, %v1640
    %vm1642 = vweird.f32 %v1636
    %vm1643 = vweird.f32 %v1637
    %vm1644 = vmor %vm1642, %vm1643
    %v1645 = vsel %vm1644, %v1637, %v1641
    %v1646 = vand.u32 2147483647, %v1636
    %vm1647 = vcmp.eq.f32.partialorder %v1646, 8.507059e+37
    %v1648 = vand.u32 %v1636, 2147483648
    %v1649 = vor.u32 1.1754944e-38, %v1648
    %v1650 = vsel %vm1647, %v1649, %v1645
    %v1651 = vmul.f32 1.0, %v1650
    %v1652 = vmul.f32 %v1631, %v1431
    %v1653 = vmul.f32 %v1612, %v1632
    %v1654 = vadd.f32 %v1652, %v1653
    %v1655 = vtanh.pop %v1654
    %v1656 = vmul.f32 %v1651, %v1655
    %v1657 = vpack.c.bf16 %v1656, %v1656
    %s1658 = scalar_lea.vmem [#allocation3], 20
    %1659 = vst [vmem:[%s1658] sm:$0xf] %v1657
    %s1660 = smul.u32 6, 4
    %s1661 = smul.addr %s1660, 4
    %s1662 = scalar_lea.vmem [#allocation2], %s1661
    %v1663 = vld [vmem:[%s1662] sm:$0xff]
    %v1664 = vld [vmem:[%s1662 + $0x8] sm:$0xff]
    %v1665 = vunpack.c.l.bf16 %v1663
    %v1666 = vunpack.c.h.bf16 %v1663
    %v1667 = vunpack.c.l.bf16 %v1664
    %v1668 = vunpack.c.h.bf16 %v1664
    %v1669 = vld [vmem:[#allocation6] sm:$0xff]
    %v1670 = vld [vmem:[#allocation6 + $0x8] sm:$0xff]
    %v1671 = vld [vmem:[#allocation6 + $0x10] sm:$0xff]
    %v1672 = vld [vmem:[#allocation6 + $0x18] sm:$0xff]
    %v1673 = vld [vmem:[#allocation6 + $0x20] sm:$0xff]
    %v1674 = vld [vmem:[#allocation6 + $0x28] sm:$0xff]
    %v1675 = vld [vmem:[#allocation6 + $0x30] sm:$0xff]
    %v1676 = vld [vmem:[#allocation6 + $0x38] sm:$0xff]
    %v1677 = vld [vmem:[#allocation6 + $0x40] sm:$0xff]
    %v1678 = vld [vmem:[#allocation6 + $0x48] sm:$0xff]
    %v1679 = vld [vmem:[#allocation6 + $0x50] sm:$0xff]
    %v1680 = vld [vmem:[#allocation6 + $0x58] sm:$0xff]
    %v1681 = vld [vmem:[#allocation6 + $0x60] sm:$0xff]
    %v1682 = vld [vmem:[#allocation6 + $0x68] sm:$0xff]
    %v1683 = vld [vmem:[#allocation6 + $0x70] sm:$0xff]
    %v1684 = vld [vmem:[#allocation6 + $0x78] sm:$0xff]
    %v1685 = vld [vmem:[#allocation6 + $0x80] sm:$0xff]
    %v1686 = vld [vmem:[#allocation6 + $0x88] sm:$0xff]
    %v1687 = vld [vmem:[#allocation6 + $0x90] sm:$0xff]
    %v1688 = vld [vmem:[#allocation6 + $0x98] sm:$0xff]
    %v1689 = vld [vmem:[#allocation6 + $0xa0] sm:$0xff]
    %v1690 = vld [vmem:[#allocation6 + $0xa8] sm:$0xff]
    %v1691 = vld [vmem:[#allocation6 + $0xb0] sm:$0xff]
    %v1692 = vld [vmem:[#allocation6 + $0xb8] sm:$0xff]
    %v1693 = vld [vmem:[#allocation6 + $0xc0] sm:$0xff]
    %v1694 = vld [vmem:[#allocation6 + $0xc8] sm:$0xff]
    %v1695 = vld [vmem:[#allocation6 + $0xd0] sm:$0xff]
    %v1696 = vld [vmem:[#allocation6 + $0xd8] sm:$0xff]
    %v1697 = vld [vmem:[#allocation6 + $0xe0] sm:$0xff]
    %v1698 = vld [vmem:[#allocation6 + $0xe8] sm:$0xff]
    %v1699 = vld [vmem:[#allocation6 + $0xf0] sm:$0xff]
    %v1700 = vld [vmem:[#allocation6 + $0xf8] sm:$0xff]
    %v1701 = vld [vmem:[#allocation6 + $0x100] sm:$0xff]
    %v1702 = vld [vmem:[#allocation6 + $0x108] sm:$0xff]
    %v1703 = vld [vmem:[#allocation6 + $0x110] sm:$0xff]
    %v1704 = vld [vmem:[#allocation6 + $0x118] sm:$0xff]
    %v1705 = vld [vmem:[#allocation6 + $0x120] sm:$0xff]
    %v1706 = vld [vmem:[#allocation6 + $0x128] sm:$0xff]
    %v1707 = vld [vmem:[#allocation6 + $0x130] sm:$0xff]
    %v1708 = vld [vmem:[#allocation6 + $0x138] sm:$0xff]
    %v1709 = vld [vmem:[#allocation6 + $0x140] sm:$0xff]
    %v1710 = vld [vmem:[#allocation6 + $0x148] sm:$0xff]
    %v1711 = vld [vmem:[#allocation6 + $0x150] sm:$0xff]
    %v1712 = vld [vmem:[#allocation6 + $0x158] sm:$0xff]
    %v1713 = vld [vmem:[#allocation6 + $0x160] sm:$0xff]
    %v1714 = vld [vmem:[#allocation6 + $0x168] sm:$0xff]
    %v1715 = vld [vmem:[#allocation6 + $0x170] sm:$0xff]
    %v1716 = vld [vmem:[#allocation6 + $0x178] sm:$0xff]
    %v1717 = vld [vmem:[#allocation6 + $0x180] sm:$0xff]
    %v1718 = vld [vmem:[#allocation6 + $0x188] sm:$0xff]
    %v1719 = vld [vmem:[#allocation6 + $0x190] sm:$0xff]
    %v1720 = vld [vmem:[#allocation6 + $0x198] sm:$0xff]
    %v1721 = vld [vmem:[#allocation6 + $0x1a0] sm:$0xff]
    %v1722 = vld [vmem:[#allocation6 + $0x1a8] sm:$0xff]
    %v1723 = vld [vmem:[#allocation6 + $0x1b0] sm:$0xff]
    %v1724 = vld [vmem:[#allocation6 + $0x1b8] sm:$0xff]
    %v1725 = vld [vmem:[#allocation6 + $0x1c0] sm:$0xff]
    %v1726 = vld [vmem:[#allocation6 + $0x1c8] sm:$0xff]
    %v1727 = vld [vmem:[#allocation6 + $0x1d0] sm:$0xff]
    %v1728 = vld [vmem:[#allocation6 + $0x1d8] sm:$0xff]
    %v1729 = vld [vmem:[#allocation6 + $0x1e0] sm:$0xff]
    %v1730 = vld [vmem:[#allocation6 + $0x1e8] sm:$0xff]
    %v1731 = vld [vmem:[#allocation6 + $0x1f0] sm:$0xff]
    %v1732 = vld [vmem:[#allocation6 + $0x1f8] sm:$0xff]
    %1733 = vmatpush.msra.mxu0 %v1729
    %1734 = vmatpush.msra.mxu0 %v1725
    %1735 = vmatpush.msra.mxu0 %v1721
    %1736 = vmatpush.msra.mxu0 %v1717
    %1737 = vmatpush.msra.mxu0 %v1713
    %1738 = vmatpush.msra.mxu0 %v1709
    %1739 = vmatpush.msra.mxu0 %v1705
    %1740 = vmatpush.msra.mxu0 %v1701
    %1741 = vmatpush.msra.mxu0 %v1697
    %1742 = vmatpush.msra.mxu0 %v1693
    %1743 = vmatpush.msra.mxu0 %v1689
    %1744 = vmatpush.msra.mxu0 %v1685
    %1745 = vmatpush.msra.mxu0 %v1681
    %1746 = vmatpush.msra.mxu0 %v1677
    %1747 = vmatpush.msra.mxu0 %v1673
    %1748 = vmatpush.msra.mxu0 %v1669
    %1749 = vmatmul.f32.gmra.mxu0 %v1656
    %v1750 = vpop.f32.mrf.mxu0
    %v1751 = vadd.f32 0.0, %v1750
    %1752 = vdwg.mxu0
    %1753 = vmatpush.msra.mxu0 %v1730
    %1754 = vmatpush.msra.mxu0 %v1726
    %1755 = vmatpush.msra.mxu0 %v1722
    %1756 = vmatpush.msra.mxu0 %v1718
    %1757 = vmatpush.msra.mxu0 %v1714
    %1758 = vmatpush.msra.mxu0 %v1710
    %1759 = vmatpush.msra.mxu0 %v1706
    %1760 = vmatpush.msra.mxu0 %v1702
    %1761 = vmatpush.msra.mxu0 %v1698
    %1762 = vmatpush.msra.mxu0 %v1694
    %1763 = vmatpush.msra.mxu0 %v1690
    %1764 = vmatpush.msra.mxu0 %v1686
    %1765 = vmatpush.msra.mxu0 %v1682
    %1766 = vmatpush.msra.mxu0 %v1678
    %1767 = vmatpush.msra.mxu0 %v1674
    %1768 = vmatpush.msra.mxu0 %v1670
    %1769 = vmatmul.f32.gmra.mxu0 %v1656
    %v1770 = vpop.f32.mrf.mxu0
    %v1771 = vadd.f32 0.0, %v1770
    %1772 = vdwg.mxu0
    %1773 = vmatpush.msra.mxu0 %v1731
    %1774 = vmatpush.msra.mxu0 %v1727
    %1775 = vmatpush.msra.mxu0 %v1723
    %1776 = vmatpush.msra.mxu0 %v1719
    %1777 = vmatpush.msra.mxu0 %v1715
    %1778 = vmatpush.msra.mxu0 %v1711
    %1779 = vmatpush.msra.mxu0 %v1707
    %1780 = vmatpush.msra.mxu0 %v1703
    %1781 = vmatpush.msra.mxu0 %v1699
    %1782 = vmatpush.msra.mxu0 %v1695
    %1783 = vmatpush.msra.mxu0 %v1691
    %1784 = vmatpush.msra.mxu0 %v1687
    %1785 = vmatpush.msra.mxu0 %v1683
    %1786 = vmatpush.msra.mxu0 %v1679
    %1787 = vmatpush.msra.mxu0 %v1675
    %1788 = vmatpush.msra.mxu0 %v1671
    %1789 = vmatmul.f32.gmra.mxu0 %v1656
    %v1790 = vpop.f32.mrf.mxu0
    %v1791 = vadd.f32 0.0, %v1790
    %1792 = vdwg.mxu0
    %1793 = vmatpush.msra.mxu0 %v1732
    %1794 = vmatpush.msra.mxu0 %v1728
    %1795 = vmatpush.msra.mxu0 %v1724
    %1796 = vmatpush.msra.mxu0 %v1720
    %1797 = vmatpush.msra.mxu0 %v1716
    %1798 = vmatpush.msra.mxu0 %v1712
    %1799 = vmatpush.msra.mxu0 %v1708
    %1800 = vmatpush.msra.mxu0 %v1704
    %1801 = vmatpush.msra.mxu0 %v1700
    %1802 = vmatpush.msra.mxu0 %v1696
    %1803 = vmatpush.msra.mxu0 %v1692
    %1804 = vmatpush.msra.mxu0 %v1688
    %1805 = vmatpush.msra.mxu0 %v1684
    %1806 = vmatpush.msra.mxu0 %v1680
    %1807 = vmatpush.msra.mxu0 %v1676
    %1808 = vmatpush.msra.mxu0 %v1672
    %1809 = vmatmul.f32.gmra.mxu0 %v1656
    %v1810 = vpop.f32.mrf.mxu0
    %v1811 = vadd.f32 0.0, %v1810
    %1812 = vdwg.mxu0
    %v1813 = vadd.f32 %v1665, %v1751
    %v1814 = vadd.f32 %v1666, %v1771
    %v1815 = vadd.f32 %v1667, %v1791
    %v1816 = vadd.f32 %v1668, %v1811
    %v1817 = vxor.u32 %v1813, 2147483648
    %v1818 = vmul.f32 %v1817, 1.442695
    %v1819 = vpow.pop %v1818
    %v1820 = vadd.f32 %v1819, 1.0
    %v1821 = vrcp.pop %v1820
    %v1822 = vmul.f32 %v1820, %v1821
    %v1823 = vsub.f32 1.0, %v1822
    %v1824 = vmul.f32 %v1821, %v1823
    %v1825 = vadd.f32 %v1821, %v1824
    %vm1826 = vweird.f32 %v1820
    %vm1827 = vweird.f32 %v1821
    %vm1828 = vmor %vm1826, %vm1827
    %v1829 = vsel %vm1828, %v1821, %v1825
    %v1830 = vand.u32 2147483647, %v1820
    %vm1831 = vcmp.eq.f32.partialorder %v1830, 8.507059e+37
    %v1832 = vand.u32 %v1820, 2147483648
    %v1833 = vor.u32 1.1754944e-38, %v1832
    %v1834 = vsel %vm1831, %v1833, %v1829
    %v1835 = vmul.f32 1.0, %v1834
    %v1836 = vxor.u32 %v1814, 2147483648
    %v1837 = vmul.f32 %v1836, 1.442695
    %v1838 = vpow.pop %v1837
    %v1839 = vadd.f32 %v1838, 1.0
    %v1840 = vrcp.pop %v1839
    %v1841 = vmul.f32 %v1839, %v1840
    %v1842 = vsub.f32 1.0, %v1841
    %v1843 = vmul.f32 %v1840, %v1842
    %v1844 = vadd.f32 %v1840, %v1843
    %vm1845 = vweird.f32 %v1839
    %vm1846 = vweird.f32 %v1840
    %vm1847 = vmor %vm1845, %vm1846
    %v1848 = vsel %vm1847, %v1840, %v1844
    %v1849 = vand.u32 2147483647, %v1839
    %vm1850 = vcmp.eq.f32.partialorder %v1849, 8.507059e+37
    %v1851 = vand.u32 %v1839, 2147483648
    %v1852 = vor.u32 1.1754944e-38, %v1851
    %v1853 = vsel %vm1850, %v1852, %v1848
    %v1854 = vmul.f32 1.0, %v1853
    %v1855 = vtanh.pop %v1815
    %v1856 = vxor.u32 %v1816, 2147483648
    %v1857 = vmul.f32 %v1856, 1.442695
    %v1858 = vpow.pop %v1857
    %v1859 = vadd.f32 %v1858, 1.0
    %v1860 = vrcp.pop %v1859
    %v1861 = vmul.f32 %v1859, %v1860
    %v1862 = vsub.f32 1.0, %v1861
    %v1863 = vmul.f32 %v1860, %v1862
    %v1864 = vadd.f32 %v1860, %v1863
    %vm1865 = vweird.f32 %v1859
    %vm1866 = vweird.f32 %v1860
    %vm1867 = vmor %vm1865, %vm1866
    %v1868 = vsel %vm1867, %v1860, %v1864
    %v1869 = vand.u32 2147483647, %v1859
    %vm1870 = vcmp.eq.f32.partialorder %v1869, 8.507059e+37
    %v1871 = vand.u32 %v1859, 2147483648
    %v1872 = vor.u32 1.1754944e-38, %v1871
    %v1873 = vsel %vm1870, %v1872, %v1868
    %v1874 = vmul.f32 1.0, %v1873
    %v1875 = vmul.f32 %v1854, %v1654
    %v1876 = vmul.f32 %v1835, %v1855
    %v1877 = vadd.f32 %v1875, %v1876
    %v1878 = vtanh.pop %v1877
    %v1879 = vmul.f32 %v1874, %v1878
    %v1880 = vpack.c.bf16 %v1879, %v1879
    %s1881 = scalar_lea.vmem [#allocation3], 24
    %1882 = vst [vmem:[%s1881] sm:$0xf] %v1880
    %s1883 = smul.u32 7, 4
    %s1884 = smul.addr %s1883, 4
    %s1885 = scalar_lea.vmem [#allocation2], %s1884
    %v1886 = vld [vmem:[%s1885] sm:$0xff]
    %v1887 = vld [vmem:[%s1885 + $0x8] sm:$0xff]
    %v1888 = vunpack.c.l.bf16 %v1886
    %v1889 = vunpack.c.h.bf16 %v1886
    %v1890 = vunpack.c.l.bf16 %v1887
    %v1891 = vunpack.c.h.bf16 %v1887
    %v1892 = vld [vmem:[#allocation6] sm:$0xff]
    %v1893 = vld [vmem:[#allocation6 + $0x8] sm:$0xff]
    %v1894 = vld [vmem:[#allocation6 + $0x10] sm:$0xff]
    %v1895 = vld [vmem:[#allocation6 + $0x18] sm:$0xff]
    %v1896 = vld [vmem:[#allocation6 + $0x20] sm:$0xff]
    %v1897 = vld [vmem:[#allocation6 + $0x28] sm:$0xff]
    %v1898 = vld [vmem:[#allocation6 + $0x30] sm:$0xff]
    %v1899 = vld [vmem:[#allocation6 + $0x38] sm:$0xff]
    %v1900 = vld [vmem:[#allocation6 + $0x40] sm:$0xff]
    %v1901 = vld [vmem:[#allocation6 + $0x48] sm:$0xff]
    %v1902 = vld [vmem:[#allocation6 + $0x50] sm:$0xff]
    %v1903 = vld [vmem:[#allocation6 + $0x58] sm:$0xff]
    %v1904 = vld [vmem:[#allocation6 + $0x60] sm:$0xff]
    %v1905 = vld [vmem:[#allocation6 + $0x68] sm:$0xff]
    %v1906 = vld [vmem:[#allocation6 + $0x70] sm:$0xff]
    %v1907 = vld [vmem:[#allocation6 + $0x78] sm:$0xff]
    %v1908 = vld [vmem:[#allocation6 + $0x80] sm:$0xff]
    %v1909 = vld [vmem:[#allocation6 + $0x88] sm:$0xff]
    %v1910 = vld [vmem:[#allocation6 + $0x90] sm:$0xff]
    %v1911 = vld [vmem:[#allocation6 + $0x98] sm:$0xff]
    %v1912 = vld [vmem:[#allocation6 + $0xa0] sm:$0xff]
    %v1913 = vld [vmem:[#allocation6 + $0xa8] sm:$0xff]
    %v1914 = vld [vmem:[#allocation6 + $0xb0] sm:$0xff]
    %v1915 = vld [vmem:[#allocation6 + $0xb8] sm:$0xff]
    %v1916 = vld [vmem:[#allocation6 + $0xc0] sm:$0xff]
    %v1917 = vld [vmem:[#allocation6 + $0xc8] sm:$0xff]
    %v1918 = vld [vmem:[#allocation6 + $0xd0] sm:$0xff]
    %v1919 = vld [vmem:[#allocation6 + $0xd8] sm:$0xff]
    %v1920 = vld [vmem:[#allocation6 + $0xe0] sm:$0xff]
    %v1921 = vld [vmem:[#allocation6 + $0xe8] sm:$0xff]
    %v1922 = vld [vmem:[#allocation6 + $0xf0] sm:$0xff]
    %v1923 = vld [vmem:[#allocation6 + $0xf8] sm:$0xff]
    %v1924 = vld [vmem:[#allocation6 + $0x100] sm:$0xff]
    %v1925 = vld [vmem:[#allocation6 + $0x108] sm:$0xff]
    %v1926 = vld [vmem:[#allocation6 + $0x110] sm:$0xff]
    %v1927 = vld [vmem:[#allocation6 + $0x118] sm:$0xff]
    %v1928 = vld [vmem:[#allocation6 + $0x120] sm:$0xff]
    %v1929 = vld [vmem:[#allocation6 + $0x128] sm:$0xff]
    %v1930 = vld [vmem:[#allocation6 + $0x130] sm:$0xff]
    %v1931 = vld [vmem:[#allocation6 + $0x138] sm:$0xff]
    %v1932 = vld [vmem:[#allocation6 + $0x140] sm:$0xff]
    %v1933 = vld [vmem:[#allocation6 + $0x148] sm:$0xff]
    %v1934 = vld [vmem:[#allocation6 + $0x150] sm:$0xff]
    %v1935 = vld [vmem:[#allocation6 + $0x158] sm:$0xff]
    %v1936 = vld [vmem:[#allocation6 + $0x160] sm:$0xff]
    %v1937 = vld [vmem:[#allocation6 + $0x168] sm:$0xff]
    %v1938 = vld [vmem:[#allocation6 + $0x170] sm:$0xff]
    %v1939 = vld [vmem:[#allocation6 + $0x178] sm:$0xff]
    %v1940 = vld [vmem:[#allocation6 + $0x180] sm:$0xff]
    %v1941 = vld [vmem:[#allocation6 + $0x188] sm:$0xff]
    %v1942 = vld [vmem:[#allocation6 + $0x190] sm:$0xff]
    %v1943 = vld [vmem:[#allocation6 + $0x198] sm:$0xff]
    %v1944 = vld [vmem:[#allocation6 + $0x1a0] sm:$0xff]
    %v1945 = vld [vmem:[#allocation6 + $0x1a8] sm:$0xff]
    %v1946 = vld [vmem:[#allocation6 + $0x1b0] sm:$0xff]
    %v1947 = vld [vmem:[#allocation6 + $0x1b8] sm:$0xff]
    %v1948 = vld [vmem:[#allocation6 + $0x1c0] sm:$0xff]
    %v1949 = vld [vmem:[#allocation6 + $0x1c8] sm:$0xff]
    %v1950 = vld [vmem:[#allocation6 + $0x1d0] sm:$0xff]
    %v1951 = vld [vmem:[#allocation6 + $0x1d8] sm:$0xff]
    %v1952 = vld [vmem:[#allocation6 + $0x1e0] sm:$0xff]
    %v1953 = vld [vmem:[#allocation6 + $0x1e8] sm:$0xff]
    %v1954 = vld [vmem:[#allocation6 + $0x1f0] sm:$0xff]
    %v1955 = vld [vmem:[#allocation6 + $0x1f8] sm:$0xff]
    %1956 = vmatpush.msra.mxu0 %v1952
    %1957 = vmatpush.msra.mxu0 %v1948
    %1958 = vmatpush.msra.mxu0 %v1944
    %1959 = vmatpush.msra.mxu0 %v1940
    %1960 = vmatpush.msra.mxu0 %v1936
    %1961 = vmatpush.msra.mxu0 %v1932
    %1962 = vmatpush.msra.mxu0 %v1928
    %1963 = vmatpush.msra.mxu0 %v1924
    %1964 = vmatpush.msra.mxu0 %v1920
    %1965 = vmatpush.msra.mxu0 %v1916
    %1966 = vmatpush.msra.mxu0 %v1912
    %1967 = vmatpush.msra.mxu0 %v1908
    %1968 = vmatpush.msra.mxu0 %v1904
    %1969 = vmatpush.msra.mxu0 %v1900
    %1970 = vmatpush.msra.mxu0 %v1896
    %1971 = vmatpush.msra.mxu0 %v1892
    %1972 = vmatmul.f32.gmra.mxu0 %v1879
    %v1973 = vpop.f32.mrf.mxu0
    %v1974 = vadd.f32 0.0, %v1973
    %1975 = vdwg.mxu0
    %1976 = vmatpush.msra.mxu0 %v1953
    %1977 = vmatpush.msra.mxu0 %v1949
    %1978 = vmatpush.msra.mxu0 %v1945
    %1979 = vmatpush.msra.mxu0 %v1941
    %1980 = vmatpush.msra.mxu0 %v1937
    %1981 = vmatpush.msra.mxu0 %v1933
    %1982 = vmatpush.msra.mxu0 %v1929
    %1983 = vmatpush.msra.mxu0 %v1925
    %1984 = vmatpush.msra.mxu0 %v1921
    %1985 = vmatpush.msra.mxu0 %v1917
    %1986 = vmatpush.msra.mxu0 %v1913
    %1987 = vmatpush.msra.mxu0 %v1909
    %1988 = vmatpush.msra.mxu0 %v1905
    %1989 = vmatpush.msra.mxu0 %v1901
    %1990 = vmatpush.msra.mxu0 %v1897
    %1991 = vmatpush.msra.mxu0 %v1893
    %1992 = vmatmul.f32.gmra.mxu0 %v1879
    %v1993 = vpop.f32.mrf.mxu0
    %v1994 = vadd.f32 0.0, %v1993
    %1995 = vdwg.mxu0
    %1996 = vmatpush.msra.mxu0 %v1954
    %1997 = vmatpush.msra.mxu0 %v1950
    %1998 = vmatpush.msra.mxu0 %v1946
    %1999 = vmatpush.msra.mxu0 %v1942
    %2000 = vmatpush.msra.mxu0 %v1938
    %2001 = vmatpush.msra.mxu0 %v1934
    %2002 = vmatpush.msra.mxu0 %v1930
    %2003 = vmatpush.msra.mxu0 %v1926
    %2004 = vmatpush.msra.mxu0 %v1922
    %2005 = vmatpush.msra.mxu0 %v1918
    %2006 = vmatpush.msra.mxu0 %v1914
    %2007 = vmatpush.msra.mxu0 %v1910
    %2008 = vmatpush.msra.mxu0 %v1906
    %2009 = vmatpush.msra.mxu0 %v1902
    %2010 = vmatpush.msra.mxu0 %v1898
    %2011 = vmatpush.msra.mxu0 %v1894
    %2012 = vmatmul.f32.gmra.mxu0 %v1879
    %v2013 = vpop.f32.mrf.mxu0
    %v2014 = vadd.f32 0.0, %v2013
    %2015 = vdwg.mxu0
    %2016 = vmatpush.msra.mxu0 %v1955
    %2017 = vmatpush.msra.mxu0 %v1951
    %2018 = vmatpush.msra.mxu0 %v1947
    %2019 = vmatpush.msra.mxu0 %v1943
    %2020 = vmatpush.msra.mxu0 %v1939
    %2021 = vmatpush.msra.mxu0 %v1935
    %2022 = vmatpush.msra.mxu0 %v1931
    %2023 = vmatpush.msra.mxu0 %v1927
    %2024 = vmatpush.msra.mxu0 %v1923
    %2025 = vmatpush.msra.mxu0 %v1919
    %2026 = vmatpush.msra.mxu0 %v1915
    %2027 = vmatpush.msra.mxu0 %v1911
    %2028 = vmatpush.msra.mxu0 %v1907
    %2029 = vmatpush.msra.mxu0 %v1903
    %2030 = vmatpush.msra.mxu0 %v1899
    %2031 = vmatpush.msra.mxu0 %v1895
    %2032 = vmatmul.f32.gmra.mxu0 %v1879
    %v2033 = vpop.f32.mrf.mxu0
    %v2034 = vadd.f32 0.0, %v2033
    %2035 = vdwg.mxu0
    %v2036 = vadd.f32 %v1888, %v1974
    %v2037 = vadd.f32 %v1889, %v1994
    %v2038 = vadd.f32 %v1890, %v2014
    %v2039 = vadd.f32 %v1891, %v2034
    %v2040 = vxor.u32 %v2036, 2147483648
    %v2041 = vmul.f32 %v2040, 1.442695
    %v2042 = vpow.pop %v2041
    %v2043 = vadd.f32 %v2042, 1.0
    %v2044 = vrcp.pop %v2043
    %v2045 = vmul.f32 %v2043, %v2044
    %v2046 = vsub.f32 1.0, %v2045
    %v2047 = vmul.f32 %v2044, %v2046
    %v2048 = vadd.f32 %v2044, %v2047
    %vm2049 = vweird.f32 %v2043
    %vm2050 = vweird.f32 %v2044
    %vm2051 = vmor %vm2049, %vm2050
    %v2052 = vsel %vm2051, %v2044, %v2048
    %v2053 = vand.u32 2147483647, %v2043
    %vm2054 = vcmp.eq.f32.partialorder %v2053, 8.507059e+37
    %v2055 = vand.u32 %v2043, 2147483648
    %v2056 = vor.u32 1.1754944e-38, %v2055
    %v2057 = vsel %vm2054, %v2056, %v2052
    %v2058 = vmul.f32 1.0, %v2057
    %v2059 = vxor.u32 %v2037, 2147483648
    %v2060 = vmul.f32 %v2059, 1.442695
    %v2061 = vpow.pop %v2060
    %v2062 = vadd.f32 %v2061, 1.0
    %v2063 = vrcp.pop %v2062
    %v2064 = vmul.f32 %v2062, %v2063
    %v2065 = vsub.f32 1.0, %v2064
    %v2066 = vmul.f32 %v2063, %v2065
    %v2067 = vadd.f32 %v2063, %v2066
    %vm2068 = vweird.f32 %v2062
    %vm2069 = vweird.f32 %v2063
    %vm2070 = vmor %vm2068, %vm2069
    %v2071 = vsel %vm2070, %v2063, %v2067
    %v2072 = vand.u32 2147483647, %v2062
    %vm2073 = vcmp.eq.f32.partialorder %v2072, 8.507059e+37
    %v2074 = vand.u32 %v2062, 2147483648
    %v2075 = vor.u32 1.1754944e-38, %v2074
    %v2076 = vsel %vm2073, %v2075, %v2071
    %v2077 = vmul.f32 1.0, %v2076
    %v2078 = vtanh.pop %v2038
    %v2079 = vxor.u32 %v2039, 2147483648
    %v2080 = vmul.f32 %v2079, 1.442695
    %v2081 = vpow.pop %v2080
    %v2082 = vadd.f32 %v2081, 1.0
    %v2083 = vrcp.pop %v2082
    %v2084 = vmul.f32 %v2082, %v2083
    %v2085 = vsub.f32 1.0, %v2084
    %v2086 = vmul.f32 %v2083, %v2085
    %v2087 = vadd.f32 %v2083, %v2086
    %vm2088 = vweird.f32 %v2082
    %vm2089 = vweird.f32 %v2083
    %vm2090 = vmor %vm2088, %vm2089
    %v2091 = vsel %vm2090, %v2083, %v2087
    %v2092 = vand.u32 2147483647, %v2082
    %vm2093 = vcmp.eq.f32.partialorder %v2092, 8.507059e+37
    %v2094 = vand.u32 %v2082, 2147483648
    %v2095 = vor.u32 1.1754944e-38, %v2094
    %v2096 = vsel %vm2093, %v2095, %v2091
    %v2097 = vmul.f32 1.0, %v2096
    %v2098 = vmul.f32 %v2077, %v1877
    %v2099 = vmul.f32 %v2058, %v2078
    %v2100 = vadd.f32 %v2098, %v2099
    %v2101 = vtanh.pop %v2100
    %v2102 = vmul.f32 %v2097, %v2101
    %v2103 = vpack.c.bf16 %v2102, %v2102
    %s2104 = scalar_lea.vmem [#allocation3], 28
    %2105 = vst [vmem:[%s2104] sm:$0xf] %v2103
    %2106 = vst [vmem:[#allocation4] sm:$0xff] %v2102
    %2107 = vst [vmem:[#allocation5] sm:$0xff] %v2100
    // Predicated region
    $region50: #{r2d2_forward.1} parent=1 // pred_check
      %p2108 = pneg %p54
    $region51: #{r2d2_forward.1} parent=1 // pred_check_branch
      %2110 = sbr.rel (%p2108) target = $region53
    $region52: #{r2d2_forward.1} parent=1 // pred_region
      %2111 = vst [vmem:[%s11] sm:$0xff] %v2102
      %2112 = vst [vmem:[%s12] sm:$0xff] %v2100
    $region53: #{r2d2_forward.1} parent=1 // pred_fallthru
      _
    %v2113 = vld [vmem:[#allocation3] sm:$0xf]
    %v2114 = vld [vmem:[#allocation3 + $0x4] sm:$0xf]
    %v2115 = vld [vmem:[#allocation3 + $0x8] sm:$0xf]
    %v2116 = vld [vmem:[#allocation3 + $0xc] sm:$0xf]
    %v2117 = vld [vmem:[#allocation3 + $0x10] sm:$0xf]
    %v2118 = vld [vmem:[#allocation3 + $0x14] sm:$0xf]
    %v2119 = vld [vmem:[#allocation3 + $0x18] sm:$0xf]
    %v2120 = vld [vmem:[#allocation3 + $0x1c] sm:$0xf]
    %v2121 = vld [vmem:[%s6] sm:$0xf]
    %v2122 = vld [vmem:[%s6 + $0x4] sm:$0xf]
    %v2123 = vld [vmem:[%s6 + $0x8] sm:$0xf]
    %v2124 = vld [vmem:[%s6 + $0xc] sm:$0xf]
    %v2125 = vld [vmem:[%s6 + $0x10] sm:$0xf]
    %v2126 = vld [vmem:[%s6 + $0x14] sm:$0xf]
    %v2127 = vld [vmem:[%s6 + $0x18] sm:$0xf]
    %v2128 = vld [vmem:[%s6 + $0x1c] sm:$0xf]
    %v2129 = vld [vmem:[%s6 + $0x20] sm:$0xf]
    %v2130 = vld [vmem:[%s6 + $0x24] sm:$0xf]
    %v2131 = vld [vmem:[%s6 + $0x28] sm:$0xf]
    %v2132 = vld [vmem:[%s6 + $0x2c] sm:$0xf]
    %v2133 = vld [vmem:[%s6 + $0x30] sm:$0xf]
    %v2134 = vld [vmem:[%s6 + $0x34] sm:$0xf]
    %v2135 = vld [vmem:[%s6 + $0x38] sm:$0xf]
    %v2136 = vld [vmem:[%s6 + $0x3c] sm:$0xf]
    %v2137 = vld [vmem:[%s7] sm:$0x1]
    %v2139 = vperm.slane %v2137, 0
    %v2149 = vunpack.c.l.b16 %v2113
    %v2150 = vunpack.c.l.b16 %v2114
    %v2151 = vunpack.c.l.b16 %v2115
    %v2152 = vunpack.c.l.b16 %v2116
    %v2153 = vunpack.c.l.b16 %v2117
    %v2154 = vunpack.c.l.b16 %v2118
    %v2155 = vunpack.c.l.b16 %v2119
    %v2156 = vunpack.c.l.b16 %v2120
    %v2157 = vpack.c.b16 %v2150, %v2149
    %v2158 = vpack.c.b16 %v2152, %v2151
    %v2159 = vpack.c.b16 %v2154, %v2153
    %v2160 = vpack.c.b16 %v2156, %v2155
    %v2181 = vunpack.c.l.b16 %v2121
    %v2182 = vunpack.c.l.b16 %v2122
    %v2183 = vunpack.c.l.b16 %v2123
    %v2184 = vunpack.c.l.b16 %v2124
    %v2185 = vunpack.c.l.b16 %v2125
    %v2186 = vunpack.c.l.b16 %v2126
    %v2187 = vunpack.c.l.b16 %v2127
    %v2188 = vunpack.c.l.b16 %v2128
    %v2189 = vunpack.c.l.b16 %v2129
    %v2190 = vunpack.c.l.b16 %v2130
    %v2191 = vunpack.c.l.b16 %v2131
    %v2192 = vunpack.c.l.b16 %v2132
    %v2193 = vunpack.c.l.b16 %v2133
    %v2194 = vunpack.c.l.b16 %v2134
    %v2195 = vunpack.c.l.b16 %v2135
    %v2196 = vunpack.c.l.b16 %v2136
    %v2197 = vpack.c.b16 %v2182, %v2181
    %v2198 = vpack.c.b16 %v2184, %v2183
    %v2199 = vpack.c.b16 %v2186, %v2185
    %v2200 = vpack.c.b16 %v2188, %v2187
    %v2201 = vpack.c.b16 %v2190, %v2189
    %v2202 = vpack.c.b16 %v2192, %v2191
    %v2203 = vpack.c.b16 %v2194, %v2193
    %v2204 = vpack.c.b16 %v2196, %v2195
    %2213 = vmatpush.bf16.msra.mxu0 %v2204
    %2214 = vmatpush.bf16.msra.mxu0 %v2203
    %2215 = vmatpush.bf16.msra.mxu0 %v2202
    %2216 = vmatpush.bf16.msra.mxu0 %v2201
    %2217 = vmatpush.bf16.msra.mxu0 %v2200
    %2218 = vmatpush.bf16.msra.mxu0 %v2199
    %2219 = vmatpush.bf16.msra.mxu0 %v2198
    %2220 = vmatpush.bf16.msra.mxu0 %v2197
    %2221 = vmatmul.bf16.gmra.mxu0 %v2157
    %v2222 = vpop.f32.mrf.mxu0
    %v2223 = vadd.f32 %v2139, %v2222
    %v2224 = vpop.f32.mrf.mxu0
    %v2225 = vadd.f32 %v2139, %v2224
    %2226 = vmatmul.bf16.gmra.mxu0 %v2158
    %v2227 = vpop.f32.mrf.mxu0
    %v2228 = vadd.f32 %v2139, %v2227
    %v2229 = vpop.f32.mrf.mxu0
    %v2230 = vadd.f32 %v2139, %v2229
    %2231 = vmatmul.bf16.gmra.mxu0 %v2159
    %v2232 = vpop.f32.mrf.mxu0
    %v2233 = vadd.f32 %v2139, %v2232
    %v2234 = vpop.f32.mrf.mxu0
    %v2235 = vadd.f32 %v2139, %v2234
    %2236 = vmatmul.bf16.gmra.mxu0 %v2160
    %v2237 = vpop.f32.mrf.mxu0
    %v2238 = vadd.f32 %v2139, %v2237
    %v2239 = vpop.f32.mrf.mxu0
    %v2240 = vadd.f32 %v2139, %v2239
    %2241 = vdwg.mxu0
    %v2242 = vmax.f32 %v2223, 0.0
    %v2243 = vmax.f32 %v2225, 0.0
    %v2244 = vmax.f32 %v2228, 0.0
    %v2245 = vmax.f32 %v2230, 0.0
    %v2246 = vmax.f32 %v2233, 0.0
    %v2247 = vmax.f32 %v2235, 0.0
    %v2248 = vmax.f32 %v2238, 0.0
    %v2249 = vmax.f32 %v2240, 0.0
    %v2250 = vpack.c.bf16 %v2243, %v2242
    %v2251 = vpack.c.bf16 %v2245, %v2244
    %v2252 = vpack.c.bf16 %v2247, %v2246
    %v2253 = vpack.c.bf16 %v2249, %v2248
    %v2254 = vld [vmem:[%s8] sm:$0xf]
    %v2255 = vld [vmem:[%s8 + $0x4] sm:$0xf]
    %v2256 = vld [vmem:[%s8 + $0x8] sm:$0xf]
    %v2257 = vld [vmem:[%s8 + $0xc] sm:$0xf]
    %v2258 = vld [vmem:[%s8 + $0x10] sm:$0xf]
    %v2259 = vld [vmem:[%s8 + $0x14] sm:$0xf]
    %v2260 = vld [vmem:[%s8 + $0x18] sm:$0xf]
    %v2261 = vld [vmem:[%s8 + $0x1c] sm:$0xf]
    %v2262 = vld [vmem:[%s8 + $0x20] sm:$0xf]
    %v2263 = vld [vmem:[%s8 + $0x24] sm:$0xf]
    %v2264 = vld [vmem:[%s8 + $0x28] sm:$0xf]
    %v2265 = vld [vmem:[%s8 + $0x2c] sm:$0xf]
    %v2266 = vld [vmem:[%s8 + $0x30] sm:$0xf]
    %v2267 = vld [vmem:[%s8 + $0x34] sm:$0xf]
    %v2268 = vld [vmem:[%s8 + $0x38] sm:$0xf]
    %v2269 = vld [vmem:[%s8 + $0x3c] sm:$0xf]
    %v2270 = vld [vmem:[%s9] sm:$0x1]
    %v2272 = vperm.slane %v2270, 0
    %v2290 = vunpack.c.l.b16 %v2254
    %v2291 = vunpack.c.l.b16 %v2255
    %v2292 = vunpack.c.l.b16 %v2256
    %v2293 = vunpack.c.l.b16 %v2257
    %v2294 = vunpack.c.l.b16 %v2258
    %v2295 = vunpack.c.l.b16 %v2259
    %v2296 = vunpack.c.l.b16 %v2260
    %v2297 = vunpack.c.l.b16 %v2261
    %v2298 = vunpack.c.l.b16 %v2262
    %v2299 = vunpack.c.l.b16 %v2263
    %v2300 = vunpack.c.l.b16 %v2264
    %v2301 = vunpack.c.l.b16 %v2265
    %v2302 = vunpack.c.l.b16 %v2266
    %v2303 = vunpack.c.l.b16 %v2267
    %v2304 = vunpack.c.l.b16 %v2268
    %v2305 = vunpack.c.l.b16 %v2269
    %v2306 = vpack.c.b16 %v2291, %v2290
    %v2307 = vpack.c.b16 %v2293, %v2292
    %v2308 = vpack.c.b16 %v2295, %v2294
    %v2309 = vpack.c.b16 %v2297, %v2296
    %v2310 = vpack.c.b16 %v2299, %v2298
    %v2311 = vpack.c.b16 %v2301, %v2300
    %v2312 = vpack.c.b16 %v2303, %v2302
    %v2313 = vpack.c.b16 %v2305, %v2304
    %2322 = vmatpush.bf16.msra.mxu0 %v2313
    %2323 = vmatpush.bf16.msra.mxu0 %v2312
    %2324 = vmatpush.bf16.msra.mxu0 %v2311
    %2325 = vmatpush.bf16.msra.mxu0 %v2310
    %2326 = vmatpush.bf16.msra.mxu0 %v2309
    %2327 = vmatpush.bf16.msra.mxu0 %v2308
    %2328 = vmatpush.bf16.msra.mxu0 %v2307
    %2329 = vmatpush.bf16.msra.mxu0 %v2306
    %2330 = vmatmul.bf16.gmra.mxu0 %v2250
    %v2331 = vpop.f32.mrf.mxu0
    %v2332 = vadd.f32 %v2272, %v2331
    %v2333 = vpop.f32.mrf.mxu0
    %v2334 = vadd.f32 %v2272, %v2333
    %2335 = vmatmul.bf16.gmra.mxu0 %v2251
    %v2336 = vpop.f32.mrf.mxu0
    %v2337 = vadd.f32 %v2272, %v2336
    %v2338 = vpop.f32.mrf.mxu0
    %v2339 = vadd.f32 %v2272, %v2338
    %2340 = vmatmul.bf16.gmra.mxu0 %v2252
    %v2341 = vpop.f32.mrf.mxu0
    %v2342 = vadd.f32 %v2272, %v2341
    %v2343 = vpop.f32.mrf.mxu0
    %v2344 = vadd.f32 %v2272, %v2343
    %2345 = vmatmul.bf16.gmra.mxu0 %v2253
    %v2346 = vpop.f32.mrf.mxu0
    %v2347 = vadd.f32 %v2272, %v2346
    %v2348 = vpop.f32.mrf.mxu0
    %v2349 = vadd.f32 %v2272, %v2348
    %2350 = vdwg.mxu0
    %2351 = vst [vmem:[%s10] sm:$0xff] %v2332
    %2352 = vst [vmem:[%s10 + $0x8] sm:$0xff] %v2334
    %2353 = vst [vmem:[%s10 + $0x10] sm:$0xff] %v2337
    %2354 = vst [vmem:[%s10 + $0x18] sm:$0xff] %v2339
    %2355 = vst [vmem:[%s10 + $0x20] sm:$0xff] %v2342
    %2356 = vst [vmem:[%s10 + $0x28] sm:$0xff] %v2344
    %2357 = vst [vmem:[%s10 + $0x30] sm:$0xff] %v2347
    %2358 = vst [vmem:[%s10 + $0x38] sm:$0xff] %v2349
    // Predicated region
    $region54: #{r2d2_forward.1} parent=1 // pred_check
      _
    $region55: #{r2d2_forward.1} parent=1 // pred_check_branch
      %2360 = sbr.rel (0) target = $region57
    $region56: #{r2d2_forward.1} parent=1 // pred_region
      _
    $region57: #{r2d2_forward.1} parent=1 // pred_fallthru
      _
    // Predicated region
    $region58: #{r2d2_forward.1} parent=1 // pred_check
      _
    $region59: #{r2d2_forward.1} parent=1 // pred_check_branch
      %2362 = sbr.rel (0) target = $region61
    $region60: #{r2d2_forward.1} parent=1 // pred_region
      _
    $region61: #{r2d2_forward.1} parent=1 // pred_fallthru
      _
    // Predicated region
    $region62: #{r2d2_forward.1} parent=1 // pred_check
      _
    $region63: #{r2d2_forward.1} parent=1 // pred_check_branch
      %2364 = sbr.rel (0) target = $region65
    $region64: #{r2d2_forward.1} parent=1 // pred_region
      _
    $region65: #{r2d2_forward.1} parent=1 // pred_fallthru
      _
    // Predicated region
    $region66: #{r2d2_forward.1} parent=1 // pred_check
      _
    $region67: #{r2d2_forward.1} parent=1 // pred_check_branch
      %2366 = sbr.rel (0) target = $region69
    $region68: #{r2d2_forward.1} parent=1 // pred_region
      _
    $region69: #{r2d2_forward.1} parent=1 // pred_fallthru
      _
    // Predicated region
    $region70: #{r2d2_forward.1} parent=1 // pred_check
      _
    $region71: #{r2d2_forward.1} parent=1 // pred_check_branch
      %2368 = sbr.rel (0) target = $region73
    $region72: #{r2d2_forward.1} parent=1 // pred_region
      _
    $region73: #{r2d2_forward.1} parent=1 // pred_fallthru
      _
    // Predicated region
    $region74: #{r2d2_forward.1} parent=1 // pred_check
      _
    $region75: #{r2d2_forward.1} parent=1 // pred_check_branch
      %2370 = sbr.rel (0) target = $region77
    $region76: #{r2d2_forward.1} parent=1 // pred_region
      _
    $region77: #{r2d2_forward.1} parent=1 // pred_fallthru
      _
    %2371 = vsyncpa [#allocation7], 1

</llo_original>
